<compile_context>
chip_gen: v6e
topology: v6e:2x2x1
jax: 0.10.0
libtpu: 0.0.40
codegen_flags: <defaults>
</compile_context>

<pallas_src>
import functools

import jax
import jax.numpy as jnp
from jax.experimental import pallas as pl
from jax.experimental.pallas import tpu as pltpu


# ----------------------------- helpers -----------------------------

def _apply_act(y, act):
    if act is None:
        return y
    if act == "silu":
        return y * jax.nn.sigmoid(y)
    raise ValueError(f"unsupported activation {act}")


@functools.lru_cache(maxsize=1)
def _tc_per_chip():
    # v7x has 2 TensorCores per chip; v5e/v6e have 1.  Only used to decide
    # whether splitting a tiny grid for dual-TC sharding is worth the per-step
    # pipeline overhead.
    try:
        kind = jax.devices()[0].device_kind.lower()
        if "v7" in kind:
            return 2
    except Exception:
        pass
    return 1


def _p_tiles(P, max_tile=2048):
    """Lane-axis (points) tiling: single full-extent block for small P (no
    per-step overhead on 1-TC chips); 128-aligned tiles once P is large."""
    if P <= max_tile:
        return P, 1
    return max_tile, pl.cdiv(P, max_tile)


_PAR1 = pltpu.CompilerParams(dimension_semantics=("parallel",))
_PAR2 = pltpu.CompilerParams(dimension_semantics=("parallel", "parallel"))


# ----------------------------- Pallas kernels -----------------------------

def _lift_kernel(x_ref, w1_ref, b1_ref, w2_ref, b2_ref, o_ref, *, act):
    # fused lift: conv1x1 -> act -> conv1x1, channels-first (C, points) blocks
    x = x_ref[...].astype(jnp.bfloat16)
    h = jnp.dot(w1_ref[...], x, preferred_element_type=jnp.float32)
    h = _apply_act(h + b1_ref[...], act)
    y = jnp.dot(w2_ref[...], h.astype(jnp.bfloat16),
                preferred_element_type=jnp.float32)
    o_ref[...] = (y + b2_ref[...]).astype(o_ref.dtype)


def _conv_add_kernel(x_ref, w_ref, b_ref, a_ref, o_ref, *, act):
    # fused per-FNO-layer pointwise conv + spectral-branch add + activation
    y = jnp.dot(w_ref[...], x_ref[...].astype(jnp.bfloat16),
                preferred_element_type=jnp.float32)
    y = y + b_ref[...] + a_ref[...]
    o_ref[...] = _apply_act(y, act).astype(o_ref.dtype)


def _decoder_kernel(x_ref, *refs, n_hidden, act, ch, beta, threshold):
    # fused decoder MLP + final linear + (mu | softplus(var)) channel split
    o_ref = refs[-1]
    wb = refs[:-1]
    h = x_ref[...].astype(jnp.bfloat16)
    idx = 0
    for _ in range(n_hidden):
        y = jnp.dot(wb[idx][...], h, preferred_element_type=jnp.float32)
        h = _apply_act(y + wb[idx + 1][...], act).astype(jnp.bfloat16)
        idx += 2
    y = jnp.dot(wb[idx][...], h, preferred_element_type=jnp.float32)
    y = y + wb[idx + 1][...]
    # channels are rows in this layout: rows >= ch get Softplus(beta, threshold)
    row = jax.lax.broadcasted_iota(jnp.int32, y.shape, dimension=0)
    z = beta * y
    sp = jnp.log1p(jnp.exp(jnp.minimum(z, threshold))) * (1.0 / beta)
    sp = jnp.where(z > threshold, y, sp)
    o_ref[...] = jnp.where(row >= ch, sp, y).astype(o_ref.dtype)


def _spectral_kernel(x_ref, w_ref, o_ref):
    # per mode-pair complex channel mixing as ONE lane-dense real matmul:
    # lhs (pair, B, 128) = [xr_a|xi_a|xr_b|xi_b],
    # rhs (pair, 128, 128) = blockdiag([[wr,wi],[-wi,wr]]_a, [...]_b)
    o_ref[...] = jnp.einsum(
        "pbk,pko->pbo", x_ref[...].astype(jnp.bfloat16), w_ref[...],
        preferred_element_type=jnp.float32).astype(o_ref.dtype)


# ----------------------------- kernel wrappers -----------------------------

def lift_network(x, w1, b1, w2, b2, *, act):
    """x: (B, Cin, P) f32 -> (B, Cout, P) f32. Fused conv1x1->act->conv1x1."""
    B, Cin, P = x.shape
    H1 = w1.shape[0]
    Cout = w2.shape[0]
    tp, np_ = _p_tiles(P)
    return pl.pallas_call(
        functools.partial(_lift_kernel, act=act),
        out_shape=jax.ShapeDtypeStruct((B, Cout, P), jnp.float32),
        grid_spec=pltpu.PrefetchScalarGridSpec(
            num_scalar_prefetch=0, grid=(B, np_),
            in_specs=[pl.BlockSpec((None, Cin, tp), lambda b, p: (b, 0, p)),
                      pl.BlockSpec((H1, Cin), lambda b, p: (0, 0)),
                      pl.BlockSpec((H1, 1), lambda b, p: (0, 0)),
                      pl.BlockSpec((Cout, H1), lambda b, p: (0, 0)),
                      pl.BlockSpec((Cout, 1), lambda b, p: (0, 0))],
            out_specs=pl.BlockSpec((None, Cout, tp), lambda b, p: (b, 0, p))),
        compiler_params=_PAR2,
    )(x, w1, b1, w2, b2)


def conv_add(x, w, b, add, *, act):
    """x, add: (B, C, P) f32; w: (C, C) bf16; b: (C, 1) f32."""
    B, C, P = x.shape
    tp, np_ = _p_tiles(P)
    return pl.pallas_call(
        functools.partial(_conv_add_kernel, act=act),
        out_shape=jax.ShapeDtypeStruct((B, C, P), jnp.float32),
        grid_spec=pltpu.PrefetchScalarGridSpec(
            num_scalar_prefetch=0, grid=(B, np_),
            in_specs=[pl.BlockSpec((None, C, tp), lambda b, p: (b, 0, p)),
                      pl.BlockSpec((C, C), lambda b, p: (0, 0)),
                      pl.BlockSpec((C, 1), lambda b, p: (0, 0)),
                      pl.BlockSpec((None, C, tp), lambda b, p: (b, 0, p))],
            out_specs=pl.BlockSpec((None, C, tp), lambda b, p: (b, 0, p))),
        compiler_params=_PAR2,
    )(x, w, b, add)


def decoder_network(x, hidden, final_w, final_b, *, act, ch, beta, threshold):
    """Fused decoder MLP + final linear + mu/softplus(var) split (channels-first)."""
    B, Cin, P = x.shape
    Cout = final_w.shape[0]
    tp, np_ = _p_tiles(P)

    args = [x]
    in_specs = [pl.BlockSpec((None, Cin, tp), lambda b, p: (b, 0, p))]
    for (w, bb) in list(hidden) + [(final_w, final_b)]:
        co, ci = w.shape
        args += [w, bb]
        in_specs += [pl.BlockSpec((co, ci), lambda b, p: (0, 0)),
                     pl.BlockSpec((co, 1), lambda b, p: (0, 0))]

    kernel = functools.partial(_decoder_kernel, n_hidden=len(hidden), act=act,
                               ch=ch, beta=float(beta), threshold=float(threshold))
    return pl.pallas_call(
        kernel,
        out_shape=jax.ShapeDtypeStruct((B, Cout, P), jnp.float32),
        grid_spec=pltpu.PrefetchScalarGridSpec(
            num_scalar_prefetch=0, grid=(B, np_),
            in_specs=in_specs,
            out_specs=pl.BlockSpec((None, Cout, tp), lambda b, p: (b, 0, p))),
        compiler_params=_PAR2,
    )(*args)


def spectral_mix(x_pair, w_pair):
    """x_pair: (n_pairs, B, 4*lat) f32, w_pair: (n_pairs, 4*lat, 4*lat) bf16."""
    npair, B, K = x_pair.shape
    # single grid step on 1-TC chips (v5e/v6e); split in two for v7x dual TC
    splits = 2 if (_tc_per_chip() >= 2 and npair >= 2 and npair % 2 == 0) else 1
    tpair = npair // splits
    return pl.pallas_call(
        _spectral_kernel,
        out_shape=jax.ShapeDtypeStruct((npair, B, K), jnp.float32),
        grid_spec=pltpu.PrefetchScalarGridSpec(
            num_scalar_prefetch=0, grid=(splits,),
            in_specs=[pl.BlockSpec((tpair, B, K), lambda i: (i, 0, 0)),
                      pl.BlockSpec((tpair, K, K), lambda i: (i, 0, 0))],
            out_specs=pl.BlockSpec((tpair, B, K), lambda i: (i, 0, 0))),
        compiler_params=_PAR1,
    )(x_pair, w_pair)


# ----------------------------- parameter preprocessing -----------------------------

def prepare_params(params, cfg):
    """One-time weight layout/dtype preprocessing (hoisted out of forward)."""
    lat = cfg["latent_channels"]
    m = cfg["num_fno_modes"]
    wdt = jnp.bfloat16

    def dense(w):                   # (Cout, Cin) -> bf16
        return w.astype(wdt)

    def col_bias(b):                # (Cout,) -> (Cout, 1) f32 (lane-broadcast)
        return b.reshape(-1, 1).astype(jnp.float32)

    def w_to_modes(w):              # (Cin, Cout, m1, m2) -> (m1*m2, Cin, Cout)
        return jnp.transpose(w, (2, 3, 0, 1)).reshape(m * m, lat, lat)

    layers = []
    for lp in params["fno_layers"]:
        wr = jnp.concatenate([w_to_modes(lp["sw1_r"]), w_to_modes(lp["sw2_r"])], axis=0)
        wi = jnp.concatenate([w_to_modes(lp["sw1_i"]), w_to_modes(lp["sw2_i"])], axis=0)
        # per-mode 2x2 real block: [xr | xi] @ [[wr, wi], [-wi, wr]]
        blk = jnp.concatenate([jnp.concatenate([wr, wi], axis=2),
                               jnp.concatenate([-wi, wr], axis=2)], axis=1)  # (M,2lat,2lat)
        npair = blk.shape[0] // 2
        z = jnp.zeros((npair, 2 * lat, 2 * lat), blk.dtype)
        spec_w = jnp.concatenate(
            [jnp.concatenate([blk[0::2], z], axis=2),
             jnp.concatenate([z, blk[1::2]], axis=2)], axis=1)  # (npair, 4lat, 4lat)
        layers.append({"spec_w": spec_w.astype(wdt),
                       "conv_w": dense(lp["conv_w"]),
                       "conv_b": col_bias(lp["conv_b"])})

    return {
        "lift1_w": dense(params["lift1_w"]), "lift1_b": col_bias(params["lift1_b"]),
        "lift2_w": dense(params["lift2_w"]), "lift2_b": col_bias(params["lift2_b"]),
        "fno_layers": layers,
        "dec_hidden": [(dense(w), col_bias(b)) for (w, b) in params["dec_hidden"]],
        "dec_final_w": dense(params["dec_final_w"]),
        "dec_final_b": col_bias(params["dec_final_b"]),
    }


# ----------------------------- model forward -----------------------------

def fno_mu_std_forward(params, x, cfg):
    """x: (B, Cin, H, W) float32 (NCHW, same as PyTorch). Returns NCHW."""
    B, _, H, W = x.shape
    lat = cfg["latent_channels"]
    pad = cfg["padding"]
    m1 = m2 = cfg["num_fno_modes"]
    act = cfg["activation_fn"]

    if cfg["coord_features"]:
        # Modulus meshgrid convention: channel 0 varies along H, channel 1 along W.
        gx = jnp.linspace(0.0, 1.0, H, dtype=x.dtype)
        gy = jnp.linspace(0.0, 1.0, W, dtype=x.dtype)
        grid_x = jnp.broadcast_to(gx[:, None], (H, W))
        grid_y = jnp.broadcast_to(gy[None, :], (H, W))
        coord = jnp.broadcast_to(jnp.stack([grid_x, grid_y])[None], (B, 2, H, W))
        x = jnp.concatenate([x, coord], axis=1)

    C0 = x.shape[1]
    xf = x.reshape(B, C0, H * W)                       # channels-first points

    # fused lift network: conv1x1 -> act -> conv1x1 (single Pallas kernel)
    xf = lift_network(xf, params["lift1_w"], params["lift1_b"],
                      params["lift2_w"], params["lift2_b"], act=act)

    # pad right (W) / bottom (H) with zeros
    # TODO(synk): only padding_type="constant" (zero padding) is implemented.
    xg = jnp.pad(xf.reshape(B, lat, H, W), ((0, 0), (0, 0), (0, pad), (0, pad)))
    Hp, Wp = H + pad, W + pad
    M = 2 * m1 * m2
    n_pairs = M // 2

    n_layers = cfg["num_fno_layers"]
    for k in range(n_layers):
        lp = params["fno_layers"][k]

        # ---- SpectralConv2d: FFT glue in XLA (NCHW, no transposes) ----
        x_ft = jnp.fft.rfft2(xg)                                   # (B,lat,Hp,Wf) c64
        Wf = x_ft.shape[-1]
        # TODO(synk): assumes Hp >= 2*m1 so the two corner blocks do not overlap.
        xc = jnp.concatenate([x_ft[:, :, :m1, :m2],
                              x_ft[:, :, Hp - m1:, :m2]], axis=2)  # (B,lat,2m1,m2)
        xm = jnp.moveaxis(xc.reshape(B, lat, M), -1, 0)            # (M,B,lat) c64
        x_stack = jnp.concatenate([jnp.real(xm), jnp.imag(xm)], axis=-1)  # (M,B,2lat)
        x_pair = (x_stack.reshape(n_pairs, 2, B, 2 * lat)
                  .swapaxes(1, 2).reshape(n_pairs, B, 4 * lat))    # lane-dense 128

        mix = spectral_mix(x_pair, lp["spec_w"])                   # (n_pairs,B,4lat)

        out_stack = (mix.reshape(n_pairs, B, 2, 2 * lat)
                     .swapaxes(1, 2).reshape(M, B, 2 * lat))
        out_c = jax.lax.complex(out_stack[..., :lat], out_stack[..., lat:])  # (M,B,lat)
        oc = jnp.moveaxis(out_c, 0, -1).reshape(B, lat, 2 * m1, m2)
        mid = jnp.zeros((B, lat, Hp - 2 * m1, m2), jnp.complex64)
        out_ft = jnp.pad(
            jnp.concatenate([oc[:, :, :m1], mid, oc[:, :, m1:]], axis=2),
            ((0, 0), (0, 0), (0, 0), (0, Wf - m2)))                # (B,lat,Hp,Wf)
        x_spec = jnp.fft.irfft2(out_ft, s=(Hp, Wp))                # (B,lat,Hp,Wp) f32

        # ---- pointwise conv + spectral add + activation (fused Pallas) ----
        layer_act = act if k < n_layers - 1 else None
        xg = conv_add(xg.reshape(B, lat, Hp * Wp), lp["conv_w"], lp["conv_b"],
                      x_spec.reshape(B, lat, Hp * Wp),
                      act=layer_act).reshape(B, lat, Hp, Wp)

    # remove padding
    pts = xg[:, :, :H, :W].reshape(B, lat, H * W)

    # fused decoder MLP + final linear + mu / softplus(var) split
    ch = cfg["out_channels"] // 2
    y = decoder_network(pts, params["dec_hidden"],
                        params["dec_final_w"], params["dec_final_b"],
                        act=cfg["decoder_activation_fn"], ch=ch,
                        beta=cfg["beta"], threshold=cfg["threshold"])
    return y.reshape(B, cfg["out_channels"], H, W)                 # already NCHW


# ----------------------------- parameter init -----------------------------

def init_params(key, cfg):
    lat = cfg["latent_channels"]
    m = cfg["num_fno_modes"]
    dls = cfg["decoder_layer_size"]
    c_in = cfg["in_channels"] + (2 if cfg["coord_features"] else 0)

    keys = iter(jax.random.split(key, 256))

    def dense(cout, cin):           # torch orientation (out, in)
        s = 1.0 / jnp.sqrt(cin)
        return jax.random.uniform(next(keys), (cout, cin), jnp.float32, -s, s)

    def bias(cout):
        return jax.random.uniform(next(keys), (cout,), jnp.float32, -0.1, 0.1)

    params = {
        "lift1_w": dense(lat // 2, c_in), "lift1_b": bias(lat // 2),
        "lift2_w": dense(lat, lat // 2), "lift2_b": bias(lat),
        "fno_layers": [],
    }
    spec_scale = 1.0 / (lat * lat)
    for _ in range(cfg["num_fno_layers"]):
        params["fno_layers"].append({
            "sw1_r": spec_scale * jax.random.uniform(next(keys), (lat, lat, m, m), jnp.float32),
            "sw1_i": spec_scale * jax.random.uniform(next(keys), (lat, lat, m, m), jnp.float32),
            "sw2_r": spec_scale * jax.random.uniform(next(keys), (lat, lat, m, m), jnp.float32),
            "sw2_i": spec_scale * jax.random.uniform(next(keys), (lat, lat, m, m), jnp.float32),
            "conv_w": dense(lat, lat), "conv_b": bias(lat),
        })

    dec_hidden = []
    fin = lat
    for _ in range(cfg["decoder_layers"]):
        dec_hidden.append((dense(dls, fin), bias(dls)))
        fin = dls
    params["dec_hidden"] = dec_hidden
    params["dec_final_w"] = dense(cfg["out_channels"], fin)
    params["dec_final_b"] = bias(cfg["out_channels"])
    return params


# ----------------------------- main -----------------------------

if __name__ == "__main__":
    cfg = dict(
        in_channels=4, out_channels=4,
        decoder_layers=1, decoder_layer_size=32, decoder_activation_fn="silu",
        dimension=2, latent_channels=32, num_fno_layers=2, num_fno_modes=4,
        padding=4, padding_type="constant", activation_fn="silu",
        coord_features=True, beta=5.0, threshold=20.0,
    )

    key = jax.random.PRNGKey(0)
    kx, kp = jax.random.split(key)
    x = jax.random.normal(kx, (2, cfg["in_channels"], 16, 16), jnp.float32)
    raw = init_params(kp, cfg)
    params = prepare_params(raw, cfg)      # one-time weight layout/dtype prep

    fwd = jax.jit(functools.partial(fno_mu_std_forward, cfg=cfg))
    y = jax.block_until_ready(fwd(params, x))

    assert y.shape == (2, cfg["out_channels"], 16, 16), y.shape
    assert bool(jnp.all(jnp.isfinite(y)))
    # var half of channels must be strictly positive (softplus output)
    assert bool(jnp.all(y[:, cfg["out_channels"] // 2:, :, :] > 0.0))
    print("KERNEL_OK")
</pallas_src>

<mosaic_0001>
module attributes {stable_mosaic.version = 11 : i64} {
  func.func @_lift_kernel(%arg0: i32, %arg1: i32, %arg2: memref<1x6x256xf32, #tpu.memory_space<vmem>>, %arg3: memref<16x6xbf16, #tpu.memory_space<vmem>>, %arg4: memref<16x1xf32, #tpu.memory_space<vmem>>, %arg5: memref<32x16xbf16, #tpu.memory_space<vmem>>, %arg6: memref<32x1xf32, #tpu.memory_space<vmem>>, %arg7: memref<1x32x256xf32, #tpu.memory_space<vmem>>) attributes {dimension_semantics = [#tpu.dimension_semantics<parallel>, #tpu.dimension_semantics<parallel>], iteration_bounds = array<i64: 2, 1>, scalar_prefetch = 0 : i64, scratch_operands = 0 : i64, tpu.core_type = #tpu.core_type<tc>, window_params = [{transform_indices = @transform_0, window_bounds = array<i64: 1, 6, 256>}, {pipeline_mode = #tpu.pipeline_mode<synchronous>, transform_indices = @transform_1, window_bounds = array<i64: 16, 6>}, {pipeline_mode = #tpu.pipeline_mode<synchronous>, transform_indices = @transform_2, window_bounds = array<i64: 16, 1>}, {pipeline_mode = #tpu.pipeline_mode<synchronous>, transform_indices = @transform_3, window_bounds = array<i64: 32, 16>}, {pipeline_mode = #tpu.pipeline_mode<synchronous>, transform_indices = @transform_4, window_bounds = array<i64: 32, 1>}, {transform_indices = @transform_5, window_bounds = array<i64: 1, 32, 256>}]} {
    %c0 = arith.constant 0 : index
    %c0_0 = arith.constant 0 : index
    %c0_1 = arith.constant 0 : index
    %0 = vector.load %arg2[%c0, %c0_0, %c0_1] : memref<1x6x256xf32, #tpu.memory_space<vmem>>, vector<1x6x256xf32>
    %1 = vector.shape_cast %0 : vector<1x6x256xf32> to vector<6x256xf32>
    %2 = arith.truncf %1 : vector<6x256xf32> to vector<6x256xbf16>
    %c0_2 = arith.constant 0 : index
    %c0_3 = arith.constant 0 : index
    %3 = vector.load %arg3[%c0_2, %c0_3] : memref<16x6xbf16, #tpu.memory_space<vmem>>, vector<16x6xbf16>
    %cst = arith.constant dense<0.000000e+00> : vector<16x256xf32>
    %4 = tpu.matmul %3, %2, %cst {dimension_numbers = #tpu.dot_dimension_numbers<[1], [0], [0], [1], [0, 0, 1, 1], [], []>} : vector<16x6xbf16>, vector<6x256xbf16>, vector<16x256xf32> -> vector<16x256xf32>
    %c0_4 = arith.constant 0 : index
    %c0_5 = arith.constant 0 : index
    %5 = vector.load %arg4[%c0_4, %c0_5] : memref<16x1xf32, #tpu.memory_space<vmem>>, vector<16x1xf32>
    %6 = vector.broadcast %5 : vector<16x1xf32> to vector<16x256xf32>
    %7 = arith.addf %4, %6 : vector<16x256xf32>
    %8 = arith.negf %7 : vector<16x256xf32>
    %9 = math.exp %8 : vector<16x256xf32>
    %cst_6 = arith.constant 1.000000e+00 : f32
    %10 = vector.broadcast %cst_6 : f32 to vector<16x256xf32>
    %11 = arith.addf %10, %9 : vector<16x256xf32>
    %12 = arith.divf %10, %11 : vector<16x256xf32>
    %13 = arith.mulf %7, %12 : vector<16x256xf32>
    %c0_7 = arith.constant 0 : index
    %c0_8 = arith.constant 0 : index
    %14 = vector.load %arg5[%c0_7, %c0_8] : memref<32x16xbf16, #tpu.memory_space<vmem>>, vector<32x16xbf16>
    %15 = arith.truncf %13 : vector<16x256xf32> to vector<16x256xbf16>
    %cst_9 = arith.constant dense<0.000000e+00> : vector<32x256xf32>
    %16 = tpu.matmul %14, %15, %cst_9 {dimension_numbers = #tpu.dot_dimension_numbers<[1], [0], [0], [1], [0, 0, 1, 1], [], []>} : vector<32x16xbf16>, vector<16x256xbf16>, vector<32x256xf32> -> vector<32x256xf32>
    %c0_10 = arith.constant 0 : index
    %c0_11 = arith.constant 0 : index
    %17 = vector.load %arg6[%c0_10, %c0_11] : memref<32x1xf32, #tpu.memory_space<vmem>>, vector<32x1xf32>
    %18 = vector.broadcast %17 : vector<32x1xf32> to vector<32x256xf32>
    %19 = arith.addf %16, %18 : vector<32x256xf32>
    %c0_12 = arith.constant 0 : index
    %c0_13 = arith.constant 0 : index
    %c0_14 = arith.constant 0 : index
    %20 = vector.load %arg7[%c0_12, %c0_13, %c0_14] : memref<1x32x256xf32, #tpu.memory_space<vmem>>, vector<1x32x256xf32>
    %21 = vector.shape_cast %20 : vector<1x32x256xf32> to vector<32x256xf32>
    %22 = vector.shape_cast %19 : vector<32x256xf32> to vector<1x32x256xf32>
    tpu.vector_store %arg7[%c0_12, %c0_13, %c0_14], %22 {strides = array<i32>} : memref<1x32x256xf32, #tpu.memory_space<vmem>>, vector<1x32x256xf32>,
    return
  }
  func.func @transform_0(%arg0: i32, %arg1: i32) -> (i32, i32, i32) {
    %c0_i32 = arith.constant 0 : i32
    %c0_i32_0 = arith.constant 0 : i32
    return %arg0, %c0_i32, %arg1 : i32, i32, i32
  }
  func.func @transform_1(%arg0: i32, %arg1: i32) -> (i32, i32) {
    %c0_i32 = arith.constant 0 : i32
    %c0_i32_0 = arith.constant 0 : i32
    %c0_i32_1 = arith.constant 0 : i32
    return %c0_i32, %c0_i32_0 : i32, i32
  }
  func.func @transform_2(%arg0: i32, %arg1: i32) -> (i32, i32) {
    %c0_i32 = arith.constant 0 : i32
    %c0_i32_0 = arith.constant 0 : i32
    %c0_i32_1 = arith.constant 0 : i32
    return %c0_i32, %c0_i32_0 : i32, i32
  }
  func.func @transform_3(%arg0: i32, %arg1: i32) -> (i32, i32) {
    %c0_i32 = arith.constant 0 : i32
    %c0_i32_0 = arith.constant 0 : i32
    %c0_i32_1 = arith.constant 0 : i32
    return %c0_i32, %c0_i32_0 : i32, i32
  }
  func.func @transform_4(%arg0: i32, %arg1: i32) -> (i32, i32) {
    %c0_i32 = arith.constant 0 : i32
    %c0_i32_0 = arith.constant 0 : i32
    %c0_i32_1 = arith.constant 0 : i32
    return %c0_i32, %c0_i32_0 : i32, i32
  }
  func.func @transform_5(%arg0: i32, %arg1: i32) -> (i32, i32, i32) {
    %c0_i32 = arith.constant 0 : i32
    %c0_i32_0 = arith.constant 0 : i32
    return %arg0, %c0_i32, %arg1 : i32, i32, i32
  }
}

module attributes {stable_mosaic.version = 11 : i64} {
  func.func @_spectral_kernel(%arg0: i32, %arg1: memref<16x2x128xf32, #tpu.memory_space<vmem>>, %arg2: memref<16x128x128xbf16, #tpu.memory_space<vmem>>, %arg3: memref<16x2x128xf32, #tpu.memory_space<vmem>>) attributes {dimension_semantics = [#tpu.dimension_semantics<parallel>], iteration_bounds = array<i64: 1>, scalar_prefetch = 0 : i64, scratch_operands = 0 : i64, tpu.core_type = #tpu.core_type<tc>, window_params = [{transform_indices = @transform_0, window_bounds = array<i64: 16, 2, 128>}, {transform_indices = @transform_1, window_bounds = array<i64: 16, 128, 128>}, {transform_indices = @transform_2, window_bounds = array<i64: 16, 2, 128>}]} {
    %c0 = arith.constant 0 : index
    %c0_0 = arith.constant 0 : index
    %c0_1 = arith.constant 0 : index
    %0 = vector.load %arg1[%c0, %c0_0, %c0_1] : memref<16x2x128xf32, #tpu.memory_space<vmem>>, vector<16x2x128xf32>
    %1 = arith.truncf %0 : vector<16x2x128xf32> to vector<16x2x128xbf16>
    %c0_2 = arith.constant 0 : index
    %c0_3 = arith.constant 0 : index
    %c0_4 = arith.constant 0 : index
    %2 = vector.load %arg2[%c0_2, %c0_3, %c0_4] : memref<16x128x128xbf16, #tpu.memory_space<vmem>>, vector<16x128x128xbf16>
    "tpu.trace_start"() <{level = 10 : i32, message = "pbk,pko->pbo"}> : () -> ()
    %cst = arith.constant dense<0.000000e+00> : vector<16x2x128xf32>
    %3 = tpu.matmul %1, %2, %cst {dimension_numbers = #tpu.dot_dimension_numbers<[2], [1], [1], [2], [0, 0, 0, 1, 1, 2], [0], [0]>} : vector<16x2x128xbf16>, vector<16x128x128xbf16>, vector<16x2x128xf32> -> vector<16x2x128xf32>
    "tpu.trace_stop"() : () -> ()
    %c0_5 = arith.constant 0 : index
    %c0_6 = arith.constant 0 : index
    %c0_7 = arith.constant 0 : index
    %4 = vector.load %arg3[%c0_5, %c0_6, %c0_7] : memref<16x2x128xf32, #tpu.memory_space<vmem>>, vector<16x2x128xf32>
    tpu.vector_store %arg3[%c0_5, %c0_6, %c0_7], %3 {strides = array<i32>} : memref<16x2x128xf32, #tpu.memory_space<vmem>>, vector<16x2x128xf32>,
    return
  }
  func.func @transform_0(%arg0: i32) -> (i32, i32, i32) {
    %c0_i32 = arith.constant 0 : i32
    %c0_i32_0 = arith.constant 0 : i32
    %c0_i32_1 = arith.constant 0 : i32
    return %arg0, %c0_i32, %c0_i32_0 : i32, i32, i32
  }
  func.func @transform_1(%arg0: i32) -> (i32, i32, i32) {
    %c0_i32 = arith.constant 0 : i32
    %c0_i32_0 = arith.constant 0 : i32
    %c0_i32_1 = arith.constant 0 : i32
    return %arg0, %c0_i32, %c0_i32_0 : i32, i32, i32
  }
  func.func @transform_2(%arg0: i32) -> (i32, i32, i32) {
    %c0_i32 = arith.constant 0 : i32
    %c0_i32_0 = arith.constant 0 : i32
    %c0_i32_1 = arith.constant 0 : i32
    return %arg0, %c0_i32, %c0_i32_0 : i32, i32, i32
  }
}

module attributes {stable_mosaic.version = 11 : i64} {
  func.func @_conv_add_kernel(%arg0: i32, %arg1: i32, %arg2: memref<1x32x400xf32, #tpu.memory_space<vmem>>, %arg3: memref<32x32xbf16, #tpu.memory_space<vmem>>, %arg4: memref<32x1xf32, #tpu.memory_space<vmem>>, %arg5: memref<1x32x400xf32, #tpu.memory_space<vmem>>, %arg6: memref<1x32x400xf32, #tpu.memory_space<vmem>>) attributes {dimension_semantics = [#tpu.dimension_semantics<parallel>, #tpu.dimension_semantics<parallel>], iteration_bounds = array<i64: 2, 1>, scalar_prefetch = 0 : i64, scratch_operands = 0 : i64, tpu.core_type = #tpu.core_type<tc>, window_params = [{transform_indices = @transform_0, window_bounds = array<i64: 1, 32, 400>}, {pipeline_mode = #tpu.pipeline_mode<synchronous>, transform_indices = @transform_1, window_bounds = array<i64: 32, 32>}, {pipeline_mode = #tpu.pipeline_mode<synchronous>, transform_indices = @transform_2, window_bounds = array<i64: 32, 1>}, {transform_indices = @transform_3, window_bounds = array<i64: 1, 32, 400>}, {transform_indices = @transform_4, window_bounds = array<i64: 1, 32, 400>}]} {
    %c0 = arith.constant 0 : index
    %c0_0 = arith.constant 0 : index
    %0 = vector.load %arg3[%c0, %c0_0] : memref<32x32xbf16, #tpu.memory_space<vmem>>, vector<32x32xbf16>
    %c0_1 = arith.constant 0 : index
    %c0_2 = arith.constant 0 : index
    %c0_3 = arith.constant 0 : index
    %1 = vector.load %arg2[%c0_1, %c0_2, %c0_3] : memref<1x32x400xf32, #tpu.memory_space<vmem>>, vector<1x32x400xf32>
    %2 = vector.shape_cast %1 : vector<1x32x400xf32> to vector<32x400xf32>
    %3 = arith.truncf %2 : vector<32x400xf32> to vector<32x400xbf16>
    %cst = arith.constant dense<0.000000e+00> : vector<32x400xf32>
    %4 = tpu.matmul %0, %3, %cst {dimension_numbers = #tpu.dot_dimension_numbers<[1], [0], [0], [1], [0, 0, 1, 1], [], []>} : vector<32x32xbf16>, vector<32x400xbf16>, vector<32x400xf32> -> vector<32x400xf32>
    %c0_4 = arith.constant 0 : index
    %c0_5 = arith.constant 0 : index
    %5 = vector.load %arg4[%c0_4, %c0_5] : memref<32x1xf32, #tpu.memory_space<vmem>>, vector<32x1xf32>
    %6 = vector.broadcast %5 : vector<32x1xf32> to vector<32x400xf32>
    %7 = arith.addf %4, %6 : vector<32x400xf32>
    %c0_6 = arith.constant 0 : index
    %c0_7 = arith.constant 0 : index
    %c0_8 = arith.constant 0 : index
    %8 = vector.load %arg5[%c0_6, %c0_7, %c0_8] : memref<1x32x400xf32, #tpu.memory_space<vmem>>, vector<1x32x400xf32>
    %9 = vector.shape_cast %8 : vector<1x32x400xf32> to vector<32x400xf32>
    %10 = arith.addf %7, %9 : vector<32x400xf32>
    %11 = arith.negf %10 : vector<32x400xf32>
    %12 = math.exp %11 : vector<32x400xf32>
    %cst_9 = arith.constant 1.000000e+00 : f32
    %13 = vector.broadcast %cst_9 : f32 to vector<32x400xf32>
    %14 = arith.addf %13, %12 : vector<32x400xf32>
    %15 = arith.divf %13, %14 : vector<32x400xf32>
    %16 = arith.mulf %10, %15 : vector<32x400xf32>
    %c0_10 = arith.constant 0 : index
    %c0_11 = arith.constant 0 : index
    %c0_12 = arith.constant 0 : index
    %17 = vector.load %arg6[%c0_10, %c0_11, %c0_12] : memref<1x32x400xf32, #tpu.memory_space<vmem>>, vector<1x32x400xf32>
    %18 = vector.shape_cast %17 : vector<1x32x400xf32> to vector<32x400xf32>
    %19 = vector.shape_cast %16 : vector<32x400xf32> to vector<1x32x400xf32>
    tpu.vector_store %arg6[%c0_10, %c0_11, %c0_12], %19 {strides = array<i32>} : memref<1x32x400xf32, #tpu.memory_space<vmem>>, vector<1x32x400xf32>,
    return
  }
  func.func @transform_0(%arg0: i32, %arg1: i32) -> (i32, i32, i32) {
    %c0_i32 = arith.constant 0 : i32
    %c0_i32_0 = arith.constant 0 : i32
    return %arg0, %c0_i32, %arg1 : i32, i32, i32
  }
  func.func @transform_1(%arg0: i32, %arg1: i32) -> (i32, i32) {
    %c0_i32 = arith.constant 0 : i32
    %c0_i32_0 = arith.constant 0 : i32
    %c0_i32_1 = arith.constant 0 : i32
    return %c0_i32, %c0_i32_0 : i32, i32
  }
  func.func @transform_2(%arg0: i32, %arg1: i32) -> (i32, i32) {
    %c0_i32 = arith.constant 0 : i32
    %c0_i32_0 = arith.constant 0 : i32
    %c0_i32_1 = arith.constant 0 : i32
    return %c0_i32, %c0_i32_0 : i32, i32
  }
  func.func @transform_3(%arg0: i32, %arg1: i32) -> (i32, i32, i32) {
    %c0_i32 = arith.constant 0 : i32
    %c0_i32_0 = arith.constant 0 : i32
    return %arg0, %c0_i32, %arg1 : i32, i32, i32
  }
  func.func @transform_4(%arg0: i32, %arg1: i32) -> (i32, i32, i32) {
    %c0_i32 = arith.constant 0 : i32
    %c0_i32_0 = arith.constant 0 : i32
    return %arg0, %c0_i32, %arg1 : i32, i32, i32
  }
}

module attributes {stable_mosaic.version = 11 : i64} {
  func.func @_conv_add_kernel(%arg0: i32, %arg1: i32, %arg2: memref<1x32x400xf32, #tpu.memory_space<vmem>>, %arg3: memref<32x32xbf16, #tpu.memory_space<vmem>>, %arg4: memref<32x1xf32, #tpu.memory_space<vmem>>, %arg5: memref<1x32x400xf32, #tpu.memory_space<vmem>>, %arg6: memref<1x32x400xf32, #tpu.memory_space<vmem>>) attributes {dimension_semantics = [#tpu.dimension_semantics<parallel>, #tpu.dimension_semantics<parallel>], iteration_bounds = array<i64: 2, 1>, scalar_prefetch = 0 : i64, scratch_operands = 0 : i64, tpu.core_type = #tpu.core_type<tc>, window_params = [{transform_indices = @transform_0, window_bounds = array<i64: 1, 32, 400>}, {pipeline_mode = #tpu.pipeline_mode<synchronous>, transform_indices = @transform_1, window_bounds = array<i64: 32, 32>}, {pipeline_mode = #tpu.pipeline_mode<synchronous>, transform_indices = @transform_2, window_bounds = array<i64: 32, 1>}, {transform_indices = @transform_3, window_bounds = array<i64: 1, 32, 400>}, {transform_indices = @transform_4, window_bounds = array<i64: 1, 32, 400>}]} {
    %c0 = arith.constant 0 : index
    %c0_0 = arith.constant 0 : index
    %0 = vector.load %arg3[%c0, %c0_0] : memref<32x32xbf16, #tpu.memory_space<vmem>>, vector<32x32xbf16>
    %c0_1 = arith.constant 0 : index
    %c0_2 = arith.constant 0 : index
    %c0_3 = arith.constant 0 : index
    %1 = vector.load %arg2[%c0_1, %c0_2, %c0_3] : memref<1x32x400xf32, #tpu.memory_space<vmem>>, vector<1x32x400xf32>
    %2 = vector.shape_cast %1 : vector<1x32x400xf32> to vector<32x400xf32>
    %3 = arith.truncf %2 : vector<32x400xf32> to vector<32x400xbf16>
    %cst = arith.constant dense<0.000000e+00> : vector<32x400xf32>
    %4 = tpu.matmul %0, %3, %cst {dimension_numbers = #tpu.dot_dimension_numbers<[1], [0], [0], [1], [0, 0, 1, 1], [], []>} : vector<32x32xbf16>, vector<32x400xbf16>, vector<32x400xf32> -> vector<32x400xf32>
    %c0_4 = arith.constant 0 : index
    %c0_5 = arith.constant 0 : index
    %5 = vector.load %arg4[%c0_4, %c0_5] : memref<32x1xf32, #tpu.memory_space<vmem>>, vector<32x1xf32>
    %6 = vector.broadcast %5 : vector<32x1xf32> to vector<32x400xf32>
    %7 = arith.addf %4, %6 : vector<32x400xf32>
    %c0_6 = arith.constant 0 : index
    %c0_7 = arith.constant 0 : index
    %c0_8 = arith.constant 0 : index
    %8 = vector.load %arg5[%c0_6, %c0_7, %c0_8] : memref<1x32x400xf32, #tpu.memory_space<vmem>>, vector<1x32x400xf32>
    %9 = vector.shape_cast %8 : vector<1x32x400xf32> to vector<32x400xf32>
    %10 = arith.addf %7, %9 : vector<32x400xf32>
    %c0_9 = arith.constant 0 : index
    %c0_10 = arith.constant 0 : index
    %c0_11 = arith.constant 0 : index
    %11 = vector.load %arg6[%c0_9, %c0_10, %c0_11] : memref<1x32x400xf32, #tpu.memory_space<vmem>>, vector<1x32x400xf32>
    %12 = vector.shape_cast %11 : vector<1x32x400xf32> to vector<32x400xf32>
    %13 = vector.shape_cast %10 : vector<32x400xf32> to vector<1x32x400xf32>
    tpu.vector_store %arg6[%c0_9, %c0_10, %c0_11], %13 {strides = array<i32>} : memref<1x32x400xf32, #tpu.memory_space<vmem>>, vector<1x32x400xf32>,
    return
  }
  func.func @transform_0(%arg0: i32, %arg1: i32) -> (i32, i32, i32) {
    %c0_i32 = arith.constant 0 : i32
    %c0_i32_0 = arith.constant 0 : i32
    return %arg0, %c0_i32, %arg1 : i32, i32, i32
  }
  func.func @transform_1(%arg0: i32, %arg1: i32) -> (i32, i32) {
    %c0_i32 = arith.constant 0 : i32
    %c0_i32_0 = arith.constant 0 : i32
    %c0_i32_1 = arith.constant 0 : i32
    return %c0_i32, %c0_i32_0 : i32, i32
  }
  func.func @transform_2(%arg0: i32, %arg1: i32) -> (i32, i32) {
    %c0_i32 = arith.constant 0 : i32
    %c0_i32_0 = arith.constant 0 : i32
    %c0_i32_1 = arith.constant 0 : i32
    return %c0_i32, %c0_i32_0 : i32, i32
  }
  func.func @transform_3(%arg0: i32, %arg1: i32) -> (i32, i32, i32) {
    %c0_i32 = arith.constant 0 : i32
    %c0_i32_0 = arith.constant 0 : i32
    return %arg0, %c0_i32, %arg1 : i32, i32, i32
  }
  func.func @transform_4(%arg0: i32, %arg1: i32) -> (i32, i32, i32) {
    %c0_i32 = arith.constant 0 : i32
    %c0_i32_0 = arith.constant 0 : i32
    return %arg0, %c0_i32, %arg1 : i32, i32, i32
  }
}

module attributes {stable_mosaic.version = 11 : i64} {
  func.func @_decoder_kernel(%arg0: i32, %arg1: i32, %arg2: memref<1x32x256xf32, #tpu.memory_space<vmem>>, %arg3: memref<32x32xbf16, #tpu.memory_space<vmem>>, %arg4: memref<32x1xf32, #tpu.memory_space<vmem>>, %arg5: memref<4x32xbf16, #tpu.memory_space<vmem>>, %arg6: memref<4x1xf32, #tpu.memory_space<vmem>>, %arg7: memref<1x4x256xf32, #tpu.memory_space<vmem>>) attributes {dimension_semantics = [#tpu.dimension_semantics<parallel>, #tpu.dimension_semantics<parallel>], iteration_bounds = array<i64: 2, 1>, scalar_prefetch = 0 : i64, scratch_operands = 0 : i64, tpu.core_type = #tpu.core_type<tc>, window_params = [{transform_indices = @transform_0, window_bounds = array<i64: 1, 32, 256>}, {pipeline_mode = #tpu.pipeline_mode<synchronous>, transform_indices = @transform_1, window_bounds = array<i64: 32, 32>}, {pipeline_mode = #tpu.pipeline_mode<synchronous>, transform_indices = @transform_2, window_bounds = array<i64: 32, 1>}, {pipeline_mode = #tpu.pipeline_mode<synchronous>, transform_indices = @transform_3, window_bounds = array<i64: 4, 32>}, {pipeline_mode = #tpu.pipeline_mode<synchronous>, transform_indices = @transform_4, window_bounds = array<i64: 4, 1>}, {transform_indices = @transform_5, window_bounds = array<i64: 1, 4, 256>}]} {
    %c0 = arith.constant 0 : index
    %c0_0 = arith.constant 0 : index
    %c0_1 = arith.constant 0 : index
    %0 = vector.load %arg2[%c0, %c0_0, %c0_1] : memref<1x32x256xf32, #tpu.memory_space<vmem>>, vector<1x32x256xf32>
    %1 = vector.shape_cast %0 : vector<1x32x256xf32> to vector<32x256xf32>
    %2 = arith.truncf %1 : vector<32x256xf32> to vector<32x256xbf16>
    %c0_2 = arith.constant 0 : index
    %c0_3 = arith.constant 0 : index
    %3 = vector.load %arg3[%c0_2, %c0_3] : memref<32x32xbf16, #tpu.memory_space<vmem>>, vector<32x32xbf16>
    %cst = arith.constant dense<0.000000e+00> : vector<32x256xf32>
    %4 = tpu.matmul %3, %2, %cst {dimension_numbers = #tpu.dot_dimension_numbers<[1], [0], [0], [1], [0, 0, 1, 1], [], []>} : vector<32x32xbf16>, vector<32x256xbf16>, vector<32x256xf32> -> vector<32x256xf32>
    %c0_4 = arith.constant 0 : index
    %c0_5 = arith.constant 0 : index
    %5 = vector.load %arg4[%c0_4, %c0_5] : memref<32x1xf32, #tpu.memory_space<vmem>>, vector<32x1xf32>
    %6 = vector.broadcast %5 : vector<32x1xf32> to vector<32x256xf32>
    %7 = arith.addf %4, %6 : vector<32x256xf32>
    %8 = arith.negf %7 : vector<32x256xf32>
    %9 = math.exp %8 : vector<32x256xf32>
    %cst_6 = arith.constant 1.000000e+00 : f32
    %10 = vector.broadcast %cst_6 : f32 to vector<32x256xf32>
    %11 = arith.addf %10, %9 : vector<32x256xf32>
    %12 = arith.divf %10, %11 : vector<32x256xf32>
    %13 = arith.mulf %7, %12 : vector<32x256xf32>
    %14 = arith.truncf %13 : vector<32x256xf32> to vector<32x256xbf16>
    %c0_7 = arith.constant 0 : index
    %c0_8 = arith.constant 0 : index
    %15 = vector.load %arg5[%c0_7, %c0_8] : memref<4x32xbf16, #tpu.memory_space<vmem>>, vector<4x32xbf16>
    %cst_9 = arith.constant dense<0.000000e+00> : vector<4x256xf32>
    %16 = tpu.matmul %15, %14, %cst_9 {dimension_numbers = #tpu.dot_dimension_numbers<[1], [0], [0], [1], [0, 0, 1, 1], [], []>} : vector<4x32xbf16>, vector<32x256xbf16>, vector<4x256xf32> -> vector<4x256xf32>
    %c0_10 = arith.constant 0 : index
    %c0_11 = arith.constant 0 : index
    %17 = vector.load %arg6[%c0_10, %c0_11] : memref<4x1xf32, #tpu.memory_space<vmem>>, vector<4x1xf32>
    %18 = vector.broadcast %17 : vector<4x1xf32> to vector<4x256xf32>
    %19 = arith.addf %16, %18 : vector<4x256xf32>
    %20 = tpu.iota {dimensions = array<i32: 0>} : vector<4x256xi32>
    %cst_12 = arith.constant 5.000000e+00 : f32
    %21 = vector.broadcast %cst_12 : f32 to vector<4x256xf32>
    %22 = arith.mulf %21, %19 : vector<4x256xf32>
    %cst_13 = arith.constant 2.000000e+01 : f32
    %23 = vector.broadcast %cst_13 : f32 to vector<4x256xf32>
    %24 = arith.minimumf %22, %23 : vector<4x256xf32>
    %25 = math.exp %24 : vector<4x256xf32>
    %26 = math.log1p %25 : vector<4x256xf32>
    %cst_14 = arith.constant 2.000000e-01 : f32
    %27 = vector.broadcast %cst_14 : f32 to vector<4x256xf32>
    %28 = arith.mulf %26, %27 : vector<4x256xf32>
    %cst_15 = arith.constant 2.000000e+01 : f32
    %29 = vector.broadcast %cst_15 : f32 to vector<4x256xf32>
    %30 = arith.cmpf ogt, %22, %29 : vector<4x256xf32>
    %31 = arith.select %30, %19, %28 : vector<4x256xi1>, vector<4x256xf32>
    %c2_i32 = arith.constant 2 : i32
    %32 = vector.broadcast %c2_i32 : i32 to vector<4x256xi32>
    %33 = arith.cmpi sge, %20, %32 : vector<4x256xi32>
    %34 = arith.select %33, %31, %19 : vector<4x256xi1>, vector<4x256xf32>
    %c0_16 = arith.constant 0 : index
    %c0_17 = arith.constant 0 : index
    %c0_18 = arith.constant 0 : index
    %35 = vector.load %arg7[%c0_16, %c0_17, %c0_18] : memref<1x4x256xf32, #tpu.memory_space<vmem>>, vector<1x4x256xf32>
    %36 = vector.shape_cast %35 : vector<1x4x256xf32> to vector<4x256xf32>
    %37 = vector.shape_cast %34 : vector<4x256xf32> to vector<1x4x256xf32>
    tpu.vector_store %arg7[%c0_16, %c0_17, %c0_18], %37 {strides = array<i32>} : memref<1x4x256xf32, #tpu.memory_space<vmem>>, vector<1x4x256xf32>,
    return
  }
  func.func @transform_0(%arg0: i32, %arg1: i32) -> (i32, i32, i32) {
    %c0_i32 = arith.constant 0 : i32
    %c0_i32_0 = arith.constant 0 : i32
    return %arg0, %c0_i32, %arg1 : i32, i32, i32
  }
  func.func @transform_1(%arg0: i32, %arg1: i32) -> (i32, i32) {
    %c0_i32 = arith.constant 0 : i32
    %c0_i32_0 = arith.constant 0 : i32
    %c0_i32_1 = arith.constant 0 : i32
    return %c0_i32, %c0_i32_0 : i32, i32
  }
  func.func @transform_2(%arg0: i32, %arg1: i32) -> (i32, i32) {
    %c0_i32 = arith.constant 0 : i32
    %c0_i32_0 = arith.constant 0 : i32
    %c0_i32_1 = arith.constant 0 : i32
    return %c0_i32, %c0_i32_0 : i32, i32
  }
  func.func @transform_3(%arg0: i32, %arg1: i32) -> (i32, i32) {
    %c0_i32 = arith.constant 0 : i32
    %c0_i32_0 = arith.constant 0 : i32
    %c0_i32_1 = arith.constant 0 : i32
    return %c0_i32, %c0_i32_0 : i32, i32
  }
  func.func @transform_4(%arg0: i32, %arg1: i32) -> (i32, i32) {
    %c0_i32 = arith.constant 0 : i32
    %c0_i32_0 = arith.constant 0 : i32
    %c0_i32_1 = arith.constant 0 : i32
    return %c0_i32, %c0_i32_0 : i32, i32
  }
  func.func @transform_5(%arg0: i32, %arg1: i32) -> (i32, i32, i32) {
    %c0_i32 = arith.constant 0 : i32
    %c0_i32_0 = arith.constant 0 : i32
    return %arg0, %c0_i32, %arg1 : i32, i32, i32
  }
}

</mosaic_0001>

<llo_original>
// kernel: fno_mu_std_forward.6
$region0: #{fno_mu_std_forward.6}
  #allocation0 [shape = 'u32[]', space=smem, size = 0x4, offset = 0x4, fixed_abs, tag = 'smem constant byte address 0x4 - core index']
  #allocation1 [shape = 'u32[144,128]{1,0:T(1,128)}', space=vmem, size = 0x12000, scoped, tag = 'internal scratch']
  %s0 = inlined_call_operand.vmem [shape: f32[2,6,256], index: 0, kind: input, shape index: {}]
  %s1 = inlined_call_operand.vmem [shape: bf16[16,6], index: 1, kind: input, shape index: {}]
  %s2 = inlined_call_operand.vmem [shape: f32[16,1], index: 2, kind: input, shape index: {}]
  %s3 = inlined_call_operand.vmem [shape: bf16[32,16], index: 3, kind: input, shape index: {}]
  %s4 = inlined_call_operand.vmem [shape: f32[32,1], index: 4, kind: input, shape index: {}]
  %s5 = inlined_call_operand.vmem [shape: f32[2,32,256], index: 5, kind: output, shape index: {}]
  %s6 = sld [smem:[#allocation0]]
  $region53: #{fno_mu_std_forward.6} parent=0
    _
  %s8 = ssub.s32 1, %s6
  %s9 = scalar_select 0, %s8, %s6
  loop: start=0, step=1, limit=4
  $region2: #{fno_mu_std_forward.6} parent=0 // loop_pre_header
    _
  $region3: #{fno_mu_std_forward.6} parent=0 // loop_header
    %s11 = sphi 0, %s15
    %p12 = scmp.ge.s32.totalorder %s11, 4
    %s18 = sphi 0, %s30
    %s19 = sphi 0, %s26
    %s20 = sphi 0, %s18
    %s21 = sphi 0, %s19
    %s22 = sphi 0, %s20
    %s23 = sphi 0, %s21
    %s35 = sphi 0, %s37
    %s38 = sphi 0, %s35
    %s39 = sphi 0, %s38
    %s55 = sphi 0, %s39
    %s59 = sphi 0, %s59
    %s61 = sphi 0, %s59
    %s62 = sphi 0, %s61
    %s76 = sphi 0, %s62
    %s80 = sphi 0, %s80
    %s82 = sphi 0, %s80
    %s83 = sphi 0, %s82
    %s97 = sphi 0, %s83
    %s101 = sphi 0, %s101
    %s103 = sphi 0, %s101
    %s104 = sphi 0, %s103
    %s118 = sphi 0, %s104
    %s122 = sphi 0, %s122
    %s124 = sphi 0, %s122
    %s125 = sphi 0, %s124
    %s139 = sphi 0, %s125
    %s147 = sphi 0, %s149
    %s150 = sphi 0, %s147
    %s151 = sphi 0, %s150
    %s167 = sphi 0, %s151
  $region4: #{fno_mu_std_forward.6} parent=0 // loop_header_branch
    %14 = sbr.rel (%p12) target = $region8
  $region5: #{fno_mu_std_forward.6} parent=0 // loop_body
    %s16 = ssub.s32 %s11, 1
    %s17 = ssub.s32 %s11, 2
    %s24 = sadd.s32 1, %s19
    %p25 = scmp.ge.s32.totalorder %s24, 1
    %s26 = scalar_select %p25, 0, %s24
    %s27 = sadd.s32 1, %s18
    %s28 = scalar_select %p25, %s27, %s18
    %p29 = scmp.ge.s32.totalorder %s28, 2
    %s30 = scalar_select %p29, 0, %s28
    %s31 = ssub.s32 %s18, %s30
    %s32 = ssub.s32 %s19, %s26
    %s33 = sor.u32 %s31, %s32
    %p34 = scmp.eq.s32.totalorder %s33, 0
    %s36 = sadd.s32 %s35, 1
    %s37 = scalar_select %p34, %s35, %s36
    %p40 = pneg %p34
    %p41 = scmp.eq.s32.totalorder %s11, 1
    %p42 = por %p40, %p41
    %p43 = scmp.ne.s32.totalorder %s35, %s38
    %p44 = scmp.eq.s32.totalorder %s11, 0
    %p45 = por %p43, %p44
    %p46 = scmp.ne.s32.totalorder %s35, %s38
    %p47 = scmp.eq.s32.totalorder %s16, 1
    %p48 = por %p46, %p47
    %p49 = scmp.ne.s32.totalorder %s38, %s39
    %p50 = scmp.eq.s32.totalorder %s16, 0
    %p51 = por %p49, %p50
    %p52 = scmp.ne.s32.totalorder %s38, %s39
    %p53 = scmp.eq.s32.totalorder %s17, 1
    %p54 = por %p52, %p53
    %p56 = scmp.ne.s32.totalorder %s39, %s55
    %p57 = scmp.eq.s32.totalorder %s17, 0
    %p58 = por %p56, %p57
    %s60 = sadd.s32 %s59, 1
    %p63 = scmp.eq.s32.totalorder %s11, 1
    %p64 = scmp.ne.s32.totalorder %s59, %s61
    %p65 = scmp.eq.s32.totalorder %s11, 0
    %p66 = por %p64, %p65
    %p67 = scmp.ne.s32.totalorder %s59, %s61
    %p68 = scmp.eq.s32.totalorder %s16, 1
    %p69 = por %p67, %p68
    %p70 = scmp.ne.s32.totalorder %s61, %s62
    %p71 = scmp.eq.s32.totalorder %s16, 0
    %p72 = por %p70, %p71
    %p73 = scmp.ne.s32.totalorder %s61, %s62
    %p74 = scmp.eq.s32.totalorder %s17, 1
    %p75 = por %p73, %p74
    %p77 = scmp.ne.s32.totalorder %s62, %s76
    %p78 = scmp.eq.s32.totalorder %s17, 0
    %p79 = por %p77, %p78
    %s81 = sadd.s32 %s80, 1
    %p84 = scmp.eq.s32.totalorder %s11, 1
    %p85 = scmp.ne.s32.totalorder %s80, %s82
    %p86 = scmp.eq.s32.totalorder %s11, 0
    %p87 = por %p85, %p86
    %p88 = scmp.ne.s32.totalorder %s80, %s82
    %p89 = scmp.eq.s32.totalorder %s16, 1
    %p90 = por %p88, %p89
    %p91 = scmp.ne.s32.totalorder %s82, %s83
    %p92 = scmp.eq.s32.totalorder %s16, 0
    %p93 = por %p91, %p92
    %p94 = scmp.ne.s32.totalorder %s82, %s83
    %p95 = scmp.eq.s32.totalorder %s17, 1
    %p96 = por %p94, %p95
    %p98 = scmp.ne.s32.totalorder %s83, %s97
    %p99 = scmp.eq.s32.totalorder %s17, 0
    %p100 = por %p98, %p99
    %s102 = sadd.s32 %s101, 1
    %p105 = scmp.eq.s32.totalorder %s11, 1
    %p106 = scmp.ne.s32.totalorder %s101, %s103
    %p107 = scmp.eq.s32.totalorder %s11, 0
    %p108 = por %p106, %p107
    %p109 = scmp.ne.s32.totalorder %s101, %s103
    %p110 = scmp.eq.s32.totalorder %s16, 1
    %p111 = por %p109, %p110
    %p112 = scmp.ne.s32.totalorder %s103, %s104
    %p113 = scmp.eq.s32.totalorder %s16, 0
    %p114 = por %p112, %p113
    %p115 = scmp.ne.s32.totalorder %s103, %s104
    %p116 = scmp.eq.s32.totalorder %s17, 1
    %p117 = por %p115, %p116
    %p119 = scmp.ne.s32.totalorder %s104, %s118
    %p120 = scmp.eq.s32.totalorder %s17, 0
    %p121 = por %p119, %p120
    %s123 = sadd.s32 %s122, 1
    %p126 = scmp.eq.s32.totalorder %s11, 1
    %p127 = scmp.ne.s32.totalorder %s122, %s124
    %p128 = scmp.eq.s32.totalorder %s11, 0
    %p129 = por %p127, %p128
    %p130 = scmp.ne.s32.totalorder %s122, %s124
    %p131 = scmp.eq.s32.totalorder %s16, 1
    %p132 = por %p130, %p131
    %p133 = scmp.ne.s32.totalorder %s124, %s125
    %p134 = scmp.eq.s32.totalorder %s16, 0
    %p135 = por %p133, %p134
    %p136 = scmp.ne.s32.totalorder %s124, %s125
    %p137 = scmp.eq.s32.totalorder %s17, 1
    %p138 = por %p136, %p137
    %p140 = scmp.ne.s32.totalorder %s125, %s139
    %p141 = scmp.eq.s32.totalorder %s17, 0
    %p142 = por %p140, %p141
    %s143 = ssub.s32 %s18, %s30
    %s144 = ssub.s32 %s19, %s26
    %s145 = sor.u32 %s143, %s144
    %p146 = scmp.eq.s32.totalorder %s145, 0
    %s148 = sadd.s32 %s147, 1
    %s149 = scalar_select %p146, %s147, %s148
    %p152 = pneg %p146
    %p153 = scmp.eq.s32.totalorder %s11, 1
    %p154 = por %p152, %p153
    %p155 = scmp.ne.s32.totalorder %s147, %s150
    %p156 = scmp.eq.s32.totalorder %s11, 0
    %p157 = por %p155, %p156
    %p158 = scmp.ne.s32.totalorder %s147, %s150
    %p159 = scmp.eq.s32.totalorder %s16, 1
    %p160 = por %p158, %p159
    %p161 = scmp.ne.s32.totalorder %s150, %s151
    %p162 = scmp.eq.s32.totalorder %s16, 0
    %p163 = por %p161, %p162
    %p164 = scmp.ne.s32.totalorder %s150, %s151
    %p165 = scmp.eq.s32.totalorder %s17, 1
    %p166 = por %p164, %p165
    %p168 = scmp.ne.s32.totalorder %s151, %s167
    %p169 = scmp.eq.s32.totalorder %s17, 0
    %p170 = por %p168, %p169
    %p171 = scmp.le.s32.totalorder 1, %s11
    %p172 = scmp.lt.s32.totalorder %s11, 3
    %p173 = pnand %p171, %p172
    %p174 = pneg %p173
    // Predicated region
    $region9: #{fno_mu_std_forward.6} parent=5 // pred_check
      _
    $region10: #{fno_mu_std_forward.6} parent=5 // pred_check_branch
      %176 = sbr.rel (%p173) target = $region12
    $region11: #{fno_mu_std_forward.6} parent=5 // pred_region
      %s177 = ssub.s32 %s11, 1
      // Predicated region
      $region13: #{fno_mu_std_forward.6} parent=11 // pred_check
        %p178 = pneg %p72
      $region14: #{fno_mu_std_forward.6} parent=11 // pred_check_branch
        %180 = sbr.rel (%p178) target = $region16
      $region15: #{fno_mu_std_forward.6} parent=11 // pred_region
        _
      $region16: #{fno_mu_std_forward.6} parent=11 // pred_fallthru
        _
      // Predicated region
      $region17: #{fno_mu_std_forward.6} parent=11 // pred_check
        %p181 = pneg %p93
      $region18: #{fno_mu_std_forward.6} parent=11 // pred_check_branch
        %183 = sbr.rel (%p181) target = $region20
      $region19: #{fno_mu_std_forward.6} parent=11 // pred_region
        _
      $region20: #{fno_mu_std_forward.6} parent=11 // pred_fallthru
        _
      // Predicated region
      $region21: #{fno_mu_std_forward.6} parent=11 // pred_check
        %p184 = pneg %p114
      $region22: #{fno_mu_std_forward.6} parent=11 // pred_check_branch
        %186 = sbr.rel (%p184) target = $region24
      $region23: #{fno_mu_std_forward.6} parent=11 // pred_region
        _
      $region24: #{fno_mu_std_forward.6} parent=11 // pred_fallthru
        _
      // Predicated region
      $region25: #{fno_mu_std_forward.6} parent=11 // pred_check
        %p187 = pneg %p135
      $region26: #{fno_mu_std_forward.6} parent=11 // pred_check_branch
        %189 = sbr.rel (%p187) target = $region28
      $region27: #{fno_mu_std_forward.6} parent=11 // pred_region
        _
      $region28: #{fno_mu_std_forward.6} parent=11 // pred_fallthru
        _
    $region12: #{fno_mu_std_forward.6} parent=5 // pred_fallthru
      _
    %p190 = scmp.lt.s32.totalorder %s11, 2
    // Predicated region
    $region29: #{fno_mu_std_forward.6} parent=5 // pred_check
      %p191 = pneg %p190
    $region30: #{fno_mu_std_forward.6} parent=5 // pred_check_branch
      %193 = sbr.rel (%p191) target = $region32
    $region31: #{fno_mu_std_forward.6} parent=5 // pred_region
      // Predicated region
      $region33: #{fno_mu_std_forward.6} parent=31 // pred_check
        %p194 = pneg %p45
      $region34: #{fno_mu_std_forward.6} parent=31 // pred_check_branch
        %196 = sbr.rel (%p194) target = $region36
      $region35: #{fno_mu_std_forward.6} parent=31 // pred_region
        %s197 = smul.u32 2, %s19
        %p198 = scmp.lt.s32.totalorder %s18, 1
        %s199 = scalar_select %p198, %s18, 1
        %p200 = scmp.lt.s32.totalorder %s197, 1
        %s201 = scalar_select %p200, %s197, 1
        %s202 = smul.addr %s199, 2
        %s203 = sadd.s32 %s201, %s202
        %s204 = smul.addr %s203, 8
        %s205 = scalar_lea.vmem %s0, %s204
        %s206 = smul.u32 2, %s19
      $region36: #{fno_mu_std_forward.6} parent=31 // pred_fallthru
        _
    $region32: #{fno_mu_std_forward.6} parent=5 // pred_fallthru
      _
    %p207 = scmp.le.s32.totalorder 1, %s11
    %p208 = scmp.lt.s32.totalorder %s11, 3
    %p209 = pnand %p207, %p208
    %p210 = pneg %p209
    // Predicated region
    $region37: #{fno_mu_std_forward.6} parent=5 // pred_check
      _
    $region38: #{fno_mu_std_forward.6} parent=5 // pred_check_branch
      %212 = sbr.rel (%p209) target = $region40
    $region39: #{fno_mu_std_forward.6} parent=5 // pred_region
      %s213 = ssub.s32 %s11, 1
      %s214 = smul.u32 2, %s21
      %p215 = scmp.lt.s32.totalorder %s20, 1
      %s216 = scalar_select %p215, %s20, 1
      %p217 = scmp.lt.s32.totalorder %s214, 1
      %s218 = scalar_select %p217, %s214, 1
      %s219 = smul.addr %s216, 2
      %s220 = sadd.s32 %s218, %s219
      %s221 = smul.addr %s220, 8
      %s222 = scalar_lea.vmem %s0, %s221
      %p223 = pneg %p51
      %p224 = pneg %p48
      %p225 = pneg %p72
      %p226 = pneg %p69
      %p227 = pneg %p93
      %p228 = pneg %p90
      %p229 = pneg %p114
      %p230 = pneg %p111
      %p231 = pneg %p135
      %p232 = pneg %p132
      %p233 = pneg %p163
      %p234 = pneg %p160
      %s235 = smul.u32 2, %s21
      %p236 = scmp.lt.s32.totalorder %s20, 1
      %s237 = scalar_select %p236, %s20, 1
      %p238 = scmp.lt.s32.totalorder %s235, 1
      %s239 = scalar_select %p238, %s235, 1
      %s240 = smul.addr %s237, 8
      %s241 = sadd.s32 %s239, %s240
      %s242 = smul.addr %s241, 8
      %s243 = scalar_lea.vmem %s5, %s242
      %s244 = smul.u32 2, %s21
      %p245 = scmp.lt.s32.totalorder %s20, 1
      %s246 = scalar_select %p245, %s20, 1
      %p247 = scmp.lt.s32.totalorder %s244, 1
      %s248 = scalar_select %p247, %s244, 1
      %s249 = smul.addr %s246, 2
      %s250 = sadd.s32 %s248, %s249
      %s251 = smul.addr %s250, 8
      %s252 = scalar_lea.vmem %s0, %s251
      %s253 = smul.u32 2, %s21
      %s254 = smul.u32 2, %s21
      %p255 = scmp.lt.s32.totalorder %s20, 1
      %s256 = scalar_select %p255, %s20, 1
      %p257 = scmp.lt.s32.totalorder %s254, 1
      %s258 = scalar_select %p257, %s254, 1
      %s259 = smul.addr %s256, 8
      %s260 = sadd.s32 %s258, %s259
      %s261 = smul.addr %s260, 8
      %s262 = scalar_lea.vmem %s5, %s261
      %s263 = smul.u32 2, %s21
      %v265 = vld [vmem:[%s252] sm:$0x3f]
      %v266 = vld [vmem:[%s252 + $0x8] sm:$0x3f]
      %v267 = vpack.c.bf16 %v265, %v265
      %v268 = vpack.c.bf16 %v266, %v266
      %v269 = vld [vmem:[%s1] sm:$0xf]
      %v270 = vld [vmem:[%s1 + $0x4] sm:$0xf]
      %v271 = vld [vmem:[%s2] sm:$0xff]
      %v272 = vld [vmem:[%s2 + $0x8] sm:$0xff]
      %274 = vset.pattern.permute.xlu0 0
      %275 = vperm.xlu0 %274, %v271
      %v276 = vpop.permute.xlu0 %275
      %279 = vset.pattern.permute.xlu0 0
      %280 = vperm.xlu0 %279, %v272
      %v281 = vpop.permute.xlu0 %280
      %v285 = vunpack.c.l.b16 %v269
      %v286 = vunpack.c.l.b16 %v270
      %v287 = vpack.c.b16 %v286, %v285
      %vm288 = vcmask 48128
      %v290 = vsel %vm288, %v287, 0
      %vm292 = vcmask 1042432
      %v294 = vsel %vm292, %v267, 0
      %v297 = vsel %vm292, %v268, 0
      %299 = vmatprep.subr.bf16.mxu0 0
      %300 = vmatpush1.bf16.msra.mxu0 0
      %301 = vmatprep.subr.bf16.mxu0 0
      %302 = vmatpush1.bf16.msra.mxu0 0
      %303 = vmatprep.subr.bf16.mxu0 0
      %304 = vmatpush1.bf16.msra.mxu0 0
      %305 = vmatprep.subr.bf16.mxu0 0
      %306 = vmatpush1.bf16.msra.mxu0 0
      %307 = vmatprep.subr.bf16.mxu0 0
      %308 = vmatpush1.bf16.msra.mxu0 0
      %309 = vmatprep.subr.bf16.mxu0 0
      %310 = vmatpush1.bf16.msra.mxu0 0
      %311 = vmatprep.subr.bf16.mxu0 0
      %312 = vmatpush1.bf16.msra.mxu0 0
      %313 = vmatprep.subr.bf16.mxu0 %v297
      %314 = vmatpush1.bf16.msra.mxu0 %v294
      %315 = vmatprep.subr.bf16.mxu0 0
      %316 = vmatpush2.bf16.msra.mxu0 0
      %317 = vmatprep.subr.bf16.mxu0 0
      %318 = vmatpush2.bf16.msra.mxu0 0
      %319 = vmatprep.subr.bf16.mxu0 0
      %320 = vmatpush2.bf16.msra.mxu0 0
      %321 = vmatprep.subr.bf16.mxu0 0
      %322 = vmatpush2.bf16.msra.mxu0 0
      %323 = vmatprep.subr.bf16.mxu0 0
      %324 = vmatpush2.bf16.msra.mxu0 0
      %325 = vmatprep.subr.bf16.mxu0 0
      %326 = vmatpush2.bf16.msra.mxu0 0
      %327 = vmatprep.subr.bf16.mxu0 0
      %328 = vmatpush2.bf16.msra.mxu0 0
      %329 = vmatprep.subr.bf16.mxu0 0
      %330 = vmatpush2.bf16.msra.mxu0 0
      %331 = vmatprep.mubr.bf16.mxu0 0
      %332 = vmatmul.mubr.bf16.gmra.mxu0 %v290
      %v333 = vpop.f32.mrf.mxu0
      %v334 = vadd.f32 %v276, %v333
      %v335 = vpop.f32.mrf.mxu0
      %v336 = vadd.f32 %v276, %v335
      %v337 = vpop.f32.mrf.mxu0
      %v338 = vadd.f32 %v281, %v337
      %v339 = vpop.f32.mrf.mxu0
      %v340 = vadd.f32 %v281, %v339
      %341 = vdwg.mxu0
      %v342 = vxor.u32 %v334, 2147483648
      %v343 = vxor.u32 %v336, 2147483648
      %v344 = vxor.u32 %v338, 2147483648
      %v345 = vxor.u32 %v340, 2147483648
      %v346 = vmul.f32 %v342, 1.442695
      %v347 = vpow.pop %v346
      %v348 = vmul.f32 %v343, 1.442695
      %v349 = vpow.pop %v348
      %v350 = vmul.f32 %v344, 1.442695
      %v351 = vpow.pop %v350
      %v352 = vmul.f32 %v345, 1.442695
      %v353 = vpow.pop %v352
      %v354 = vadd.f32 %v347, 1.0
      %v355 = vadd.f32 %v349, 1.0
      %v356 = vadd.f32 %v351, 1.0
      %v357 = vadd.f32 %v353, 1.0
      %v358 = vrcp.pop %v354
      %v359 = vmul.f32 1.0, %v358
      %v360 = vrcp.pop %v355
      %v361 = vmul.f32 1.0, %v360
      %v362 = vrcp.pop %v356
      %v363 = vmul.f32 1.0, %v362
      %v364 = vrcp.pop %v357
      %v365 = vmul.f32 1.0, %v364
      %v366 = vmul.f32 %v334, %v359
      %v367 = vmul.f32 %v336, %v361
      %v368 = vmul.f32 %v338, %v363
      %v369 = vmul.f32 %v340, %v365
      %v370 = vld [vmem:[%s3] sm:$0xf]
      %v371 = vld [vmem:[%s3 + $0x4] sm:$0xf]
      %v372 = vld [vmem:[%s3 + $0x8] sm:$0xf]
      %v373 = vld [vmem:[%s3 + $0xc] sm:$0xf]
      %v374 = vpack.c.bf16 %v368, %v366
      %v375 = vpack.c.bf16 %v369, %v367
      %v376 = vld [vmem:[%s4] sm:$0xff]
      %v377 = vld [vmem:[%s4 + $0x8] sm:$0xff]
      %v378 = vld [vmem:[%s4 + $0x10] sm:$0xff]
      %v379 = vld [vmem:[%s4 + $0x18] sm:$0xff]
      %381 = vset.pattern.permute.xlu0 0
      %382 = vperm.xlu0 %381, %v376
      %v383 = vpop.permute.xlu0 %382
      %386 = vset.pattern.permute.xlu0 0
      %387 = vperm.xlu0 %386, %v377
      %v388 = vpop.permute.xlu0 %387
      %391 = vset.pattern.permute.xlu0 0
      %392 = vperm.xlu0 %391, %v378
      %v393 = vpop.permute.xlu0 %392
      %396 = vset.pattern.permute.xlu0 0
      %397 = vperm.xlu0 %396, %v379
      %v398 = vpop.permute.xlu0 %397
      %v404 = vunpack.c.l.b16 %v370
      %v405 = vunpack.c.l.b16 %v371
      %v406 = vunpack.c.l.b16 %v372
      %v407 = vunpack.c.l.b16 %v373
      %v408 = vpack.c.b16 %v405, %v404
      %v409 = vpack.c.b16 %v407, %v406
      %vm410 = vcmask 130048
      %v412 = vsel %vm410, %v408, 0
      %v415 = vsel %vm410, %v409, 0
      %417 = vmatprep.subr.bf16.mxu0 0
      %418 = vmatpush1.bf16.msra.mxu0 0
      %419 = vmatprep.subr.bf16.mxu0 0
      %420 = vmatpush1.bf16.msra.mxu0 0
      %421 = vmatprep.subr.bf16.mxu0 0
      %422 = vmatpush1.bf16.msra.mxu0 0
      %423 = vmatprep.subr.bf16.mxu0 0
      %424 = vmatpush1.bf16.msra.mxu0 0
      %425 = vmatprep.subr.bf16.mxu0 0
      %426 = vmatpush1.bf16.msra.mxu0 0
      %427 = vmatprep.subr.bf16.mxu0 0
      %428 = vmatpush1.bf16.msra.mxu0 0
      %429 = vmatprep.subr.bf16.mxu0 0
      %430 = vmatpush1.bf16.msra.mxu0 0
      %431 = vmatprep.subr.bf16.mxu0 %v375
      %432 = vmatpush1.bf16.msra.mxu0 %v374
      %433 = vmatprep.subr.bf16.mxu0 0
      %434 = vmatpush2.bf16.msra.mxu0 0
      %435 = vmatprep.subr.bf16.mxu0 0
      %436 = vmatpush2.bf16.msra.mxu0 0
      %437 = vmatprep.subr.bf16.mxu0 0
      %438 = vmatpush2.bf16.msra.mxu0 0
      %439 = vmatprep.subr.bf16.mxu0 0
      %440 = vmatpush2.bf16.msra.mxu0 0
      %441 = vmatprep.subr.bf16.mxu0 0
      %442 = vmatpush2.bf16.msra.mxu0 0
      %443 = vmatprep.subr.bf16.mxu0 0
      %444 = vmatpush2.bf16.msra.mxu0 0
      %445 = vmatprep.subr.bf16.mxu0 0
      %446 = vmatpush2.bf16.msra.mxu0 0
      %447 = vmatprep.subr.bf16.mxu0 0
      %448 = vmatpush2.bf16.msra.mxu0 0
      %449 = vmatprep.mubr.bf16.mxu0 0
      %450 = vmatmul.mubr.bf16.gmra.mxu0 %v412
      %v451 = vpop.f32.mrf.mxu0
      %v452 = vadd.f32 %v383, %v451
      %v453 = vpop.f32.mrf.mxu0
      %v454 = vadd.f32 %v383, %v453
      %v455 = vpop.f32.mrf.mxu0
      %v456 = vadd.f32 %v388, %v455
      %v457 = vpop.f32.mrf.mxu0
      %v458 = vadd.f32 %v388, %v457
      %459 = vmatprep.mubr.bf16.mxu0 0
      %460 = vmatmul.mubr.bf16.gmra.mxu0 %v415
      %v461 = vpop.f32.mrf.mxu0
      %v462 = vadd.f32 %v393, %v461
      %v463 = vpop.f32.mrf.mxu0
      %v464 = vadd.f32 %v393, %v463
      %v465 = vpop.f32.mrf.mxu0
      %v466 = vadd.f32 %v398, %v465
      %v467 = vpop.f32.mrf.mxu0
      %v468 = vadd.f32 %v398, %v467
      %469 = vdwg.mxu0
      %470 = vst [vmem:[%s262] sm:$0xff] %v452
      %471 = vst [vmem:[%s262 + $0x8] sm:$0xff] %v454
      %472 = vst [vmem:[%s262 + $0x10] sm:$0xff] %v456
      %473 = vst [vmem:[%s262 + $0x18] sm:$0xff] %v458
      %474 = vst [vmem:[%s262 + $0x20] sm:$0xff] %v462
      %475 = vst [vmem:[%s262 + $0x28] sm:$0xff] %v464
      %476 = vst [vmem:[%s262 + $0x30] sm:$0xff] %v466
      %477 = vst [vmem:[%s262 + $0x38] sm:$0xff] %v468
      %s478 = smul.u32 2, %s21
      %p479 = scmp.lt.s32.totalorder %s20, 1
      %s480 = scalar_select %p479, %s20, 1
      %p481 = scmp.lt.s32.totalorder %s478, 1
      %s482 = scalar_select %p481, %s478, 1
      %s483 = smul.addr %s480, 8
      %s484 = sadd.s32 %s482, %s483
      %s485 = smul.addr %s484, 8
      %s486 = scalar_lea.vmem %s5, %s485
      // Predicated region
      $region41: #{fno_mu_std_forward.6} parent=39 // pred_check
        %p487 = pneg %p160
      $region42: #{fno_mu_std_forward.6} parent=39 // pred_check_branch
        %489 = sbr.rel (%p487) target = $region44
      $region43: #{fno_mu_std_forward.6} parent=39 // pred_region
        %s490 = smul.u32 2, %s21
      $region44: #{fno_mu_std_forward.6} parent=39 // pred_fallthru
        _
    $region40: #{fno_mu_std_forward.6} parent=5 // pred_fallthru
      _
    %p491 = scmp.le.s32.totalorder 2, %s11
    // Predicated region
    $region45: #{fno_mu_std_forward.6} parent=5 // pred_check
      %p492 = pneg %p491
    $region46: #{fno_mu_std_forward.6} parent=5 // pred_check_branch
      %494 = sbr.rel (%p492) target = $region48
    $region47: #{fno_mu_std_forward.6} parent=5 // pred_region
      %s495 = ssub.s32 %s11, 2
      // Predicated region
      $region49: #{fno_mu_std_forward.6} parent=47 // pred_check
        %p496 = pneg %p166
      $region50: #{fno_mu_std_forward.6} parent=47 // pred_check_branch
        %498 = sbr.rel (%p496) target = $region52
      $region51: #{fno_mu_std_forward.6} parent=47 // pred_region
        %s499 = smul.u32 2, %s23
        %p500 = scmp.lt.s32.totalorder %s22, 1
        %s501 = scalar_select %p500, %s22, 1
        %p502 = scmp.lt.s32.totalorder %s499, 1
        %s503 = scalar_select %p502, %s499, 1
        %s504 = smul.addr %s501, 8
        %s505 = sadd.s32 %s503, %s504
        %s506 = smul.addr %s505, 8
        %s507 = scalar_lea.vmem %s5, %s506
      $region52: #{fno_mu_std_forward.6} parent=47 // pred_fallthru
        _
    $region48: #{fno_mu_std_forward.6} parent=5 // pred_fallthru
      _
  $region6: #{fno_mu_std_forward.6} parent=0 // loop_footer
    %s15 = sadd.s32 1, %s11
  $region7: #{fno_mu_std_forward.6} parent=0 // loop_footer_branch
    %10 = sbr.rel target = $region3
  $region8: #{fno_mu_std_forward.6} parent=0 // loop_exit
    _

// kernel: fno_mu_std_forward.7
$region0: #{fno_mu_std_forward.7}
  #allocation0 [shape = 'u32[]', space=smem, size = 0x4, offset = 0x4, fixed_abs, tag = 'smem constant byte address 0x4 - core index']
  #allocation1 [shape = 'u32[144,128]{1,0:T(1,128)}', space=vmem, size = 0x12000, scoped, tag = 'internal scratch']
  %s0 = inlined_call_operand.vmem [shape: f32[16,2,128], index: 0, kind: input, shape index: {}]
  %s1 = inlined_call_operand.vmem [shape: bf16[16,128,128], index: 1, kind: input, shape index: {}]
  %s2 = inlined_call_operand.vmem [shape: f32[16,2,128], index: 2, kind: output, shape index: {}]
  %s3 = sld [smem:[#allocation0]]
  $region18: #{fno_mu_std_forward.7} parent=0
    _
  %s5 = ssub.s32 1, %s3
  %s6 = scalar_select 0, %s5, %s3
  // Predicated region
  $region2: #{fno_mu_std_forward.7} parent=0 // pred_check
    _
  $region3: #{fno_mu_std_forward.7} parent=0 // pred_check_branch
    %8 = sbr.rel (0) target = $region5
  $region4: #{fno_mu_std_forward.7} parent=0 // pred_region
    _
  $region5: #{fno_mu_std_forward.7} parent=0 // pred_fallthru
    _
  // Predicated region
  $region6: #{fno_mu_std_forward.7} parent=0 // pred_check
    _
  $region7: #{fno_mu_std_forward.7} parent=0 // pred_check_branch
    %10 = sbr.rel (0) target = $region9
  $region8: #{fno_mu_std_forward.7} parent=0 // pred_region
    _
  $region9: #{fno_mu_std_forward.7} parent=0 // pred_fallthru
    _
  %v12 = vld [vmem:[%s0] sm:$0x3]
  %v13 = vld [vmem:[%s0 + $0x2] sm:$0x3]
  %v14 = vld [vmem:[%s0 + $0x4] sm:$0x3]
  %v15 = vld [vmem:[%s0 + $0x6] sm:$0x3]
  %v16 = vld [vmem:[%s0 + $0x8] sm:$0x3]
  %v17 = vld [vmem:[%s0 + $0xa] sm:$0x3]
  %v18 = vld [vmem:[%s0 + $0xc] sm:$0x3]
  %v19 = vld [vmem:[%s0 + $0xe] sm:$0x3]
  %v20 = vld [vmem:[%s0 + $0x10] sm:$0x3]
  %v21 = vld [vmem:[%s0 + $0x12] sm:$0x3]
  %v22 = vld [vmem:[%s0 + $0x14] sm:$0x3]
  %v23 = vld [vmem:[%s0 + $0x16] sm:$0x3]
  %v24 = vld [vmem:[%s0 + $0x18] sm:$0x3]
  %v25 = vld [vmem:[%s0 + $0x1a] sm:$0x3]
  %v26 = vld [vmem:[%s0 + $0x1c] sm:$0x3]
  %v27 = vld [vmem:[%s0 + $0x1e] sm:$0x3]
  %v28 = vpack.c.bf16 %v12, %v12
  %v29 = vpack.c.bf16 %v13, %v13
  %v30 = vpack.c.bf16 %v14, %v14
  %v31 = vpack.c.bf16 %v15, %v15
  %v32 = vpack.c.bf16 %v16, %v16
  %v33 = vpack.c.bf16 %v17, %v17
  %v34 = vpack.c.bf16 %v18, %v18
  %v35 = vpack.c.bf16 %v19, %v19
  %v36 = vpack.c.bf16 %v20, %v20
  %v37 = vpack.c.bf16 %v21, %v21
  %v38 = vpack.c.bf16 %v22, %v22
  %v39 = vpack.c.bf16 %v23, %v23
  %v40 = vpack.c.bf16 %v24, %v24
  %v41 = vpack.c.bf16 %v25, %v25
  %v42 = vpack.c.bf16 %v26, %v26
  %v43 = vpack.c.bf16 %v27, %v27
  %v44 = vld [vmem:[%s1] sm:$0xf]
  %v45 = vld [vmem:[%s1 + $0x4] sm:$0xf]
  %v46 = vld [vmem:[%s1 + $0x8] sm:$0xf]
  %v47 = vld [vmem:[%s1 + $0xc] sm:$0xf]
  %v48 = vld [vmem:[%s1 + $0x10] sm:$0xf]
  %v49 = vld [vmem:[%s1 + $0x14] sm:$0xf]
  %v50 = vld [vmem:[%s1 + $0x18] sm:$0xf]
  %v51 = vld [vmem:[%s1 + $0x1c] sm:$0xf]
  %v52 = vld [vmem:[%s1 + $0x20] sm:$0xf]
  %v53 = vld [vmem:[%s1 + $0x24] sm:$0xf]
  %v54 = vld [vmem:[%s1 + $0x28] sm:$0xf]
  %v55 = vld [vmem:[%s1 + $0x2c] sm:$0xf]
  %v56 = vld [vmem:[%s1 + $0x30] sm:$0xf]
  %v57 = vld [vmem:[%s1 + $0x34] sm:$0xf]
  %v58 = vld [vmem:[%s1 + $0x38] sm:$0xf]
  %v59 = vld [vmem:[%s1 + $0x3c] sm:$0xf]
  %v60 = vld [vmem:[%s1 + $0x40] sm:$0xf]
  %v61 = vld [vmem:[%s1 + $0x44] sm:$0xf]
  %v62 = vld [vmem:[%s1 + $0x48] sm:$0xf]
  %v63 = vld [vmem:[%s1 + $0x4c] sm:$0xf]
  %v64 = vld [vmem:[%s1 + $0x50] sm:$0xf]
  %v65 = vld [vmem:[%s1 + $0x54] sm:$0xf]
  %v66 = vld [vmem:[%s1 + $0x58] sm:$0xf]
  %v67 = vld [vmem:[%s1 + $0x5c] sm:$0xf]
  %v68 = vld [vmem:[%s1 + $0x60] sm:$0xf]
  %v69 = vld [vmem:[%s1 + $0x64] sm:$0xf]
  %v70 = vld [vmem:[%s1 + $0x68] sm:$0xf]
  %v71 = vld [vmem:[%s1 + $0x6c] sm:$0xf]
  %v72 = vld [vmem:[%s1 + $0x70] sm:$0xf]
  %v73 = vld [vmem:[%s1 + $0x74] sm:$0xf]
  %v74 = vld [vmem:[%s1 + $0x78] sm:$0xf]
  %v75 = vld [vmem:[%s1 + $0x7c] sm:$0xf]
  %v76 = vld [vmem:[%s1 + $0x80] sm:$0xf]
  %v77 = vld [vmem:[%s1 + $0x84] sm:$0xf]
  %v78 = vld [vmem:[%s1 + $0x88] sm:$0xf]
  %v79 = vld [vmem:[%s1 + $0x8c] sm:$0xf]
  %v80 = vld [vmem:[%s1 + $0x90] sm:$0xf]
  %v81 = vld [vmem:[%s1 + $0x94] sm:$0xf]
  %v82 = vld [vmem:[%s1 + $0x98] sm:$0xf]
  %v83 = vld [vmem:[%s1 + $0x9c] sm:$0xf]
  %v84 = vld [vmem:[%s1 + $0xa0] sm:$0xf]
  %v85 = vld [vmem:[%s1 + $0xa4] sm:$0xf]
  %v86 = vld [vmem:[%s1 + $0xa8] sm:$0xf]
  %v87 = vld [vmem:[%s1 + $0xac] sm:$0xf]
  %v88 = vld [vmem:[%s1 + $0xb0] sm:$0xf]
  %v89 = vld [vmem:[%s1 + $0xb4] sm:$0xf]
  %v90 = vld [vmem:[%s1 + $0xb8] sm:$0xf]
  %v91 = vld [vmem:[%s1 + $0xbc] sm:$0xf]
  %v92 = vld [vmem:[%s1 + $0xc0] sm:$0xf]
  %v93 = vld [vmem:[%s1 + $0xc4] sm:$0xf]
  %v94 = vld [vmem:[%s1 + $0xc8] sm:$0xf]
  %v95 = vld [vmem:[%s1 + $0xcc] sm:$0xf]
  %v96 = vld [vmem:[%s1 + $0xd0] sm:$0xf]
  %v97 = vld [vmem:[%s1 + $0xd4] sm:$0xf]
  %v98 = vld [vmem:[%s1 + $0xd8] sm:$0xf]
  %v99 = vld [vmem:[%s1 + $0xdc] sm:$0xf]
  %v100 = vld [vmem:[%s1 + $0xe0] sm:$0xf]
  %v101 = vld [vmem:[%s1 + $0xe4] sm:$0xf]
  %v102 = vld [vmem:[%s1 + $0xe8] sm:$0xf]
  %v103 = vld [vmem:[%s1 + $0xec] sm:$0xf]
  %v104 = vld [vmem:[%s1 + $0xf0] sm:$0xf]
  %v105 = vld [vmem:[%s1 + $0xf4] sm:$0xf]
  %v106 = vld [vmem:[%s1 + $0xf8] sm:$0xf]
  %v107 = vld [vmem:[%s1 + $0xfc] sm:$0xf]
  %v108 = vld [vmem:[%s1 + $0x100] sm:$0xf]
  %v109 = vld [vmem:[%s1 + $0x104] sm:$0xf]
  %v110 = vld [vmem:[%s1 + $0x108] sm:$0xf]
  %v111 = vld [vmem:[%s1 + $0x10c] sm:$0xf]
  %v112 = vld [vmem:[%s1 + $0x110] sm:$0xf]
  %v113 = vld [vmem:[%s1 + $0x114] sm:$0xf]
  %v114 = vld [vmem:[%s1 + $0x118] sm:$0xf]
  %v115 = vld [vmem:[%s1 + $0x11c] sm:$0xf]
  %v116 = vld [vmem:[%s1 + $0x120] sm:$0xf]
  %v117 = vld [vmem:[%s1 + $0x124] sm:$0xf]
  %v118 = vld [vmem:[%s1 + $0x128] sm:$0xf]
  %v119 = vld [vmem:[%s1 + $0x12c] sm:$0xf]
  %v120 = vld [vmem:[%s1 + $0x130] sm:$0xf]
  %v121 = vld [vmem:[%s1 + $0x134] sm:$0xf]
  %v122 = vld [vmem:[%s1 + $0x138] sm:$0xf]
  %v123 = vld [vmem:[%s1 + $0x13c] sm:$0xf]
  %v124 = vld [vmem:[%s1 + $0x140] sm:$0xf]
  %v125 = vld [vmem:[%s1 + $0x144] sm:$0xf]
  %v126 = vld [vmem:[%s1 + $0x148] sm:$0xf]
  %v127 = vld [vmem:[%s1 + $0x14c] sm:$0xf]
  %v128 = vld [vmem:[%s1 + $0x150] sm:$0xf]
  %v129 = vld [vmem:[%s1 + $0x154] sm:$0xf]
  %v130 = vld [vmem:[%s1 + $0x158] sm:$0xf]
  %v131 = vld [vmem:[%s1 + $0x15c] sm:$0xf]
  %v132 = vld [vmem:[%s1 + $0x160] sm:$0xf]
  %v133 = vld [vmem:[%s1 + $0x164] sm:$0xf]
  %v134 = vld [vmem:[%s1 + $0x168] sm:$0xf]
  %v135 = vld [vmem:[%s1 + $0x16c] sm:$0xf]
  %v136 = vld [vmem:[%s1 + $0x170] sm:$0xf]
  %v137 = vld [vmem:[%s1 + $0x174] sm:$0xf]
  %v138 = vld [vmem:[%s1 + $0x178] sm:$0xf]
  %v139 = vld [vmem:[%s1 + $0x17c] sm:$0xf]
  %v140 = vld [vmem:[%s1 + $0x180] sm:$0xf]
  %v141 = vld [vmem:[%s1 + $0x184] sm:$0xf]
  %v142 = vld [vmem:[%s1 + $0x188] sm:$0xf]
  %v143 = vld [vmem:[%s1 + $0x18c] sm:$0xf]
  %v144 = vld [vmem:[%s1 + $0x190] sm:$0xf]
  %v145 = vld [vmem:[%s1 + $0x194] sm:$0xf]
  %v146 = vld [vmem:[%s1 + $0x198] sm:$0xf]
  %v147 = vld [vmem:[%s1 + $0x19c] sm:$0xf]
  %v148 = vld [vmem:[%s1 + $0x1a0] sm:$0xf]
  %v149 = vld [vmem:[%s1 + $0x1a4] sm:$0xf]
  %v150 = vld [vmem:[%s1 + $0x1a8] sm:$0xf]
  %v151 = vld [vmem:[%s1 + $0x1ac] sm:$0xf]
  %v152 = vld [vmem:[%s1 + $0x1b0] sm:$0xf]
  %v153 = vld [vmem:[%s1 + $0x1b4] sm:$0xf]
  %v154 = vld [vmem:[%s1 + $0x1b8] sm:$0xf]
  %v155 = vld [vmem:[%s1 + $0x1bc] sm:$0xf]
  %v156 = vld [vmem:[%s1 + $0x1c0] sm:$0xf]
  %v157 = vld [vmem:[%s1 + $0x1c4] sm:$0xf]
  %v158 = vld [vmem:[%s1 + $0x1c8] sm:$0xf]
  %v159 = vld [vmem:[%s1 + $0x1cc] sm:$0xf]
  %v160 = vld [vmem:[%s1 + $0x1d0] sm:$0xf]
  %v161 = vld [vmem:[%s1 + $0x1d4] sm:$0xf]
  %v162 = vld [vmem:[%s1 + $0x1d8] sm:$0xf]
  %v163 = vld [vmem:[%s1 + $0x1dc] sm:$0xf]
  %v164 = vld [vmem:[%s1 + $0x1e0] sm:$0xf]
  %v165 = vld [vmem:[%s1 + $0x1e4] sm:$0xf]
  %v166 = vld [vmem:[%s1 + $0x1e8] sm:$0xf]
  %v167 = vld [vmem:[%s1 + $0x1ec] sm:$0xf]
  %v168 = vld [vmem:[%s1 + $0x1f0] sm:$0xf]
  %v169 = vld [vmem:[%s1 + $0x1f4] sm:$0xf]
  %v170 = vld [vmem:[%s1 + $0x1f8] sm:$0xf]
  %v171 = vld [vmem:[%s1 + $0x1fc] sm:$0xf]
  %v172 = vld [vmem:[%s1 + $0x200] sm:$0xf]
  %v173 = vld [vmem:[%s1 + $0x204] sm:$0xf]
  %v174 = vld [vmem:[%s1 + $0x208] sm:$0xf]
  %v175 = vld [vmem:[%s1 + $0x20c] sm:$0xf]
  %v176 = vld [vmem:[%s1 + $0x210] sm:$0xf]
  %v177 = vld [vmem:[%s1 + $0x214] sm:$0xf]
  %v178 = vld [vmem:[%s1 + $0x218] sm:$0xf]
  %v179 = vld [vmem:[%s1 + $0x21c] sm:$0xf]
  %v180 = vld [vmem:[%s1 + $0x220] sm:$0xf]
  %v181 = vld [vmem:[%s1 + $0x224] sm:$0xf]
  %v182 = vld [vmem:[%s1 + $0x228] sm:$0xf]
  %v183 = vld [vmem:[%s1 + $0x22c] sm:$0xf]
  %v184 = vld [vmem:[%s1 + $0x230] sm:$0xf]
  %v185 = vld [vmem:[%s1 + $0x234] sm:$0xf]
  %v186 = vld [vmem:[%s1 + $0x238] sm:$0xf]
  %v187 = vld [vmem:[%s1 + $0x23c] sm:$0xf]
  %v188 = vld [vmem:[%s1 + $0x240] sm:$0xf]
  %v189 = vld [vmem:[%s1 + $0x244] sm:$0xf]
  %v190 = vld [vmem:[%s1 + $0x248] sm:$0xf]
  %v191 = vld [vmem:[%s1 + $0x24c] sm:$0xf]
  %v192 = vld [vmem:[%s1 + $0x250] sm:$0xf]
  %v193 = vld [vmem:[%s1 + $0x254] sm:$0xf]
  %v194 = vld [vmem:[%s1 + $0x258] sm:$0xf]
  %v195 = vld [vmem:[%s1 + $0x25c] sm:$0xf]
  %v196 = vld [vmem:[%s1 + $0x260] sm:$0xf]
  %v197 = vld [vmem:[%s1 + $0x264] sm:$0xf]
  %v198 = vld [vmem:[%s1 + $0x268] sm:$0xf]
  %v199 = vld [vmem:[%s1 + $0x26c] sm:$0xf]
  %v200 = vld [vmem:[%s1 + $0x270] sm:$0xf]
  %v201 = vld [vmem:[%s1 + $0x274] sm:$0xf]
  %v202 = vld [vmem:[%s1 + $0x278] sm:$0xf]
  %v203 = vld [vmem:[%s1 + $0x27c] sm:$0xf]
  %v204 = vld [vmem:[%s1 + $0x280] sm:$0xf]
  %v205 = vld [vmem:[%s1 + $0x284] sm:$0xf]
  %v206 = vld [vmem:[%s1 + $0x288] sm:$0xf]
  %v207 = vld [vmem:[%s1 + $0x28c] sm:$0xf]
  %v208 = vld [vmem:[%s1 + $0x290] sm:$0xf]
  %v209 = vld [vmem:[%s1 + $0x294] sm:$0xf]
  %v210 = vld [vmem:[%s1 + $0x298] sm:$0xf]
  %v211 = vld [vmem:[%s1 + $0x29c] sm:$0xf]
  %v212 = vld [vmem:[%s1 + $0x2a0] sm:$0xf]
  %v213 = vld [vmem:[%s1 + $0x2a4] sm:$0xf]
  %v214 = vld [vmem:[%s1 + $0x2a8] sm:$0xf]
  %v215 = vld [vmem:[%s1 + $0x2ac] sm:$0xf]
  %v216 = vld [vmem:[%s1 + $0x2b0] sm:$0xf]
  %v217 = vld [vmem:[%s1 + $0x2b4] sm:$0xf]
  %v218 = vld [vmem:[%s1 + $0x2b8] sm:$0xf]
  %v219 = vld [vmem:[%s1 + $0x2bc] sm:$0xf]
  %v220 = vld [vmem:[%s1 + $0x2c0] sm:$0xf]
  %v221 = vld [vmem:[%s1 + $0x2c4] sm:$0xf]
  %v222 = vld [vmem:[%s1 + $0x2c8] sm:$0xf]
  %v223 = vld [vmem:[%s1 + $0x2cc] sm:$0xf]
  %v224 = vld [vmem:[%s1 + $0x2d0] sm:$0xf]
  %v225 = vld [vmem:[%s1 + $0x2d4] sm:$0xf]
  %v226 = vld [vmem:[%s1 + $0x2d8] sm:$0xf]
  %v227 = vld [vmem:[%s1 + $0x2dc] sm:$0xf]
  %v228 = vld [vmem:[%s1 + $0x2e0] sm:$0xf]
  %v229 = vld [vmem:[%s1 + $0x2e4] sm:$0xf]
  %v230 = vld [vmem:[%s1 + $0x2e8] sm:$0xf]
  %v231 = vld [vmem:[%s1 + $0x2ec] sm:$0xf]
  %v232 = vld [vmem:[%s1 + $0x2f0] sm:$0xf]
  %v233 = vld [vmem:[%s1 + $0x2f4] sm:$0xf]
  %v234 = vld [vmem:[%s1 + $0x2f8] sm:$0xf]
  %v235 = vld [vmem:[%s1 + $0x2fc] sm:$0xf]
  %v236 = vld [vmem:[%s1 + $0x300] sm:$0xf]
  %v237 = vld [vmem:[%s1 + $0x304] sm:$0xf]
  %v238 = vld [vmem:[%s1 + $0x308] sm:$0xf]
  %v239 = vld [vmem:[%s1 + $0x30c] sm:$0xf]
  %v240 = vld [vmem:[%s1 + $0x310] sm:$0xf]
  %v241 = vld [vmem:[%s1 + $0x314] sm:$0xf]
  %v242 = vld [vmem:[%s1 + $0x318] sm:$0xf]
  %v243 = vld [vmem:[%s1 + $0x31c] sm:$0xf]
  %v244 = vld [vmem:[%s1 + $0x320] sm:$0xf]
  %v245 = vld [vmem:[%s1 + $0x324] sm:$0xf]
  %v246 = vld [vmem:[%s1 + $0x328] sm:$0xf]
  %v247 = vld [vmem:[%s1 + $0x32c] sm:$0xf]
  %v248 = vld [vmem:[%s1 + $0x330] sm:$0xf]
  %v249 = vld [vmem:[%s1 + $0x334] sm:$0xf]
  %v250 = vld [vmem:[%s1 + $0x338] sm:$0xf]
  %v251 = vld [vmem:[%s1 + $0x33c] sm:$0xf]
  %v252 = vld [vmem:[%s1 + $0x340] sm:$0xf]
  %v253 = vld [vmem:[%s1 + $0x344] sm:$0xf]
  %v254 = vld [vmem:[%s1 + $0x348] sm:$0xf]
  %v255 = vld [vmem:[%s1 + $0x34c] sm:$0xf]
  %v256 = vld [vmem:[%s1 + $0x350] sm:$0xf]
  %v257 = vld [vmem:[%s1 + $0x354] sm:$0xf]
  %v258 = vld [vmem:[%s1 + $0x358] sm:$0xf]
  %v259 = vld [vmem:[%s1 + $0x35c] sm:$0xf]
  %v260 = vld [vmem:[%s1 + $0x360] sm:$0xf]
  %v261 = vld [vmem:[%s1 + $0x364] sm:$0xf]
  %v262 = vld [vmem:[%s1 + $0x368] sm:$0xf]
  %v263 = vld [vmem:[%s1 + $0x36c] sm:$0xf]
  %v264 = vld [vmem:[%s1 + $0x370] sm:$0xf]
  %v265 = vld [vmem:[%s1 + $0x374] sm:$0xf]
  %v266 = vld [vmem:[%s1 + $0x378] sm:$0xf]
  %v267 = vld [vmem:[%s1 + $0x37c] sm:$0xf]
  %v268 = vld [vmem:[%s1 + $0x380] sm:$0xf]
  %v269 = vld [vmem:[%s1 + $0x384] sm:$0xf]
  %v270 = vld [vmem:[%s1 + $0x388] sm:$0xf]
  %v271 = vld [vmem:[%s1 + $0x38c] sm:$0xf]
  %v272 = vld [vmem:[%s1 + $0x390] sm:$0xf]
  %v273 = vld [vmem:[%s1 + $0x394] sm:$0xf]
  %v274 = vld [vmem:[%s1 + $0x398] sm:$0xf]
  %v275 = vld [vmem:[%s1 + $0x39c] sm:$0xf]
  %v276 = vld [vmem:[%s1 + $0x3a0] sm:$0xf]
  %v277 = vld [vmem:[%s1 + $0x3a4] sm:$0xf]
  %v278 = vld [vmem:[%s1 + $0x3a8] sm:$0xf]
  %v279 = vld [vmem:[%s1 + $0x3ac] sm:$0xf]
  %v280 = vld [vmem:[%s1 + $0x3b0] sm:$0xf]
  %v281 = vld [vmem:[%s1 + $0x3b4] sm:$0xf]
  %v282 = vld [vmem:[%s1 + $0x3b8] sm:$0xf]
  %v283 = vld [vmem:[%s1 + $0x3bc] sm:$0xf]
  %v284 = vld [vmem:[%s1 + $0x3c0] sm:$0xf]
  %v285 = vld [vmem:[%s1 + $0x3c4] sm:$0xf]
  %v286 = vld [vmem:[%s1 + $0x3c8] sm:$0xf]
  %v287 = vld [vmem:[%s1 + $0x3cc] sm:$0xf]
  %v288 = vld [vmem:[%s1 + $0x3d0] sm:$0xf]
  %v289 = vld [vmem:[%s1 + $0x3d4] sm:$0xf]
  %v290 = vld [vmem:[%s1 + $0x3d8] sm:$0xf]
  %v291 = vld [vmem:[%s1 + $0x3dc] sm:$0xf]
  %v292 = vld [vmem:[%s1 + $0x3e0] sm:$0xf]
  %v293 = vld [vmem:[%s1 + $0x3e4] sm:$0xf]
  %v294 = vld [vmem:[%s1 + $0x3e8] sm:$0xf]
  %v295 = vld [vmem:[%s1 + $0x3ec] sm:$0xf]
  %v296 = vld [vmem:[%s1 + $0x3f0] sm:$0xf]
  %v297 = vld [vmem:[%s1 + $0x3f4] sm:$0xf]
  %v298 = vld [vmem:[%s1 + $0x3f8] sm:$0xf]
  %v299 = vld [vmem:[%s1 + $0x3fc] sm:$0xf]
  %v316 = vunpack.c.l.b16 %v44
  %v317 = vunpack.c.l.b16 %v45
  %v318 = vunpack.c.l.b16 %v46
  %v319 = vunpack.c.l.b16 %v47
  %v320 = vunpack.c.l.b16 %v48
  %v321 = vunpack.c.l.b16 %v49
  %v322 = vunpack.c.l.b16 %v50
  %v323 = vunpack.c.l.b16 %v51
  %v324 = vunpack.c.l.b16 %v52
  %v325 = vunpack.c.l.b16 %v53
  %v326 = vunpack.c.l.b16 %v54
  %v327 = vunpack.c.l.b16 %v55
  %v328 = vunpack.c.l.b16 %v56
  %v329 = vunpack.c.l.b16 %v57
  %v330 = vunpack.c.l.b16 %v58
  %v331 = vunpack.c.l.b16 %v59
  %v332 = vpack.c.b16 %v317, %v316
  %v333 = vpack.c.b16 %v319, %v318
  %v334 = vpack.c.b16 %v321, %v320
  %v335 = vpack.c.b16 %v323, %v322
  %v336 = vpack.c.b16 %v325, %v324
  %v337 = vpack.c.b16 %v327, %v326
  %v338 = vpack.c.b16 %v329, %v328
  %v339 = vpack.c.b16 %v331, %v330
  %348 = vmatprep.subr.bf16.mxu0 0
  %349 = vmatpush1.bf16.msra.mxu0 %v339
  %350 = vmatprep.subr.bf16.mxu0 0
  %351 = vmatpush1.bf16.msra.mxu0 %v338
  %352 = vmatprep.subr.bf16.mxu0 0
  %353 = vmatpush1.bf16.msra.mxu0 %v337
  %354 = vmatprep.subr.bf16.mxu0 0
  %355 = vmatpush1.bf16.msra.mxu0 %v336
  %356 = vmatprep.subr.bf16.mxu0 0
  %357 = vmatpush1.bf16.msra.mxu0 %v335
  %358 = vmatprep.subr.bf16.mxu0 0
  %359 = vmatpush1.bf16.msra.mxu0 %v334
  %360 = vmatprep.subr.bf16.mxu0 0
  %361 = vmatpush1.bf16.msra.mxu0 %v333
  %362 = vmatprep.subr.bf16.mxu0 0
  %363 = vmatpush1.bf16.msra.mxu0 %v332
  %364 = vmatprep.subr.bf16.mxu0 0
  %365 = vmatpush2.bf16.msra.mxu0 0
  %366 = vmatprep.subr.bf16.mxu0 0
  %367 = vmatpush2.bf16.msra.mxu0 0
  %368 = vmatprep.subr.bf16.mxu0 0
  %369 = vmatpush2.bf16.msra.mxu0 0
  %370 = vmatprep.subr.bf16.mxu0 0
  %371 = vmatpush2.bf16.msra.mxu0 0
  %372 = vmatprep.subr.bf16.mxu0 0
  %373 = vmatpush2.bf16.msra.mxu0 0
  %374 = vmatprep.subr.bf16.mxu0 0
  %375 = vmatpush2.bf16.msra.mxu0 0
  %376 = vmatprep.subr.bf16.mxu0 0
  %377 = vmatpush2.bf16.msra.mxu0 0
  %378 = vmatprep.subr.bf16.mxu0 0
  %379 = vmatpush2.bf16.msra.mxu0 0
  %380 = vmatprep.mubr.bf16.mxu0 0
  %381 = vmatmul.mubr.bf16.gmra.mxu0 %v28
  %v382 = vpop.f32.mrf.mxu0
  %v383 = vadd.f32 0.0, %v382
  %v384 = vpop.f32.mrf.mxu0
  %v385 = vpop.f32.mrf.mxu0
  %v386 = vpop.f32.mrf.mxu0
  %387 = vdwg.mxu0
  %v404 = vunpack.c.l.b16 %v60
  %v405 = vunpack.c.l.b16 %v61
  %v406 = vunpack.c.l.b16 %v62
  %v407 = vunpack.c.l.b16 %v63
  %v408 = vunpack.c.l.b16 %v64
  %v409 = vunpack.c.l.b16 %v65
  %v410 = vunpack.c.l.b16 %v66
  %v411 = vunpack.c.l.b16 %v67
  %v412 = vunpack.c.l.b16 %v68
  %v413 = vunpack.c.l.b16 %v69
  %v414 = vunpack.c.l.b16 %v70
  %v415 = vunpack.c.l.b16 %v71
  %v416 = vunpack.c.l.b16 %v72
  %v417 = vunpack.c.l.b16 %v73
  %v418 = vunpack.c.l.b16 %v74
  %v419 = vunpack.c.l.b16 %v75
  %v420 = vpack.c.b16 %v405, %v404
  %v421 = vpack.c.b16 %v407, %v406
  %v422 = vpack.c.b16 %v409, %v408
  %v423 = vpack.c.b16 %v411, %v410
  %v424 = vpack.c.b16 %v413, %v412
  %v425 = vpack.c.b16 %v415, %v414
  %v426 = vpack.c.b16 %v417, %v416
  %v427 = vpack.c.b16 %v419, %v418
  %436 = vmatprep.subr.bf16.mxu0 0
  %437 = vmatpush1.bf16.msra.mxu0 %v427
  %438 = vmatprep.subr.bf16.mxu0 0
  %439 = vmatpush1.bf16.msra.mxu0 %v426
  %440 = vmatprep.subr.bf16.mxu0 0
  %441 = vmatpush1.bf16.msra.mxu0 %v425
  %442 = vmatprep.subr.bf16.mxu0 0
  %443 = vmatpush1.bf16.msra.mxu0 %v424
  %444 = vmatprep.subr.bf16.mxu0 0
  %445 = vmatpush1.bf16.msra.mxu0 %v423
  %446 = vmatprep.subr.bf16.mxu0 0
  %447 = vmatpush1.bf16.msra.mxu0 %v422
  %448 = vmatprep.subr.bf16.mxu0 0
  %449 = vmatpush1.bf16.msra.mxu0 %v421
  %450 = vmatprep.subr.bf16.mxu0 0
  %451 = vmatpush1.bf16.msra.mxu0 %v420
  %452 = vmatprep.subr.bf16.mxu0 0
  %453 = vmatpush2.bf16.msra.mxu0 0
  %454 = vmatprep.subr.bf16.mxu0 0
  %455 = vmatpush2.bf16.msra.mxu0 0
  %456 = vmatprep.subr.bf16.mxu0 0
  %457 = vmatpush2.bf16.msra.mxu0 0
  %458 = vmatprep.subr.bf16.mxu0 0
  %459 = vmatpush2.bf16.msra.mxu0 0
  %460 = vmatprep.subr.bf16.mxu0 0
  %461 = vmatpush2.bf16.msra.mxu0 0
  %462 = vmatprep.subr.bf16.mxu0 0
  %463 = vmatpush2.bf16.msra.mxu0 0
  %464 = vmatprep.subr.bf16.mxu0 0
  %465 = vmatpush2.bf16.msra.mxu0 0
  %466 = vmatprep.subr.bf16.mxu0 0
  %467 = vmatpush2.bf16.msra.mxu0 0
  %468 = vmatprep.mubr.bf16.mxu0 0
  %469 = vmatmul.mubr.bf16.gmra.mxu0 %v29
  %v470 = vpop.f32.mrf.mxu0
  %v471 = vadd.f32 0.0, %v470
  %v472 = vpop.f32.mrf.mxu0
  %v473 = vpop.f32.mrf.mxu0
  %v474 = vpop.f32.mrf.mxu0
  %475 = vdwg.mxu0
  %v492 = vunpack.c.l.b16 %v76
  %v493 = vunpack.c.l.b16 %v77
  %v494 = vunpack.c.l.b16 %v78
  %v495 = vunpack.c.l.b16 %v79
  %v496 = vunpack.c.l.b16 %v80
  %v497 = vunpack.c.l.b16 %v81
  %v498 = vunpack.c.l.b16 %v82
  %v499 = vunpack.c.l.b16 %v83
  %v500 = vunpack.c.l.b16 %v84
  %v501 = vunpack.c.l.b16 %v85
  %v502 = vunpack.c.l.b16 %v86
  %v503 = vunpack.c.l.b16 %v87
  %v504 = vunpack.c.l.b16 %v88
  %v505 = vunpack.c.l.b16 %v89
  %v506 = vunpack.c.l.b16 %v90
  %v507 = vunpack.c.l.b16 %v91
  %v508 = vpack.c.b16 %v493, %v492
  %v509 = vpack.c.b16 %v495, %v494
  %v510 = vpack.c.b16 %v497, %v496
  %v511 = vpack.c.b16 %v499, %v498
  %v512 = vpack.c.b16 %v501, %v500
  %v513 = vpack.c.b16 %v503, %v502
  %v514 = vpack.c.b16 %v505, %v504
  %v515 = vpack.c.b16 %v507, %v506
  %524 = vmatprep.subr.bf16.mxu0 0
  %525 = vmatpush1.bf16.msra.mxu0 %v515
  %526 = vmatprep.subr.bf16.mxu0 0
  %527 = vmatpush1.bf16.msra.mxu0 %v514
  %528 = vmatprep.subr.bf16.mxu0 0
  %529 = vmatpush1.bf16.msra.mxu0 %v513
  %530 = vmatprep.subr.bf16.mxu0 0
  %531 = vmatpush1.bf16.msra.mxu0 %v512
  %532 = vmatprep.subr.bf16.mxu0 0
  %533 = vmatpush1.bf16.msra.mxu0 %v511
  %534 = vmatprep.subr.bf16.mxu0 0
  %535 = vmatpush1.bf16.msra.mxu0 %v510
  %536 = vmatprep.subr.bf16.mxu0 0
  %537 = vmatpush1.bf16.msra.mxu0 %v509
  %538 = vmatprep.subr.bf16.mxu0 0
  %539 = vmatpush1.bf16.msra.mxu0 %v508
  %540 = vmatprep.subr.bf16.mxu0 0
  %541 = vmatpush2.bf16.msra.mxu0 0
  %542 = vmatprep.subr.bf16.mxu0 0
  %543 = vmatpush2.bf16.msra.mxu0 0
  %544 = vmatprep.subr.bf16.mxu0 0
  %545 = vmatpush2.bf16.msra.mxu0 0
  %546 = vmatprep.subr.bf16.mxu0 0
  %547 = vmatpush2.bf16.msra.mxu0 0
  %548 = vmatprep.subr.bf16.mxu0 0
  %549 = vmatpush2.bf16.msra.mxu0 0
  %550 = vmatprep.subr.bf16.mxu0 0
  %551 = vmatpush2.bf16.msra.mxu0 0
  %552 = vmatprep.subr.bf16.mxu0 0
  %553 = vmatpush2.bf16.msra.mxu0 0
  %554 = vmatprep.subr.bf16.mxu0 0
  %555 = vmatpush2.bf16.msra.mxu0 0
  %556 = vmatprep.mubr.bf16.mxu0 0
  %557 = vmatmul.mubr.bf16.gmra.mxu0 %v30
  %v558 = vpop.f32.mrf.mxu0
  %v559 = vadd.f32 0.0, %v558
  %v560 = vpop.f32.mrf.mxu0
  %v561 = vpop.f32.mrf.mxu0
  %v562 = vpop.f32.mrf.mxu0
  %563 = vdwg.mxu0
  %v580 = vunpack.c.l.b16 %v92
  %v581 = vunpack.c.l.b16 %v93
  %v582 = vunpack.c.l.b16 %v94
  %v583 = vunpack.c.l.b16 %v95
  %v584 = vunpack.c.l.b16 %v96
  %v585 = vunpack.c.l.b16 %v97
  %v586 = vunpack.c.l.b16 %v98
  %v587 = vunpack.c.l.b16 %v99
  %v588 = vunpack.c.l.b16 %v100
  %v589 = vunpack.c.l.b16 %v101
  %v590 = vunpack.c.l.b16 %v102
  %v591 = vunpack.c.l.b16 %v103
  %v592 = vunpack.c.l.b16 %v104
  %v593 = vunpack.c.l.b16 %v105
  %v594 = vunpack.c.l.b16 %v106
  %v595 = vunpack.c.l.b16 %v107
  %v596 = vpack.c.b16 %v581, %v580
  %v597 = vpack.c.b16 %v583, %v582
  %v598 = vpack.c.b16 %v585, %v584
  %v599 = vpack.c.b16 %v587, %v586
  %v600 = vpack.c.b16 %v589, %v588
  %v601 = vpack.c.b16 %v591, %v590
  %v602 = vpack.c.b16 %v593, %v592
  %v603 = vpack.c.b16 %v595, %v594
  %612 = vmatprep.subr.bf16.mxu0 0
  %613 = vmatpush1.bf16.msra.mxu0 %v603
  %614 = vmatprep.subr.bf16.mxu0 0
  %615 = vmatpush1.bf16.msra.mxu0 %v602
  %616 = vmatprep.subr.bf16.mxu0 0
  %617 = vmatpush1.bf16.msra.mxu0 %v601
  %618 = vmatprep.subr.bf16.mxu0 0
  %619 = vmatpush1.bf16.msra.mxu0 %v600
  %620 = vmatprep.subr.bf16.mxu0 0
  %621 = vmatpush1.bf16.msra.mxu0 %v599
  %622 = vmatprep.subr.bf16.mxu0 0
  %623 = vmatpush1.bf16.msra.mxu0 %v598
  %624 = vmatprep.subr.bf16.mxu0 0
  %625 = vmatpush1.bf16.msra.mxu0 %v597
  %626 = vmatprep.subr.bf16.mxu0 0
  %627 = vmatpush1.bf16.msra.mxu0 %v596
  %628 = vmatprep.subr.bf16.mxu0 0
  %629 = vmatpush2.bf16.msra.mxu0 0
  %630 = vmatprep.subr.bf16.mxu0 0
  %631 = vmatpush2.bf16.msra.mxu0 0
  %632 = vmatprep.subr.bf16.mxu0 0
  %633 = vmatpush2.bf16.msra.mxu0 0
  %634 = vmatprep.subr.bf16.mxu0 0
  %635 = vmatpush2.bf16.msra.mxu0 0
  %636 = vmatprep.subr.bf16.mxu0 0
  %637 = vmatpush2.bf16.msra.mxu0 0
  %638 = vmatprep.subr.bf16.mxu0 0
  %639 = vmatpush2.bf16.msra.mxu0 0
  %640 = vmatprep.subr.bf16.mxu0 0
  %641 = vmatpush2.bf16.msra.mxu0 0
  %642 = vmatprep.subr.bf16.mxu0 0
  %643 = vmatpush2.bf16.msra.mxu0 0
  %644 = vmatprep.mubr.bf16.mxu0 0
  %645 = vmatmul.mubr.bf16.gmra.mxu0 %v31
  %v646 = vpop.f32.mrf.mxu0
  %v647 = vadd.f32 0.0, %v646
  %v648 = vpop.f32.mrf.mxu0
  %v649 = vpop.f32.mrf.mxu0
  %v650 = vpop.f32.mrf.mxu0
  %651 = vdwg.mxu0
  %v668 = vunpack.c.l.b16 %v108
  %v669 = vunpack.c.l.b16 %v109
  %v670 = vunpack.c.l.b16 %v110
  %v671 = vunpack.c.l.b16 %v111
  %v672 = vunpack.c.l.b16 %v112
  %v673 = vunpack.c.l.b16 %v113
  %v674 = vunpack.c.l.b16 %v114
  %v675 = vunpack.c.l.b16 %v115
  %v676 = vunpack.c.l.b16 %v116
  %v677 = vunpack.c.l.b16 %v117
  %v678 = vunpack.c.l.b16 %v118
  %v679 = vunpack.c.l.b16 %v119
  %v680 = vunpack.c.l.b16 %v120
  %v681 = vunpack.c.l.b16 %v121
  %v682 = vunpack.c.l.b16 %v122
  %v683 = vunpack.c.l.b16 %v123
  %v684 = vpack.c.b16 %v669, %v668
  %v685 = vpack.c.b16 %v671, %v670
  %v686 = vpack.c.b16 %v673, %v672
  %v687 = vpack.c.b16 %v675, %v674
  %v688 = vpack.c.b16 %v677, %v676
  %v689 = vpack.c.b16 %v679, %v678
  %v690 = vpack.c.b16 %v681, %v680
  %v691 = vpack.c.b16 %v683, %v682
  %700 = vmatprep.subr.bf16.mxu0 0
  %701 = vmatpush1.bf16.msra.mxu0 %v691
  %702 = vmatprep.subr.bf16.mxu0 0
  %703 = vmatpush1.bf16.msra.mxu0 %v690
  %704 = vmatprep.subr.bf16.mxu0 0
  %705 = vmatpush1.bf16.msra.mxu0 %v689
  %706 = vmatprep.subr.bf16.mxu0 0
  %707 = vmatpush1.bf16.msra.mxu0 %v688
  %708 = vmatprep.subr.bf16.mxu0 0
  %709 = vmatpush1.bf16.msra.mxu0 %v687
  %710 = vmatprep.subr.bf16.mxu0 0
  %711 = vmatpush1.bf16.msra.mxu0 %v686
  %712 = vmatprep.subr.bf16.mxu0 0
  %713 = vmatpush1.bf16.msra.mxu0 %v685
  %714 = vmatprep.subr.bf16.mxu0 0
  %715 = vmatpush1.bf16.msra.mxu0 %v684
  %716 = vmatprep.subr.bf16.mxu0 0
  %717 = vmatpush2.bf16.msra.mxu0 0
  %718 = vmatprep.subr.bf16.mxu0 0
  %719 = vmatpush2.bf16.msra.mxu0 0
  %720 = vmatprep.subr.bf16.mxu0 0
  %721 = vmatpush2.bf16.msra.mxu0 0
  %722 = vmatprep.subr.bf16.mxu0 0
  %723 = vmatpush2.bf16.msra.mxu0 0
  %724 = vmatprep.subr.bf16.mxu0 0
  %725 = vmatpush2.bf16.msra.mxu0 0
  %726 = vmatprep.subr.bf16.mxu0 0
  %727 = vmatpush2.bf16.msra.mxu0 0
  %728 = vmatprep.subr.bf16.mxu0 0
  %729 = vmatpush2.bf16.msra.mxu0 0
  %730 = vmatprep.subr.bf16.mxu0 0
  %731 = vmatpush2.bf16.msra.mxu0 0
  %732 = vmatprep.mubr.bf16.mxu0 0
  %733 = vmatmul.mubr.bf16.gmra.mxu0 %v32
  %v734 = vpop.f32.mrf.mxu0
  %v735 = vadd.f32 0.0, %v734
  %v736 = vpop.f32.mrf.mxu0
  %v737 = vpop.f32.mrf.mxu0
  %v738 = vpop.f32.mrf.mxu0
  %739 = vdwg.mxu0
  %v756 = vunpack.c.l.b16 %v124
  %v757 = vunpack.c.l.b16 %v125
  %v758 = vunpack.c.l.b16 %v126
  %v759 = vunpack.c.l.b16 %v127
  %v760 = vunpack.c.l.b16 %v128
  %v761 = vunpack.c.l.b16 %v129
  %v762 = vunpack.c.l.b16 %v130
  %v763 = vunpack.c.l.b16 %v131
  %v764 = vunpack.c.l.b16 %v132
  %v765 = vunpack.c.l.b16 %v133
  %v766 = vunpack.c.l.b16 %v134
  %v767 = vunpack.c.l.b16 %v135
  %v768 = vunpack.c.l.b16 %v136
  %v769 = vunpack.c.l.b16 %v137
  %v770 = vunpack.c.l.b16 %v138
  %v771 = vunpack.c.l.b16 %v139
  %v772 = vpack.c.b16 %v757, %v756
  %v773 = vpack.c.b16 %v759, %v758
  %v774 = vpack.c.b16 %v761, %v760
  %v775 = vpack.c.b16 %v763, %v762
  %v776 = vpack.c.b16 %v765, %v764
  %v777 = vpack.c.b16 %v767, %v766
  %v778 = vpack.c.b16 %v769, %v768
  %v779 = vpack.c.b16 %v771, %v770
  %788 = vmatprep.subr.bf16.mxu0 0
  %789 = vmatpush1.bf16.msra.mxu0 %v779
  %790 = vmatprep.subr.bf16.mxu0 0
  %791 = vmatpush1.bf16.msra.mxu0 %v778
  %792 = vmatprep.subr.bf16.mxu0 0
  %793 = vmatpush1.bf16.msra.mxu0 %v777
  %794 = vmatprep.subr.bf16.mxu0 0
  %795 = vmatpush1.bf16.msra.mxu0 %v776
  %796 = vmatprep.subr.bf16.mxu0 0
  %797 = vmatpush1.bf16.msra.mxu0 %v775
  %798 = vmatprep.subr.bf16.mxu0 0
  %799 = vmatpush1.bf16.msra.mxu0 %v774
  %800 = vmatprep.subr.bf16.mxu0 0
  %801 = vmatpush1.bf16.msra.mxu0 %v773
  %802 = vmatprep.subr.bf16.mxu0 0
  %803 = vmatpush1.bf16.msra.mxu0 %v772
  %804 = vmatprep.subr.bf16.mxu0 0
  %805 = vmatpush2.bf16.msra.mxu0 0
  %806 = vmatprep.subr.bf16.mxu0 0
  %807 = vmatpush2.bf16.msra.mxu0 0
  %808 = vmatprep.subr.bf16.mxu0 0
  %809 = vmatpush2.bf16.msra.mxu0 0
  %810 = vmatprep.subr.bf16.mxu0 0
  %811 = vmatpush2.bf16.msra.mxu0 0
  %812 = vmatprep.subr.bf16.mxu0 0
  %813 = vmatpush2.bf16.msra.mxu0 0
  %814 = vmatprep.subr.bf16.mxu0 0
  %815 = vmatpush2.bf16.msra.mxu0 0
  %816 = vmatprep.subr.bf16.mxu0 0
  %817 = vmatpush2.bf16.msra.mxu0 0
  %818 = vmatprep.subr.bf16.mxu0 0
  %819 = vmatpush2.bf16.msra.mxu0 0
  %820 = vmatprep.mubr.bf16.mxu0 0
  %821 = vmatmul.mubr.bf16.gmra.mxu0 %v33
  %v822 = vpop.f32.mrf.mxu0
  %v823 = vadd.f32 0.0, %v822
  %v824 = vpop.f32.mrf.mxu0
  %v825 = vpop.f32.mrf.mxu0
  %v826 = vpop.f32.mrf.mxu0
  %827 = vdwg.mxu0
  %v844 = vunpack.c.l.b16 %v140
  %v845 = vunpack.c.l.b16 %v141
  %v846 = vunpack.c.l.b16 %v142
  %v847 = vunpack.c.l.b16 %v143
  %v848 = vunpack.c.l.b16 %v144
  %v849 = vunpack.c.l.b16 %v145
  %v850 = vunpack.c.l.b16 %v146
  %v851 = vunpack.c.l.b16 %v147
  %v852 = vunpack.c.l.b16 %v148
  %v853 = vunpack.c.l.b16 %v149
  %v854 = vunpack.c.l.b16 %v150
  %v855 = vunpack.c.l.b16 %v151
  %v856 = vunpack.c.l.b16 %v152
  %v857 = vunpack.c.l.b16 %v153
  %v858 = vunpack.c.l.b16 %v154
  %v859 = vunpack.c.l.b16 %v155
  %v860 = vpack.c.b16 %v845, %v844
  %v861 = vpack.c.b16 %v847, %v846
  %v862 = vpack.c.b16 %v849, %v848
  %v863 = vpack.c.b16 %v851, %v850
  %v864 = vpack.c.b16 %v853, %v852
  %v865 = vpack.c.b16 %v855, %v854
  %v866 = vpack.c.b16 %v857, %v856
  %v867 = vpack.c.b16 %v859, %v858
  %876 = vmatprep.subr.bf16.mxu0 0
  %877 = vmatpush1.bf16.msra.mxu0 %v867
  %878 = vmatprep.subr.bf16.mxu0 0
  %879 = vmatpush1.bf16.msra.mxu0 %v866
  %880 = vmatprep.subr.bf16.mxu0 0
  %881 = vmatpush1.bf16.msra.mxu0 %v865
  %882 = vmatprep.subr.bf16.mxu0 0
  %883 = vmatpush1.bf16.msra.mxu0 %v864
  %884 = vmatprep.subr.bf16.mxu0 0
  %885 = vmatpush1.bf16.msra.mxu0 %v863
  %886 = vmatprep.subr.bf16.mxu0 0
  %887 = vmatpush1.bf16.msra.mxu0 %v862
  %888 = vmatprep.subr.bf16.mxu0 0
  %889 = vmatpush1.bf16.msra.mxu0 %v861
  %890 = vmatprep.subr.bf16.mxu0 0
  %891 = vmatpush1.bf16.msra.mxu0 %v860
  %892 = vmatprep.subr.bf16.mxu0 0
  %893 = vmatpush2.bf16.msra.mxu0 0
  %894 = vmatprep.subr.bf16.mxu0 0
  %895 = vmatpush2.bf16.msra.mxu0 0
  %896 = vmatprep.subr.bf16.mxu0 0
  %897 = vmatpush2.bf16.msra.mxu0 0
  %898 = vmatprep.subr.bf16.mxu0 0
  %899 = vmatpush2.bf16.msra.mxu0 0
  %900 = vmatprep.subr.bf16.mxu0 0
  %901 = vmatpush2.bf16.msra.mxu0 0
  %902 = vmatprep.subr.bf16.mxu0 0
  %903 = vmatpush2.bf16.msra.mxu0 0
  %904 = vmatprep.subr.bf16.mxu0 0
  %905 = vmatpush2.bf16.msra.mxu0 0
  %906 = vmatprep.subr.bf16.mxu0 0
  %907 = vmatpush2.bf16.msra.mxu0 0
  %908 = vmatprep.mubr.bf16.mxu0 0
  %909 = vmatmul.mubr.bf16.gmra.mxu0 %v34
  %v910 = vpop.f32.mrf.mxu0
  %v911 = vadd.f32 0.0, %v910
  %v912 = vpop.f32.mrf.mxu0
  %v913 = vpop.f32.mrf.mxu0
  %v914 = vpop.f32.mrf.mxu0
  %915 = vdwg.mxu0
  %v932 = vunpack.c.l.b16 %v156
  %v933 = vunpack.c.l.b16 %v157
  %v934 = vunpack.c.l.b16 %v158
  %v935 = vunpack.c.l.b16 %v159
  %v936 = vunpack.c.l.b16 %v160
  %v937 = vunpack.c.l.b16 %v161
  %v938 = vunpack.c.l.b16 %v162
  %v939 = vunpack.c.l.b16 %v163
  %v940 = vunpack.c.l.b16 %v164
  %v941 = vunpack.c.l.b16 %v165
  %v942 = vunpack.c.l.b16 %v166
  %v943 = vunpack.c.l.b16 %v167
  %v944 = vunpack.c.l.b16 %v168
  %v945 = vunpack.c.l.b16 %v169
  %v946 = vunpack.c.l.b16 %v170
  %v947 = vunpack.c.l.b16 %v171
  %v948 = vpack.c.b16 %v933, %v932
  %v949 = vpack.c.b16 %v935, %v934
  %v950 = vpack.c.b16 %v937, %v936
  %v951 = vpack.c.b16 %v939, %v938
  %v952 = vpack.c.b16 %v941, %v940
  %v953 = vpack.c.b16 %v943, %v942
  %v954 = vpack.c.b16 %v945, %v944
  %v955 = vpack.c.b16 %v947, %v946
  %964 = vmatprep.subr.bf16.mxu0 0
  %965 = vmatpush1.bf16.msra.mxu0 %v955
  %966 = vmatprep.subr.bf16.mxu0 0
  %967 = vmatpush1.bf16.msra.mxu0 %v954
  %968 = vmatprep.subr.bf16.mxu0 0
  %969 = vmatpush1.bf16.msra.mxu0 %v953
  %970 = vmatprep.subr.bf16.mxu0 0
  %971 = vmatpush1.bf16.msra.mxu0 %v952
  %972 = vmatprep.subr.bf16.mxu0 0
  %973 = vmatpush1.bf16.msra.mxu0 %v951
  %974 = vmatprep.subr.bf16.mxu0 0
  %975 = vmatpush1.bf16.msra.mxu0 %v950
  %976 = vmatprep.subr.bf16.mxu0 0
  %977 = vmatpush1.bf16.msra.mxu0 %v949
  %978 = vmatprep.subr.bf16.mxu0 0
  %979 = vmatpush1.bf16.msra.mxu0 %v948
  %980 = vmatprep.subr.bf16.mxu0 0
  %981 = vmatpush2.bf16.msra.mxu0 0
  %982 = vmatprep.subr.bf16.mxu0 0
  %983 = vmatpush2.bf16.msra.mxu0 0
  %984 = vmatprep.subr.bf16.mxu0 0
  %985 = vmatpush2.bf16.msra.mxu0 0
  %986 = vmatprep.subr.bf16.mxu0 0
  %987 = vmatpush2.bf16.msra.mxu0 0
  %988 = vmatprep.subr.bf16.mxu0 0
  %989 = vmatpush2.bf16.msra.mxu0 0
  %990 = vmatprep.subr.bf16.mxu0 0
  %991 = vmatpush2.bf16.msra.mxu0 0
  %992 = vmatprep.subr.bf16.mxu0 0
  %993 = vmatpush2.bf16.msra.mxu0 0
  %994 = vmatprep.subr.bf16.mxu0 0
  %995 = vmatpush2.bf16.msra.mxu0 0
  %996 = vmatprep.mubr.bf16.mxu0 0
  %997 = vmatmul.mubr.bf16.gmra.mxu0 %v35
  %v998 = vpop.f32.mrf.mxu0
  %v999 = vadd.f32 0.0, %v998
  %v1000 = vpop.f32.mrf.mxu0
  %v1001 = vpop.f32.mrf.mxu0
  %v1002 = vpop.f32.mrf.mxu0
  %1003 = vdwg.mxu0
  %v1020 = vunpack.c.l.b16 %v172
  %v1021 = vunpack.c.l.b16 %v173
  %v1022 = vunpack.c.l.b16 %v174
  %v1023 = vunpack.c.l.b16 %v175
  %v1024 = vunpack.c.l.b16 %v176
  %v1025 = vunpack.c.l.b16 %v177
  %v1026 = vunpack.c.l.b16 %v178
  %v1027 = vunpack.c.l.b16 %v179
  %v1028 = vunpack.c.l.b16 %v180
  %v1029 = vunpack.c.l.b16 %v181
  %v1030 = vunpack.c.l.b16 %v182
  %v1031 = vunpack.c.l.b16 %v183
  %v1032 = vunpack.c.l.b16 %v184
  %v1033 = vunpack.c.l.b16 %v185
  %v1034 = vunpack.c.l.b16 %v186
  %v1035 = vunpack.c.l.b16 %v187
  %v1036 = vpack.c.b16 %v1021, %v1020
  %v1037 = vpack.c.b16 %v1023, %v1022
  %v1038 = vpack.c.b16 %v1025, %v1024
  %v1039 = vpack.c.b16 %v1027, %v1026
  %v1040 = vpack.c.b16 %v1029, %v1028
  %v1041 = vpack.c.b16 %v1031, %v1030
  %v1042 = vpack.c.b16 %v1033, %v1032
  %v1043 = vpack.c.b16 %v1035, %v1034
  %1052 = vmatprep.subr.bf16.mxu0 0
  %1053 = vmatpush1.bf16.msra.mxu0 %v1043
  %1054 = vmatprep.subr.bf16.mxu0 0
  %1055 = vmatpush1.bf16.msra.mxu0 %v1042
  %1056 = vmatprep.subr.bf16.mxu0 0
  %1057 = vmatpush1.bf16.msra.mxu0 %v1041
  %1058 = vmatprep.subr.bf16.mxu0 0
  %1059 = vmatpush1.bf16.msra.mxu0 %v1040
  %1060 = vmatprep.subr.bf16.mxu0 0
  %1061 = vmatpush1.bf16.msra.mxu0 %v1039
  %1062 = vmatprep.subr.bf16.mxu0 0
  %1063 = vmatpush1.bf16.msra.mxu0 %v1038
  %1064 = vmatprep.subr.bf16.mxu0 0
  %1065 = vmatpush1.bf16.msra.mxu0 %v1037
  %1066 = vmatprep.subr.bf16.mxu0 0
  %1067 = vmatpush1.bf16.msra.mxu0 %v1036
  %1068 = vmatprep.subr.bf16.mxu0 0
  %1069 = vmatpush2.bf16.msra.mxu0 0
  %1070 = vmatprep.subr.bf16.mxu0 0
  %1071 = vmatpush2.bf16.msra.mxu0 0
  %1072 = vmatprep.subr.bf16.mxu0 0
  %1073 = vmatpush2.bf16.msra.mxu0 0
  %1074 = vmatprep.subr.bf16.mxu0 0
  %1075 = vmatpush2.bf16.msra.mxu0 0
  %1076 = vmatprep.subr.bf16.mxu0 0
  %1077 = vmatpush2.bf16.msra.mxu0 0
  %1078 = vmatprep.subr.bf16.mxu0 0
  %1079 = vmatpush2.bf16.msra.mxu0 0
  %1080 = vmatprep.subr.bf16.mxu0 0
  %1081 = vmatpush2.bf16.msra.mxu0 0
  %1082 = vmatprep.subr.bf16.mxu0 0
  %1083 = vmatpush2.bf16.msra.mxu0 0
  %1084 = vmatprep.mubr.bf16.mxu0 0
  %1085 = vmatmul.mubr.bf16.gmra.mxu0 %v36
  %v1086 = vpop.f32.mrf.mxu0
  %v1087 = vadd.f32 0.0, %v1086
  %v1088 = vpop.f32.mrf.mxu0
  %v1089 = vpop.f32.mrf.mxu0
  %v1090 = vpop.f32.mrf.mxu0
  %1091 = vdwg.mxu0
  %v1108 = vunpack.c.l.b16 %v188
  %v1109 = vunpack.c.l.b16 %v189
  %v1110 = vunpack.c.l.b16 %v190
  %v1111 = vunpack.c.l.b16 %v191
  %v1112 = vunpack.c.l.b16 %v192
  %v1113 = vunpack.c.l.b16 %v193
  %v1114 = vunpack.c.l.b16 %v194
  %v1115 = vunpack.c.l.b16 %v195
  %v1116 = vunpack.c.l.b16 %v196
  %v1117 = vunpack.c.l.b16 %v197
  %v1118 = vunpack.c.l.b16 %v198
  %v1119 = vunpack.c.l.b16 %v199
  %v1120 = vunpack.c.l.b16 %v200
  %v1121 = vunpack.c.l.b16 %v201
  %v1122 = vunpack.c.l.b16 %v202
  %v1123 = vunpack.c.l.b16 %v203
  %v1124 = vpack.c.b16 %v1109, %v1108
  %v1125 = vpack.c.b16 %v1111, %v1110
  %v1126 = vpack.c.b16 %v1113, %v1112
  %v1127 = vpack.c.b16 %v1115, %v1114
  %v1128 = vpack.c.b16 %v1117, %v1116
  %v1129 = vpack.c.b16 %v1119, %v1118
  %v1130 = vpack.c.b16 %v1121, %v1120
  %v1131 = vpack.c.b16 %v1123, %v1122
  %1140 = vmatprep.subr.bf16.mxu0 0
  %1141 = vmatpush1.bf16.msra.mxu0 %v1131
  %1142 = vmatprep.subr.bf16.mxu0 0
  %1143 = vmatpush1.bf16.msra.mxu0 %v1130
  %1144 = vmatprep.subr.bf16.mxu0 0
  %1145 = vmatpush1.bf16.msra.mxu0 %v1129
  %1146 = vmatprep.subr.bf16.mxu0 0
  %1147 = vmatpush1.bf16.msra.mxu0 %v1128
  %1148 = vmatprep.subr.bf16.mxu0 0
  %1149 = vmatpush1.bf16.msra.mxu0 %v1127
  %1150 = vmatprep.subr.bf16.mxu0 0
  %1151 = vmatpush1.bf16.msra.mxu0 %v1126
  %1152 = vmatprep.subr.bf16.mxu0 0
  %1153 = vmatpush1.bf16.msra.mxu0 %v1125
  %1154 = vmatprep.subr.bf16.mxu0 0
  %1155 = vmatpush1.bf16.msra.mxu0 %v1124
  %1156 = vmatprep.subr.bf16.mxu0 0
  %1157 = vmatpush2.bf16.msra.mxu0 0
  %1158 = vmatprep.subr.bf16.mxu0 0
  %1159 = vmatpush2.bf16.msra.mxu0 0
  %1160 = vmatprep.subr.bf16.mxu0 0
  %1161 = vmatpush2.bf16.msra.mxu0 0
  %1162 = vmatprep.subr.bf16.mxu0 0
  %1163 = vmatpush2.bf16.msra.mxu0 0
  %1164 = vmatprep.subr.bf16.mxu0 0
  %1165 = vmatpush2.bf16.msra.mxu0 0
  %1166 = vmatprep.subr.bf16.mxu0 0
  %1167 = vmatpush2.bf16.msra.mxu0 0
  %1168 = vmatprep.subr.bf16.mxu0 0
  %1169 = vmatpush2.bf16.msra.mxu0 0
  %1170 = vmatprep.subr.bf16.mxu0 0
  %1171 = vmatpush2.bf16.msra.mxu0 0
  %1172 = vmatprep.mubr.bf16.mxu0 0
  %1173 = vmatmul.mubr.bf16.gmra.mxu0 %v37
  %v1174 = vpop.f32.mrf.mxu0
  %v1175 = vadd.f32 0.0, %v1174
  %v1176 = vpop.f32.mrf.mxu0
  %v1177 = vpop.f32.mrf.mxu0
  %v1178 = vpop.f32.mrf.mxu0
  %1179 = vdwg.mxu0
  %v1196 = vunpack.c.l.b16 %v204
  %v1197 = vunpack.c.l.b16 %v205
  %v1198 = vunpack.c.l.b16 %v206
  %v1199 = vunpack.c.l.b16 %v207
  %v1200 = vunpack.c.l.b16 %v208
  %v1201 = vunpack.c.l.b16 %v209
  %v1202 = vunpack.c.l.b16 %v210
  %v1203 = vunpack.c.l.b16 %v211
  %v1204 = vunpack.c.l.b16 %v212
  %v1205 = vunpack.c.l.b16 %v213
  %v1206 = vunpack.c.l.b16 %v214
  %v1207 = vunpack.c.l.b16 %v215
  %v1208 = vunpack.c.l.b16 %v216
  %v1209 = vunpack.c.l.b16 %v217
  %v1210 = vunpack.c.l.b16 %v218
  %v1211 = vunpack.c.l.b16 %v219
  %v1212 = vpack.c.b16 %v1197, %v1196
  %v1213 = vpack.c.b16 %v1199, %v1198
  %v1214 = vpack.c.b16 %v1201, %v1200
  %v1215 = vpack.c.b16 %v1203, %v1202
  %v1216 = vpack.c.b16 %v1205, %v1204
  %v1217 = vpack.c.b16 %v1207, %v1206
  %v1218 = vpack.c.b16 %v1209, %v1208
  %v1219 = vpack.c.b16 %v1211, %v1210
  %1228 = vmatprep.subr.bf16.mxu0 0
  %1229 = vmatpush1.bf16.msra.mxu0 %v1219
  %1230 = vmatprep.subr.bf16.mxu0 0
  %1231 = vmatpush1.bf16.msra.mxu0 %v1218
  %1232 = vmatprep.subr.bf16.mxu0 0
  %1233 = vmatpush1.bf16.msra.mxu0 %v1217
  %1234 = vmatprep.subr.bf16.mxu0 0
  %1235 = vmatpush1.bf16.msra.mxu0 %v1216
  %1236 = vmatprep.subr.bf16.mxu0 0
  %1237 = vmatpush1.bf16.msra.mxu0 %v1215
  %1238 = vmatprep.subr.bf16.mxu0 0
  %1239 = vmatpush1.bf16.msra.mxu0 %v1214
  %1240 = vmatprep.subr.bf16.mxu0 0
  %1241 = vmatpush1.bf16.msra.mxu0 %v1213
  %1242 = vmatprep.subr.bf16.mxu0 0
  %1243 = vmatpush1.bf16.msra.mxu0 %v1212
  %1244 = vmatprep.subr.bf16.mxu0 0
  %1245 = vmatpush2.bf16.msra.mxu0 0
  %1246 = vmatprep.subr.bf16.mxu0 0
  %1247 = vmatpush2.bf16.msra.mxu0 0
  %1248 = vmatprep.subr.bf16.mxu0 0
  %1249 = vmatpush2.bf16.msra.mxu0 0
  %1250 = vmatprep.subr.bf16.mxu0 0
  %1251 = vmatpush2.bf16.msra.mxu0 0
  %1252 = vmatprep.subr.bf16.mxu0 0
  %1253 = vmatpush2.bf16.msra.mxu0 0
  %1254 = vmatprep.subr.bf16.mxu0 0
  %1255 = vmatpush2.bf16.msra.mxu0 0
  %1256 = vmatprep.subr.bf16.mxu0 0
  %1257 = vmatpush2.bf16.msra.mxu0 0
  %1258 = vmatprep.subr.bf16.mxu0 0
  %1259 = vmatpush2.bf16.msra.mxu0 0
  %1260 = vmatprep.mubr.bf16.mxu0 0
  %1261 = vmatmul.mubr.bf16.gmra.mxu0 %v38
  %v1262 = vpop.f32.mrf.mxu0
  %v1263 = vadd.f32 0.0, %v1262
  %v1264 = vpop.f32.mrf.mxu0
  %v1265 = vpop.f32.mrf.mxu0
  %v1266 = vpop.f32.mrf.mxu0
  %1267 = vdwg.mxu0
  %v1284 = vunpack.c.l.b16 %v220
  %v1285 = vunpack.c.l.b16 %v221
  %v1286 = vunpack.c.l.b16 %v222
  %v1287 = vunpack.c.l.b16 %v223
  %v1288 = vunpack.c.l.b16 %v224
  %v1289 = vunpack.c.l.b16 %v225
  %v1290 = vunpack.c.l.b16 %v226
  %v1291 = vunpack.c.l.b16 %v227
  %v1292 = vunpack.c.l.b16 %v228
  %v1293 = vunpack.c.l.b16 %v229
  %v1294 = vunpack.c.l.b16 %v230
  %v1295 = vunpack.c.l.b16 %v231
  %v1296 = vunpack.c.l.b16 %v232
  %v1297 = vunpack.c.l.b16 %v233
  %v1298 = vunpack.c.l.b16 %v234
  %v1299 = vunpack.c.l.b16 %v235
  %v1300 = vpack.c.b16 %v1285, %v1284
  %v1301 = vpack.c.b16 %v1287, %v1286
  %v1302 = vpack.c.b16 %v1289, %v1288
  %v1303 = vpack.c.b16 %v1291, %v1290
  %v1304 = vpack.c.b16 %v1293, %v1292
  %v1305 = vpack.c.b16 %v1295, %v1294
  %v1306 = vpack.c.b16 %v1297, %v1296
  %v1307 = vpack.c.b16 %v1299, %v1298
  %1316 = vmatprep.subr.bf16.mxu0 0
  %1317 = vmatpush1.bf16.msra.mxu0 %v1307
  %1318 = vmatprep.subr.bf16.mxu0 0
  %1319 = vmatpush1.bf16.msra.mxu0 %v1306
  %1320 = vmatprep.subr.bf16.mxu0 0
  %1321 = vmatpush1.bf16.msra.mxu0 %v1305
  %1322 = vmatprep.subr.bf16.mxu0 0
  %1323 = vmatpush1.bf16.msra.mxu0 %v1304
  %1324 = vmatprep.subr.bf16.mxu0 0
  %1325 = vmatpush1.bf16.msra.mxu0 %v1303
  %1326 = vmatprep.subr.bf16.mxu0 0
  %1327 = vmatpush1.bf16.msra.mxu0 %v1302
  %1328 = vmatprep.subr.bf16.mxu0 0
  %1329 = vmatpush1.bf16.msra.mxu0 %v1301
  %1330 = vmatprep.subr.bf16.mxu0 0
  %1331 = vmatpush1.bf16.msra.mxu0 %v1300
  %1332 = vmatprep.subr.bf16.mxu0 0
  %1333 = vmatpush2.bf16.msra.mxu0 0
  %1334 = vmatprep.subr.bf16.mxu0 0
  %1335 = vmatpush2.bf16.msra.mxu0 0
  %1336 = vmatprep.subr.bf16.mxu0 0
  %1337 = vmatpush2.bf16.msra.mxu0 0
  %1338 = vmatprep.subr.bf16.mxu0 0
  %1339 = vmatpush2.bf16.msra.mxu0 0
  %1340 = vmatprep.subr.bf16.mxu0 0
  %1341 = vmatpush2.bf16.msra.mxu0 0
  %1342 = vmatprep.subr.bf16.mxu0 0
  %1343 = vmatpush2.bf16.msra.mxu0 0
  %1344 = vmatprep.subr.bf16.mxu0 0
  %1345 = vmatpush2.bf16.msra.mxu0 0
  %1346 = vmatprep.subr.bf16.mxu0 0
  %1347 = vmatpush2.bf16.msra.mxu0 0
  %1348 = vmatprep.mubr.bf16.mxu0 0
  %1349 = vmatmul.mubr.bf16.gmra.mxu0 %v39
  %v1350 = vpop.f32.mrf.mxu0
  %v1351 = vadd.f32 0.0, %v1350
  %v1352 = vpop.f32.mrf.mxu0
  %v1353 = vpop.f32.mrf.mxu0
  %v1354 = vpop.f32.mrf.mxu0
  %1355 = vdwg.mxu0
  %v1372 = vunpack.c.l.b16 %v236
  %v1373 = vunpack.c.l.b16 %v237
  %v1374 = vunpack.c.l.b16 %v238
  %v1375 = vunpack.c.l.b16 %v239
  %v1376 = vunpack.c.l.b16 %v240
  %v1377 = vunpack.c.l.b16 %v241
  %v1378 = vunpack.c.l.b16 %v242
  %v1379 = vunpack.c.l.b16 %v243
  %v1380 = vunpack.c.l.b16 %v244
  %v1381 = vunpack.c.l.b16 %v245
  %v1382 = vunpack.c.l.b16 %v246
  %v1383 = vunpack.c.l.b16 %v247
  %v1384 = vunpack.c.l.b16 %v248
  %v1385 = vunpack.c.l.b16 %v249
  %v1386 = vunpack.c.l.b16 %v250
  %v1387 = vunpack.c.l.b16 %v251
  %v1388 = vpack.c.b16 %v1373, %v1372
  %v1389 = vpack.c.b16 %v1375, %v1374
  %v1390 = vpack.c.b16 %v1377, %v1376
  %v1391 = vpack.c.b16 %v1379, %v1378
  %v1392 = vpack.c.b16 %v1381, %v1380
  %v1393 = vpack.c.b16 %v1383, %v1382
  %v1394 = vpack.c.b16 %v1385, %v1384
  %v1395 = vpack.c.b16 %v1387, %v1386
  %1404 = vmatprep.subr.bf16.mxu0 0
  %1405 = vmatpush1.bf16.msra.mxu0 %v1395
  %1406 = vmatprep.subr.bf16.mxu0 0
  %1407 = vmatpush1.bf16.msra.mxu0 %v1394
  %1408 = vmatprep.subr.bf16.mxu0 0
  %1409 = vmatpush1.bf16.msra.mxu0 %v1393
  %1410 = vmatprep.subr.bf16.mxu0 0
  %1411 = vmatpush1.bf16.msra.mxu0 %v1392
  %1412 = vmatprep.subr.bf16.mxu0 0
  %1413 = vmatpush1.bf16.msra.mxu0 %v1391
  %1414 = vmatprep.subr.bf16.mxu0 0
  %1415 = vmatpush1.bf16.msra.mxu0 %v1390
  %1416 = vmatprep.subr.bf16.mxu0 0
  %1417 = vmatpush1.bf16.msra.mxu0 %v1389
  %1418 = vmatprep.subr.bf16.mxu0 0
  %1419 = vmatpush1.bf16.msra.mxu0 %v1388
  %1420 = vmatprep.subr.bf16.mxu0 0
  %1421 = vmatpush2.bf16.msra.mxu0 0
  %1422 = vmatprep.subr.bf16.mxu0 0
  %1423 = vmatpush2.bf16.msra.mxu0 0
  %1424 = vmatprep.subr.bf16.mxu0 0
  %1425 = vmatpush2.bf16.msra.mxu0 0
  %1426 = vmatprep.subr.bf16.mxu0 0
  %1427 = vmatpush2.bf16.msra.mxu0 0
  %1428 = vmatprep.subr.bf16.mxu0 0
  %1429 = vmatpush2.bf16.msra.mxu0 0
  %1430 = vmatprep.subr.bf16.mxu0 0
  %1431 = vmatpush2.bf16.msra.mxu0 0
  %1432 = vmatprep.subr.bf16.mxu0 0
  %1433 = vmatpush2.bf16.msra.mxu0 0
  %1434 = vmatprep.subr.bf16.mxu0 0
  %1435 = vmatpush2.bf16.msra.mxu0 0
  %1436 = vmatprep.mubr.bf16.mxu0 0
  %1437 = vmatmul.mubr.bf16.gmra.mxu0 %v40
  %v1438 = vpop.f32.mrf.mxu0
  %v1439 = vadd.f32 0.0, %v1438
  %v1440 = vpop.f32.mrf.mxu0
  %v1441 = vpop.f32.mrf.mxu0
  %v1442 = vpop.f32.mrf.mxu0
  %1443 = vdwg.mxu0
  %v1460 = vunpack.c.l.b16 %v252
  %v1461 = vunpack.c.l.b16 %v253
  %v1462 = vunpack.c.l.b16 %v254
  %v1463 = vunpack.c.l.b16 %v255
  %v1464 = vunpack.c.l.b16 %v256
  %v1465 = vunpack.c.l.b16 %v257
  %v1466 = vunpack.c.l.b16 %v258
  %v1467 = vunpack.c.l.b16 %v259
  %v1468 = vunpack.c.l.b16 %v260
  %v1469 = vunpack.c.l.b16 %v261
  %v1470 = vunpack.c.l.b16 %v262
  %v1471 = vunpack.c.l.b16 %v263
  %v1472 = vunpack.c.l.b16 %v264
  %v1473 = vunpack.c.l.b16 %v265
  %v1474 = vunpack.c.l.b16 %v266
  %v1475 = vunpack.c.l.b16 %v267
  %v1476 = vpack.c.b16 %v1461, %v1460
  %v1477 = vpack.c.b16 %v1463, %v1462
  %v1478 = vpack.c.b16 %v1465, %v1464
  %v1479 = vpack.c.b16 %v1467, %v1466
  %v1480 = vpack.c.b16 %v1469, %v1468
  %v1481 = vpack.c.b16 %v1471, %v1470
  %v1482 = vpack.c.b16 %v1473, %v1472
  %v1483 = vpack.c.b16 %v1475, %v1474
  %1492 = vmatprep.subr.bf16.mxu0 0
  %1493 = vmatpush1.bf16.msra.mxu0 %v1483
  %1494 = vmatprep.subr.bf16.mxu0 0
  %1495 = vmatpush1.bf16.msra.mxu0 %v1482
  %1496 = vmatprep.subr.bf16.mxu0 0
  %1497 = vmatpush1.bf16.msra.mxu0 %v1481
  %1498 = vmatprep.subr.bf16.mxu0 0
  %1499 = vmatpush1.bf16.msra.mxu0 %v1480
  %1500 = vmatprep.subr.bf16.mxu0 0
  %1501 = vmatpush1.bf16.msra.mxu0 %v1479
  %1502 = vmatprep.subr.bf16.mxu0 0
  %1503 = vmatpush1.bf16.msra.mxu0 %v1478
  %1504 = vmatprep.subr.bf16.mxu0 0
  %1505 = vmatpush1.bf16.msra.mxu0 %v1477
  %1506 = vmatprep.subr.bf16.mxu0 0
  %1507 = vmatpush1.bf16.msra.mxu0 %v1476
  %1508 = vmatprep.subr.bf16.mxu0 0
  %1509 = vmatpush2.bf16.msra.mxu0 0
  %1510 = vmatprep.subr.bf16.mxu0 0
  %1511 = vmatpush2.bf16.msra.mxu0 0
  %1512 = vmatprep.subr.bf16.mxu0 0
  %1513 = vmatpush2.bf16.msra.mxu0 0
  %1514 = vmatprep.subr.bf16.mxu0 0
  %1515 = vmatpush2.bf16.msra.mxu0 0
  %1516 = vmatprep.subr.bf16.mxu0 0
  %1517 = vmatpush2.bf16.msra.mxu0 0
  %1518 = vmatprep.subr.bf16.mxu0 0
  %1519 = vmatpush2.bf16.msra.mxu0 0
  %1520 = vmatprep.subr.bf16.mxu0 0
  %1521 = vmatpush2.bf16.msra.mxu0 0
  %1522 = vmatprep.subr.bf16.mxu0 0
  %1523 = vmatpush2.bf16.msra.mxu0 0
  %1524 = vmatprep.mubr.bf16.mxu0 0
  %1525 = vmatmul.mubr.bf16.gmra.mxu0 %v41
  %v1526 = vpop.f32.mrf.mxu0
  %v1527 = vadd.f32 0.0, %v1526
  %v1528 = vpop.f32.mrf.mxu0
  %v1529 = vpop.f32.mrf.mxu0
  %v1530 = vpop.f32.mrf.mxu0
  %1531 = vdwg.mxu0
  %v1548 = vunpack.c.l.b16 %v268
  %v1549 = vunpack.c.l.b16 %v269
  %v1550 = vunpack.c.l.b16 %v270
  %v1551 = vunpack.c.l.b16 %v271
  %v1552 = vunpack.c.l.b16 %v272
  %v1553 = vunpack.c.l.b16 %v273
  %v1554 = vunpack.c.l.b16 %v274
  %v1555 = vunpack.c.l.b16 %v275
  %v1556 = vunpack.c.l.b16 %v276
  %v1557 = vunpack.c.l.b16 %v277
  %v1558 = vunpack.c.l.b16 %v278
  %v1559 = vunpack.c.l.b16 %v279
  %v1560 = vunpack.c.l.b16 %v280
  %v1561 = vunpack.c.l.b16 %v281
  %v1562 = vunpack.c.l.b16 %v282
  %v1563 = vunpack.c.l.b16 %v283
  %v1564 = vpack.c.b16 %v1549, %v1548
  %v1565 = vpack.c.b16 %v1551, %v1550
  %v1566 = vpack.c.b16 %v1553, %v1552
  %v1567 = vpack.c.b16 %v1555, %v1554
  %v1568 = vpack.c.b16 %v1557, %v1556
  %v1569 = vpack.c.b16 %v1559, %v1558
  %v1570 = vpack.c.b16 %v1561, %v1560
  %v1571 = vpack.c.b16 %v1563, %v1562
  %1580 = vmatprep.subr.bf16.mxu0 0
  %1581 = vmatpush1.bf16.msra.mxu0 %v1571
  %1582 = vmatprep.subr.bf16.mxu0 0
  %1583 = vmatpush1.bf16.msra.mxu0 %v1570
  %1584 = vmatprep.subr.bf16.mxu0 0
  %1585 = vmatpush1.bf16.msra.mxu0 %v1569
  %1586 = vmatprep.subr.bf16.mxu0 0
  %1587 = vmatpush1.bf16.msra.mxu0 %v1568
  %1588 = vmatprep.subr.bf16.mxu0 0
  %1589 = vmatpush1.bf16.msra.mxu0 %v1567
  %1590 = vmatprep.subr.bf16.mxu0 0
  %1591 = vmatpush1.bf16.msra.mxu0 %v1566
  %1592 = vmatprep.subr.bf16.mxu0 0
  %1593 = vmatpush1.bf16.msra.mxu0 %v1565
  %1594 = vmatprep.subr.bf16.mxu0 0
  %1595 = vmatpush1.bf16.msra.mxu0 %v1564
  %1596 = vmatprep.subr.bf16.mxu0 0
  %1597 = vmatpush2.bf16.msra.mxu0 0
  %1598 = vmatprep.subr.bf16.mxu0 0
  %1599 = vmatpush2.bf16.msra.mxu0 0
  %1600 = vmatprep.subr.bf16.mxu0 0
  %1601 = vmatpush2.bf16.msra.mxu0 0
  %1602 = vmatprep.subr.bf16.mxu0 0
  %1603 = vmatpush2.bf16.msra.mxu0 0
  %1604 = vmatprep.subr.bf16.mxu0 0
  %1605 = vmatpush2.bf16.msra.mxu0 0
  %1606 = vmatprep.subr.bf16.mxu0 0
  %1607 = vmatpush2.bf16.msra.mxu0 0
  %1608 = vmatprep.subr.bf16.mxu0 0
  %1609 = vmatpush2.bf16.msra.mxu0 0
  %1610 = vmatprep.subr.bf16.mxu0 0
  %1611 = vmatpush2.bf16.msra.mxu0 0
  %1612 = vmatprep.mubr.bf16.mxu0 0
  %1613 = vmatmul.mubr.bf16.gmra.mxu0 %v42
  %v1614 = vpop.f32.mrf.mxu0
  %v1615 = vadd.f32 0.0, %v1614
  %v1616 = vpop.f32.mrf.mxu0
  %v1617 = vpop.f32.mrf.mxu0
  %v1618 = vpop.f32.mrf.mxu0
  %1619 = vdwg.mxu0
  %v1636 = vunpack.c.l.b16 %v284
  %v1637 = vunpack.c.l.b16 %v285
  %v1638 = vunpack.c.l.b16 %v286
  %v1639 = vunpack.c.l.b16 %v287
  %v1640 = vunpack.c.l.b16 %v288
  %v1641 = vunpack.c.l.b16 %v289
  %v1642 = vunpack.c.l.b16 %v290
  %v1643 = vunpack.c.l.b16 %v291
  %v1644 = vunpack.c.l.b16 %v292
  %v1645 = vunpack.c.l.b16 %v293
  %v1646 = vunpack.c.l.b16 %v294
  %v1647 = vunpack.c.l.b16 %v295
  %v1648 = vunpack.c.l.b16 %v296
  %v1649 = vunpack.c.l.b16 %v297
  %v1650 = vunpack.c.l.b16 %v298
  %v1651 = vunpack.c.l.b16 %v299
  %v1652 = vpack.c.b16 %v1637, %v1636
  %v1653 = vpack.c.b16 %v1639, %v1638
  %v1654 = vpack.c.b16 %v1641, %v1640
  %v1655 = vpack.c.b16 %v1643, %v1642
  %v1656 = vpack.c.b16 %v1645, %v1644
  %v1657 = vpack.c.b16 %v1647, %v1646
  %v1658 = vpack.c.b16 %v1649, %v1648
  %v1659 = vpack.c.b16 %v1651, %v1650
  %1668 = vmatprep.subr.bf16.mxu0 0
  %1669 = vmatpush1.bf16.msra.mxu0 %v1659
  %1670 = vmatprep.subr.bf16.mxu0 0
  %1671 = vmatpush1.bf16.msra.mxu0 %v1658
  %1672 = vmatprep.subr.bf16.mxu0 0
  %1673 = vmatpush1.bf16.msra.mxu0 %v1657
  %1674 = vmatprep.subr.bf16.mxu0 0
  %1675 = vmatpush1.bf16.msra.mxu0 %v1656
  %1676 = vmatprep.subr.bf16.mxu0 0
  %1677 = vmatpush1.bf16.msra.mxu0 %v1655
  %1678 = vmatprep.subr.bf16.mxu0 0
  %1679 = vmatpush1.bf16.msra.mxu0 %v1654
  %1680 = vmatprep.subr.bf16.mxu0 0
  %1681 = vmatpush1.bf16.msra.mxu0 %v1653
  %1682 = vmatprep.subr.bf16.mxu0 0
  %1683 = vmatpush1.bf16.msra.mxu0 %v1652
  %1684 = vmatprep.subr.bf16.mxu0 0
  %1685 = vmatpush2.bf16.msra.mxu0 0
  %1686 = vmatprep.subr.bf16.mxu0 0
  %1687 = vmatpush2.bf16.msra.mxu0 0
  %1688 = vmatprep.subr.bf16.mxu0 0
  %1689 = vmatpush2.bf16.msra.mxu0 0
  %1690 = vmatprep.subr.bf16.mxu0 0
  %1691 = vmatpush2.bf16.msra.mxu0 0
  %1692 = vmatprep.subr.bf16.mxu0 0
  %1693 = vmatpush2.bf16.msra.mxu0 0
  %1694 = vmatprep.subr.bf16.mxu0 0
  %1695 = vmatpush2.bf16.msra.mxu0 0
  %1696 = vmatprep.subr.bf16.mxu0 0
  %1697 = vmatpush2.bf16.msra.mxu0 0
  %1698 = vmatprep.subr.bf16.mxu0 0
  %1699 = vmatpush2.bf16.msra.mxu0 0
  %1700 = vmatprep.mubr.bf16.mxu0 0
  %1701 = vmatmul.mubr.bf16.gmra.mxu0 %v43
  %v1702 = vpop.f32.mrf.mxu0
  %v1703 = vadd.f32 0.0, %v1702
  %v1704 = vpop.f32.mrf.mxu0
  %v1705 = vpop.f32.mrf.mxu0
  %v1706 = vpop.f32.mrf.mxu0
  %1707 = vdwg.mxu0
  %1708 = vst [vmem:[%s2] sm:$0x3] %v383
  %1709 = vst [vmem:[%s2 + $0x2] sm:$0x3] %v471
  %1710 = vst [vmem:[%s2 + $0x4] sm:$0x3] %v559
  %1711 = vst [vmem:[%s2 + $0x6] sm:$0x3] %v647
  %1712 = vst [vmem:[%s2 + $0x8] sm:$0x3] %v735
  %1713 = vst [vmem:[%s2 + $0xa] sm:$0x3] %v823
  %1714 = vst [vmem:[%s2 + $0xc] sm:$0x3] %v911
  %1715 = vst [vmem:[%s2 + $0xe] sm:$0x3] %v999
  %1716 = vst [vmem:[%s2 + $0x10] sm:$0x3] %v1087
  %1717 = vst [vmem:[%s2 + $0x12] sm:$0x3] %v1175
  %1718 = vst [vmem:[%s2 + $0x14] sm:$0x3] %v1263
  %1719 = vst [vmem:[%s2 + $0x16] sm:$0x3] %v1351
  %1720 = vst [vmem:[%s2 + $0x18] sm:$0x3] %v1439
  %1721 = vst [vmem:[%s2 + $0x1a] sm:$0x3] %v1527
  %1722 = vst [vmem:[%s2 + $0x1c] sm:$0x3] %v1615
  %1723 = vst [vmem:[%s2 + $0x1e] sm:$0x3] %v1703
  // Predicated region
  $region10: #{fno_mu_std_forward.7} parent=0 // pred_check
    _
  $region11: #{fno_mu_std_forward.7} parent=0 // pred_check_branch
    %1725 = sbr.rel (0) target = $region13
  $region12: #{fno_mu_std_forward.7} parent=0 // pred_region
    _
  $region13: #{fno_mu_std_forward.7} parent=0 // pred_fallthru
    _
  // Predicated region
  $region14: #{fno_mu_std_forward.7} parent=0 // pred_check
    _
  $region15: #{fno_mu_std_forward.7} parent=0 // pred_check_branch
    %1727 = sbr.rel (0) target = $region17
  $region16: #{fno_mu_std_forward.7} parent=0 // pred_region
    _
  $region17: #{fno_mu_std_forward.7} parent=0 // pred_fallthru
    _

// kernel: reverse.4
$region0: #{reverse.4}
  #allocation0 [shape = 's32[1]{0}', space=sflag, size = 0x4, scoped, tag = 'scoped memory for reverse.4']
  %s0 = inlined_call_operand.vmem [shape: f32[2,32,20,9], index: 0, kind: input, shape index: {}]
  %s1 = inlined_call_operand.vmem [shape: f32[2,32,20,9], index: 1, kind: output, shape index: {}]
  %s2 = scalar_lea.vmem %s0, 192
  %v3 = vld [vmem:[%s2] sm:$0xff]
  %4 = vst [vmem:[%s1] sm:$0xff] %v3
  %s5 = scalar_lea.vmem %s0, 408
  %v6 = vld [vmem:[%s5] sm:$0xff]
  %s7 = scalar_lea.vmem %s1, 216
  %8 = vst [vmem:[%s7] sm:$0xff] %v6
  %s9 = scalar_lea.vmem %s0, 168
  %v10 = vld [vmem:[%s9] sm:$0xff]
  %s11 = scalar_lea.vmem %s1, 24
  %12 = vst [vmem:[%s11] sm:$0xff] %v10
  %s13 = scalar_lea.vmem %s0, 384
  %v14 = vld [vmem:[%s13] sm:$0xff]
  %s15 = scalar_lea.vmem %s1, 240
  %16 = vst [vmem:[%s15] sm:$0xff] %v14
  %s17 = scalar_lea.vmem %s0, 144
  %v18 = vld [vmem:[%s17] sm:$0xff]
  %s19 = scalar_lea.vmem %s1, 48
  %20 = vst [vmem:[%s19] sm:$0xff] %v18
  %s21 = scalar_lea.vmem %s0, 360
  %v22 = vld [vmem:[%s21] sm:$0xff]
  %s23 = scalar_lea.vmem %s1, 264
  %24 = vst [vmem:[%s23] sm:$0xff] %v22
  %s25 = scalar_lea.vmem %s0, 120
  %v26 = vld [vmem:[%s25] sm:$0xff]
  %s27 = scalar_lea.vmem %s1, 72
  %28 = vst [vmem:[%s27] sm:$0xff] %v26
  %s29 = scalar_lea.vmem %s0, 336
  %v30 = vld [vmem:[%s29] sm:$0xff]
  %s31 = scalar_lea.vmem %s1, 288
  %32 = vst [vmem:[%s31] sm:$0xff] %v30
  %s33 = scalar_lea.vmem %s0, 96
  %v34 = vld [vmem:[%s33] sm:$0xff]
  %s35 = scalar_lea.vmem %s1, 96
  %36 = vst [vmem:[%s35] sm:$0xff] %v34
  %s37 = scalar_lea.vmem %s0, 312
  %v38 = vld [vmem:[%s37] sm:$0xff]
  %s39 = scalar_lea.vmem %s1, 312
  %40 = vst [vmem:[%s39] sm:$0xff] %v38
  %s41 = scalar_lea.vmem %s0, 72
  %v42 = vld [vmem:[%s41] sm:$0xff]
  %s43 = scalar_lea.vmem %s1, 120
  %44 = vst [vmem:[%s43] sm:$0xff] %v42
  %s45 = scalar_lea.vmem %s0, 288
  %v46 = vld [vmem:[%s45] sm:$0xff]
  %s47 = scalar_lea.vmem %s1, 336
  %48 = vst [vmem:[%s47] sm:$0xff] %v46
  %s49 = scalar_lea.vmem %s0, 48
  %v50 = vld [vmem:[%s49] sm:$0xff]
  %s51 = scalar_lea.vmem %s1, 144
  %52 = vst [vmem:[%s51] sm:$0xff] %v50
  %s53 = scalar_lea.vmem %s0, 264
  %v54 = vld [vmem:[%s53] sm:$0xff]
  %s55 = scalar_lea.vmem %s1, 360
  %56 = vst [vmem:[%s55] sm:$0xff] %v54
  %s57 = scalar_lea.vmem %s0, 24
  %v58 = vld [vmem:[%s57] sm:$0xff]
  %s59 = scalar_lea.vmem %s1, 168
  %60 = vst [vmem:[%s59] sm:$0xff] %v58
  %s61 = scalar_lea.vmem %s0, 240
  %v62 = vld [vmem:[%s61] sm:$0xff]
  %s63 = scalar_lea.vmem %s1, 384
  %64 = vst [vmem:[%s63] sm:$0xff] %v62
  %v65 = vld [vmem:[%s0] sm:$0xff]
  %s66 = scalar_lea.vmem %s1, 192
  %67 = vst [vmem:[%s66] sm:$0xff] %v65
  %s68 = scalar_lea.vmem %s0, 216
  %v69 = vld [vmem:[%s68] sm:$0xff]
  %s70 = scalar_lea.vmem %s1, 408
  %71 = vst [vmem:[%s70] sm:$0xff] %v69
  %s72 = scalar_lea.vmem %s0, 200
  %v73 = vld [vmem:[%s72] sm:$0xff]
  %s74 = scalar_lea.vmem %s1, 8
  %75 = vst [vmem:[%s74] sm:$0xff] %v73
  %s76 = scalar_lea.vmem %s0, 416
  %v77 = vld [vmem:[%s76] sm:$0xff]
  %s78 = scalar_lea.vmem %s1, 224
  %79 = vst [vmem:[%s78] sm:$0xff] %v77
  %s80 = scalar_lea.vmem %s0, 176
  %v81 = vld [vmem:[%s80] sm:$0xff]
  %s82 = scalar_lea.vmem %s1, 32
  %83 = vst [vmem:[%s82] sm:$0xff] %v81
  %s84 = scalar_lea.vmem %s0, 392
  %v85 = vld [vmem:[%s84] sm:$0xff]
  %s86 = scalar_lea.vmem %s1, 248
  %87 = vst [vmem:[%s86] sm:$0xff] %v85
  %s88 = scalar_lea.vmem %s0, 152
  %v89 = vld [vmem:[%s88] sm:$0xff]
  %s90 = scalar_lea.vmem %s1, 56
  %91 = vst [vmem:[%s90] sm:$0xff] %v89
  %s92 = scalar_lea.vmem %s0, 368
  %v93 = vld [vmem:[%s92] sm:$0xff]
  %s94 = scalar_lea.vmem %s1, 272
  %95 = vst [vmem:[%s94] sm:$0xff] %v93
  %s96 = scalar_lea.vmem %s0, 128
  %v97 = vld [vmem:[%s96] sm:$0xff]
  %s98 = scalar_lea.vmem %s1, 80
  %99 = vst [vmem:[%s98] sm:$0xff] %v97
  %s100 = scalar_lea.vmem %s0, 344
  %v101 = vld [vmem:[%s100] sm:$0xff]
  %s102 = scalar_lea.vmem %s1, 296
  %103 = vst [vmem:[%s102] sm:$0xff] %v101
  %s104 = scalar_lea.vmem %s0, 104
  %v105 = vld [vmem:[%s104] sm:$0xff]
  %s106 = scalar_lea.vmem %s1, 104
  %107 = vst [vmem:[%s106] sm:$0xff] %v105
  %s108 = scalar_lea.vmem %s0, 320
  %v109 = vld [vmem:[%s108] sm:$0xff]
  %s110 = scalar_lea.vmem %s1, 320
  %111 = vst [vmem:[%s110] sm:$0xff] %v109
  %s112 = scalar_lea.vmem %s0, 80
  %v113 = vld [vmem:[%s112] sm:$0xff]
  %s114 = scalar_lea.vmem %s1, 128
  %115 = vst [vmem:[%s114] sm:$0xff] %v113
  %s116 = scalar_lea.vmem %s0, 296
  %v117 = vld [vmem:[%s116] sm:$0xff]
  %s118 = scalar_lea.vmem %s1, 344
  %119 = vst [vmem:[%s118] sm:$0xff] %v117
  %s120 = scalar_lea.vmem %s0, 56
  %v121 = vld [vmem:[%s120] sm:$0xff]
  %s122 = scalar_lea.vmem %s1, 152
  %123 = vst [vmem:[%s122] sm:$0xff] %v121
  %s124 = scalar_lea.vmem %s0, 272
  %v125 = vld [vmem:[%s124] sm:$0xff]
  %s126 = scalar_lea.vmem %s1, 368
  %127 = vst [vmem:[%s126] sm:$0xff] %v125
  %s128 = scalar_lea.vmem %s0, 32
  %v129 = vld [vmem:[%s128] sm:$0xff]
  %s130 = scalar_lea.vmem %s1, 176
  %131 = vst [vmem:[%s130] sm:$0xff] %v129
  %s132 = scalar_lea.vmem %s0, 248
  %v133 = vld [vmem:[%s132] sm:$0xff]
  %s134 = scalar_lea.vmem %s1, 392
  %135 = vst [vmem:[%s134] sm:$0xff] %v133
  %s136 = scalar_lea.vmem %s0, 8
  %v137 = vld [vmem:[%s136] sm:$0xff]
  %s138 = scalar_lea.vmem %s1, 200
  %139 = vst [vmem:[%s138] sm:$0xff] %v137
  %s140 = scalar_lea.vmem %s0, 224
  %v141 = vld [vmem:[%s140] sm:$0xff]
  %s142 = scalar_lea.vmem %s1, 416
  %143 = vst [vmem:[%s142] sm:$0xff] %v141
  %s144 = scalar_lea.vmem %s0, 208
  %v145 = vld [vmem:[%s144] sm:$0xff]
  %s146 = scalar_lea.vmem %s1, 16
  %147 = vst [vmem:[%s146] sm:$0xff] %v145
  %s148 = scalar_lea.vmem %s0, 424
  %v149 = vld [vmem:[%s148] sm:$0xff]
  %s150 = scalar_lea.vmem %s1, 232
  %151 = vst [vmem:[%s150] sm:$0xff] %v149
  %s152 = scalar_lea.vmem %s0, 184
  %v153 = vld [vmem:[%s152] sm:$0xff]
  %s154 = scalar_lea.vmem %s1, 40
  %155 = vst [vmem:[%s154] sm:$0xff] %v153
  %s156 = scalar_lea.vmem %s0, 400
  %v157 = vld [vmem:[%s156] sm:$0xff]
  %s158 = scalar_lea.vmem %s1, 256
  %159 = vst [vmem:[%s158] sm:$0xff] %v157
  %s160 = scalar_lea.vmem %s0, 160
  %v161 = vld [vmem:[%s160] sm:$0xff]
  %s162 = scalar_lea.vmem %s1, 64
  %163 = vst [vmem:[%s162] sm:$0xff] %v161
  %s164 = scalar_lea.vmem %s0, 376
  %v165 = vld [vmem:[%s164] sm:$0xff]
  %s166 = scalar_lea.vmem %s1, 280
  %167 = vst [vmem:[%s166] sm:$0xff] %v165
  %s168 = scalar_lea.vmem %s0, 136
  %v169 = vld [vmem:[%s168] sm:$0xff]
  %s170 = scalar_lea.vmem %s1, 88
  %171 = vst [vmem:[%s170] sm:$0xff] %v169
  %s172 = scalar_lea.vmem %s0, 352
  %v173 = vld [vmem:[%s172] sm:$0xff]
  %s174 = scalar_lea.vmem %s1, 304
  %175 = vst [vmem:[%s174] sm:$0xff] %v173
  %s176 = scalar_lea.vmem %s0, 112
  %v177 = vld [vmem:[%s176] sm:$0xff]
  %s178 = scalar_lea.vmem %s1, 112
  %179 = vst [vmem:[%s178] sm:$0xff] %v177
  %s180 = scalar_lea.vmem %s0, 328
  %v181 = vld [vmem:[%s180] sm:$0xff]
  %s182 = scalar_lea.vmem %s1, 328
  %183 = vst [vmem:[%s182] sm:$0xff] %v181
  %s184 = scalar_lea.vmem %s0, 88
  %v185 = vld [vmem:[%s184] sm:$0xff]
  %s186 = scalar_lea.vmem %s1, 136
  %187 = vst [vmem:[%s186] sm:$0xff] %v185
  %s188 = scalar_lea.vmem %s0, 304
  %v189 = vld [vmem:[%s188] sm:$0xff]
  %s190 = scalar_lea.vmem %s1, 352
  %191 = vst [vmem:[%s190] sm:$0xff] %v189
  %s192 = scalar_lea.vmem %s0, 64
  %v193 = vld [vmem:[%s192] sm:$0xff]
  %s194 = scalar_lea.vmem %s1, 160
  %195 = vst [vmem:[%s194] sm:$0xff] %v193
  %s196 = scalar_lea.vmem %s0, 280
  %v197 = vld [vmem:[%s196] sm:$0xff]
  %s198 = scalar_lea.vmem %s1, 376
  %199 = vst [vmem:[%s198] sm:$0xff] %v197
  %s200 = scalar_lea.vmem %s0, 40
  %v201 = vld [vmem:[%s200] sm:$0xff]
  %s202 = scalar_lea.vmem %s1, 184
  %203 = vst [vmem:[%s202] sm:$0xff] %v201
  %s204 = scalar_lea.vmem %s0, 256
  %v205 = vld [vmem:[%s204] sm:$0xff]
  %s206 = scalar_lea.vmem %s1, 400
  %207 = vst [vmem:[%s206] sm:$0xff] %v205
  %s208 = scalar_lea.vmem %s0, 16
  %v209 = vld [vmem:[%s208] sm:$0xff]
  %s210 = scalar_lea.vmem %s1, 208
  %211 = vst [vmem:[%s210] sm:$0xff] %v209
  %s212 = scalar_lea.vmem %s0, 232
  %v213 = vld [vmem:[%s212] sm:$0xff]
  %s214 = scalar_lea.vmem %s1, 424
  %215 = vst [vmem:[%s214] sm:$0xff] %v213

// kernel: fno_mu_std_forward.8
$region0: #{fno_mu_std_forward.8}
  #allocation0 [shape = 'u32[]', space=smem, size = 0x4, offset = 0x4, fixed_abs, tag = 'smem constant byte address 0x4 - core index']
  #allocation1 [shape = 'u32[144,128]{1,0:T(1,128)}', space=vmem, size = 0x12000, scoped, tag = 'internal scratch']
  %s0 = inlined_call_operand.vmem [shape: f32[2,32,400], index: 0, kind: input, shape index: {}]
  %s1 = inlined_call_operand.vmem [shape: bf16[32,32], index: 1, kind: input, shape index: {}]
  %s2 = inlined_call_operand.vmem [shape: f32[32,1], index: 2, kind: input, shape index: {}]
  %s3 = inlined_call_operand.vmem [shape: f32[2,32,400], index: 3, kind: input, shape index: {}]
  %s4 = inlined_call_operand.vmem [shape: f32[2,32,400], index: 4, kind: output, shape index: {}]
  %s5 = sld [smem:[#allocation0]]
  $region49: #{fno_mu_std_forward.8} parent=0
    _
  %s7 = ssub.s32 1, %s5
  %s8 = scalar_select 0, %s7, %s5
  loop: start=0, step=1, limit=4
  $region2: #{fno_mu_std_forward.8} parent=0 // loop_pre_header
    _
  $region3: #{fno_mu_std_forward.8} parent=0 // loop_header
    %s10 = sphi 0, %s14
    %p11 = scmp.ge.s32.totalorder %s10, 4
    %s17 = sphi 0, %s29
    %s18 = sphi 0, %s25
    %s19 = sphi 0, %s17
    %s20 = sphi 0, %s18
    %s21 = sphi 0, %s19
    %s22 = sphi 0, %s20
    %s34 = sphi 0, %s36
    %s37 = sphi 0, %s34
    %s38 = sphi 0, %s37
    %s54 = sphi 0, %s38
    %s58 = sphi 0, %s58
    %s60 = sphi 0, %s58
    %s61 = sphi 0, %s60
    %s75 = sphi 0, %s61
    %s79 = sphi 0, %s79
    %s81 = sphi 0, %s79
    %s82 = sphi 0, %s81
    %s96 = sphi 0, %s82
    %s104 = sphi 0, %s106
    %s107 = sphi 0, %s104
    %s108 = sphi 0, %s107
    %s124 = sphi 0, %s108
    %s132 = sphi 0, %s134
    %s135 = sphi 0, %s132
    %s136 = sphi 0, %s135
    %s152 = sphi 0, %s136
  $region4: #{fno_mu_std_forward.8} parent=0 // loop_header_branch
    %13 = sbr.rel (%p11) target = $region8
  $region5: #{fno_mu_std_forward.8} parent=0 // loop_body
    %s15 = ssub.s32 %s10, 1
    %s16 = ssub.s32 %s10, 2
    %s23 = sadd.s32 1, %s18
    %p24 = scmp.ge.s32.totalorder %s23, 1
    %s25 = scalar_select %p24, 0, %s23
    %s26 = sadd.s32 1, %s17
    %s27 = scalar_select %p24, %s26, %s17
    %p28 = scmp.ge.s32.totalorder %s27, 2
    %s29 = scalar_select %p28, 0, %s27
    %s30 = ssub.s32 %s17, %s29
    %s31 = ssub.s32 %s18, %s25
    %s32 = sor.u32 %s30, %s31
    %p33 = scmp.eq.s32.totalorder %s32, 0
    %s35 = sadd.s32 %s34, 1
    %s36 = scalar_select %p33, %s34, %s35
    %p39 = pneg %p33
    %p40 = scmp.eq.s32.totalorder %s10, 1
    %p41 = por %p39, %p40
    %p42 = scmp.ne.s32.totalorder %s34, %s37
    %p43 = scmp.eq.s32.totalorder %s10, 0
    %p44 = por %p42, %p43
    %p45 = scmp.ne.s32.totalorder %s34, %s37
    %p46 = scmp.eq.s32.totalorder %s15, 1
    %p47 = por %p45, %p46
    %p48 = scmp.ne.s32.totalorder %s37, %s38
    %p49 = scmp.eq.s32.totalorder %s15, 0
    %p50 = por %p48, %p49
    %p51 = scmp.ne.s32.totalorder %s37, %s38
    %p52 = scmp.eq.s32.totalorder %s16, 1
    %p53 = por %p51, %p52
    %p55 = scmp.ne.s32.totalorder %s38, %s54
    %p56 = scmp.eq.s32.totalorder %s16, 0
    %p57 = por %p55, %p56
    %s59 = sadd.s32 %s58, 1
    %p62 = scmp.eq.s32.totalorder %s10, 1
    %p63 = scmp.ne.s32.totalorder %s58, %s60
    %p64 = scmp.eq.s32.totalorder %s10, 0
    %p65 = por %p63, %p64
    %p66 = scmp.ne.s32.totalorder %s58, %s60
    %p67 = scmp.eq.s32.totalorder %s15, 1
    %p68 = por %p66, %p67
    %p69 = scmp.ne.s32.totalorder %s60, %s61
    %p70 = scmp.eq.s32.totalorder %s15, 0
    %p71 = por %p69, %p70
    %p72 = scmp.ne.s32.totalorder %s60, %s61
    %p73 = scmp.eq.s32.totalorder %s16, 1
    %p74 = por %p72, %p73
    %p76 = scmp.ne.s32.totalorder %s61, %s75
    %p77 = scmp.eq.s32.totalorder %s16, 0
    %p78 = por %p76, %p77
    %s80 = sadd.s32 %s79, 1
    %p83 = scmp.eq.s32.totalorder %s10, 1
    %p84 = scmp.ne.s32.totalorder %s79, %s81
    %p85 = scmp.eq.s32.totalorder %s10, 0
    %p86 = por %p84, %p85
    %p87 = scmp.ne.s32.totalorder %s79, %s81
    %p88 = scmp.eq.s32.totalorder %s15, 1
    %p89 = por %p87, %p88
    %p90 = scmp.ne.s32.totalorder %s81, %s82
    %p91 = scmp.eq.s32.totalorder %s15, 0
    %p92 = por %p90, %p91
    %p93 = scmp.ne.s32.totalorder %s81, %s82
    %p94 = scmp.eq.s32.totalorder %s16, 1
    %p95 = por %p93, %p94
    %p97 = scmp.ne.s32.totalorder %s82, %s96
    %p98 = scmp.eq.s32.totalorder %s16, 0
    %p99 = por %p97, %p98
    %s100 = ssub.s32 %s17, %s29
    %s101 = ssub.s32 %s18, %s25
    %s102 = sor.u32 %s100, %s101
    %p103 = scmp.eq.s32.totalorder %s102, 0
    %s105 = sadd.s32 %s104, 1
    %s106 = scalar_select %p103, %s104, %s105
    %p109 = pneg %p103
    %p110 = scmp.eq.s32.totalorder %s10, 1
    %p111 = por %p109, %p110
    %p112 = scmp.ne.s32.totalorder %s104, %s107
    %p113 = scmp.eq.s32.totalorder %s10, 0
    %p114 = por %p112, %p113
    %p115 = scmp.ne.s32.totalorder %s104, %s107
    %p116 = scmp.eq.s32.totalorder %s15, 1
    %p117 = por %p115, %p116
    %p118 = scmp.ne.s32.totalorder %s107, %s108
    %p119 = scmp.eq.s32.totalorder %s15, 0
    %p120 = por %p118, %p119
    %p121 = scmp.ne.s32.totalorder %s107, %s108
    %p122 = scmp.eq.s32.totalorder %s16, 1
    %p123 = por %p121, %p122
    %p125 = scmp.ne.s32.totalorder %s108, %s124
    %p126 = scmp.eq.s32.totalorder %s16, 0
    %p127 = por %p125, %p126
    %s128 = ssub.s32 %s17, %s29
    %s129 = ssub.s32 %s18, %s25
    %s130 = sor.u32 %s128, %s129
    %p131 = scmp.eq.s32.totalorder %s130, 0
    %s133 = sadd.s32 %s132, 1
    %s134 = scalar_select %p131, %s132, %s133
    %p137 = pneg %p131
    %p138 = scmp.eq.s32.totalorder %s10, 1
    %p139 = por %p137, %p138
    %p140 = scmp.ne.s32.totalorder %s132, %s135
    %p141 = scmp.eq.s32.totalorder %s10, 0
    %p142 = por %p140, %p141
    %p143 = scmp.ne.s32.totalorder %s132, %s135
    %p144 = scmp.eq.s32.totalorder %s15, 1
    %p145 = por %p143, %p144
    %p146 = scmp.ne.s32.totalorder %s135, %s136
    %p147 = scmp.eq.s32.totalorder %s15, 0
    %p148 = por %p146, %p147
    %p149 = scmp.ne.s32.totalorder %s135, %s136
    %p150 = scmp.eq.s32.totalorder %s16, 1
    %p151 = por %p149, %p150
    %p153 = scmp.ne.s32.totalorder %s136, %s152
    %p154 = scmp.eq.s32.totalorder %s16, 0
    %p155 = por %p153, %p154
    %p156 = scmp.le.s32.totalorder 1, %s10
    %p157 = scmp.lt.s32.totalorder %s10, 3
    %p158 = pnand %p156, %p157
    %p159 = pneg %p158
    // Predicated region
    $region9: #{fno_mu_std_forward.8} parent=5 // pred_check
      _
    $region10: #{fno_mu_std_forward.8} parent=5 // pred_check_branch
      %161 = sbr.rel (%p158) target = $region12
    $region11: #{fno_mu_std_forward.8} parent=5 // pred_region
      %s162 = ssub.s32 %s10, 1
      // Predicated region
      $region13: #{fno_mu_std_forward.8} parent=11 // pred_check
        %p163 = pneg %p71
      $region14: #{fno_mu_std_forward.8} parent=11 // pred_check_branch
        %165 = sbr.rel (%p163) target = $region16
      $region15: #{fno_mu_std_forward.8} parent=11 // pred_region
        _
      $region16: #{fno_mu_std_forward.8} parent=11 // pred_fallthru
        _
      // Predicated region
      $region17: #{fno_mu_std_forward.8} parent=11 // pred_check
        %p166 = pneg %p92
      $region18: #{fno_mu_std_forward.8} parent=11 // pred_check_branch
        %168 = sbr.rel (%p166) target = $region20
      $region19: #{fno_mu_std_forward.8} parent=11 // pred_region
        _
      $region20: #{fno_mu_std_forward.8} parent=11 // pred_fallthru
        _
    $region12: #{fno_mu_std_forward.8} parent=5 // pred_fallthru
      _
    %p169 = scmp.lt.s32.totalorder %s10, 2
    // Predicated region
    $region21: #{fno_mu_std_forward.8} parent=5 // pred_check
      %p170 = pneg %p169
    $region22: #{fno_mu_std_forward.8} parent=5 // pred_check_branch
      %172 = sbr.rel (%p170) target = $region24
    $region23: #{fno_mu_std_forward.8} parent=5 // pred_region
      // Predicated region
      $region25: #{fno_mu_std_forward.8} parent=23 // pred_check
        %p173 = pneg %p44
      $region26: #{fno_mu_std_forward.8} parent=23 // pred_check_branch
        %175 = sbr.rel (%p173) target = $region28
      $region27: #{fno_mu_std_forward.8} parent=23 // pred_region
        %s176 = smul.u32 4, %s18
        %p177 = scmp.lt.s32.totalorder %s17, 1
        %s178 = scalar_select %p177, %s17, 1
        %p179 = scmp.lt.s32.totalorder %s176, 3
        %s180 = scalar_select %p179, %s176, 3
        %s181 = smul.addr %s178, 16
        %s182 = sadd.s32 %s180, %s181
        %s183 = smul.addr %s182, 8
        %s184 = scalar_lea.vmem %s0, %s183
        %s185 = smul.u32 4, %s18
      $region28: #{fno_mu_std_forward.8} parent=23 // pred_fallthru
        _
      // Predicated region
      $region29: #{fno_mu_std_forward.8} parent=23 // pred_check
        %p186 = pneg %p114
      $region30: #{fno_mu_std_forward.8} parent=23 // pred_check_branch
        %188 = sbr.rel (%p186) target = $region32
      $region31: #{fno_mu_std_forward.8} parent=23 // pred_region
        %s189 = smul.u32 4, %s18
        %p190 = scmp.lt.s32.totalorder %s17, 1
        %s191 = scalar_select %p190, %s17, 1
        %p192 = scmp.lt.s32.totalorder %s189, 3
        %s193 = scalar_select %p192, %s189, 3
        %s194 = smul.addr %s191, 16
        %s195 = sadd.s32 %s193, %s194
        %s196 = smul.addr %s195, 8
        %s197 = scalar_lea.vmem %s3, %s196
        %s198 = smul.u32 4, %s18
      $region32: #{fno_mu_std_forward.8} parent=23 // pred_fallthru
        _
    $region24: #{fno_mu_std_forward.8} parent=5 // pred_fallthru
      _
    %p199 = scmp.le.s32.totalorder 1, %s10
    %p200 = scmp.lt.s32.totalorder %s10, 3
    %p201 = pnand %p199, %p200
    %p202 = pneg %p201
    // Predicated region
    $region33: #{fno_mu_std_forward.8} parent=5 // pred_check
      _
    $region34: #{fno_mu_std_forward.8} parent=5 // pred_check_branch
      %204 = sbr.rel (%p201) target = $region36
    $region35: #{fno_mu_std_forward.8} parent=5 // pred_region
      %s205 = ssub.s32 %s10, 1
      %s206 = smul.u32 4, %s20
      %p207 = scmp.lt.s32.totalorder %s19, 1
      %s208 = scalar_select %p207, %s19, 1
      %p209 = scmp.lt.s32.totalorder %s206, 3
      %s210 = scalar_select %p209, %s206, 3
      %s211 = smul.addr %s208, 16
      %s212 = sadd.s32 %s210, %s211
      %s213 = smul.addr %s212, 8
      %s214 = scalar_lea.vmem %s0, %s213
      %p215 = pneg %p50
      %p216 = pneg %p47
      %p217 = pneg %p71
      %p218 = pneg %p68
      %p219 = pneg %p92
      %p220 = pneg %p89
      %s221 = smul.u32 4, %s20
      %p222 = scmp.lt.s32.totalorder %s19, 1
      %s223 = scalar_select %p222, %s19, 1
      %p224 = scmp.lt.s32.totalorder %s221, 3
      %s225 = scalar_select %p224, %s221, 3
      %s226 = smul.addr %s223, 16
      %s227 = sadd.s32 %s225, %s226
      %s228 = smul.addr %s227, 8
      %s229 = scalar_lea.vmem %s3, %s228
      %p230 = pneg %p120
      %p231 = pneg %p117
      %p232 = pneg %p148
      %p233 = pneg %p145
      %s234 = smul.u32 4, %s20
      %p235 = scmp.lt.s32.totalorder %s19, 1
      %s236 = scalar_select %p235, %s19, 1
      %p237 = scmp.lt.s32.totalorder %s234, 3
      %s238 = scalar_select %p237, %s234, 3
      %s239 = smul.addr %s236, 16
      %s240 = sadd.s32 %s238, %s239
      %s241 = smul.addr %s240, 8
      %s242 = scalar_lea.vmem %s4, %s241
      %s243 = smul.u32 4, %s20
      %p244 = scmp.lt.s32.totalorder %s19, 1
      %s245 = scalar_select %p244, %s19, 1
      %p246 = scmp.lt.s32.totalorder %s243, 3
      %s247 = scalar_select %p246, %s243, 3
      %s248 = smul.addr %s245, 16
      %s249 = sadd.s32 %s247, %s248
      %s250 = smul.addr %s249, 8
      %s251 = scalar_lea.vmem %s0, %s250
      %s252 = smul.u32 4, %s20
      %s253 = smul.u32 4, %s20
      %p254 = scmp.lt.s32.totalorder %s19, 1
      %s255 = scalar_select %p254, %s19, 1
      %p256 = scmp.lt.s32.totalorder %s253, 3
      %s257 = scalar_select %p256, %s253, 3
      %s258 = smul.addr %s255, 16
      %s259 = sadd.s32 %s257, %s258
      %s260 = smul.addr %s259, 8
      %s261 = scalar_lea.vmem %s3, %s260
      %s262 = smul.u32 4, %s20
      %s263 = smul.u32 4, %s20
      %p264 = scmp.lt.s32.totalorder %s19, 1
      %s265 = scalar_select %p264, %s19, 1
      %p266 = scmp.lt.s32.totalorder %s263, 3
      %s267 = scalar_select %p266, %s263, 3
      %s268 = smul.addr %s265, 16
      %s269 = sadd.s32 %s267, %s268
      %s270 = smul.addr %s269, 8
      %s271 = scalar_lea.vmem %s4, %s270
      %s272 = smul.u32 4, %s20
      %v274 = vld [vmem:[%s1] sm:$0xf]
      %v275 = vld [vmem:[%s1 + $0x4] sm:$0xf]
      %v276 = vld [vmem:[%s1 + $0x8] sm:$0xf]
      %v277 = vld [vmem:[%s1 + $0xc] sm:$0xf]
      %v278 = vld [vmem:[%s251] sm:$0xff]
      %v279 = vld [vmem:[%s251 + $0x8] sm:$0xff]
      %v280 = vld [vmem:[%s251 + $0x10] sm:$0xff]
      %v281 = vld [vmem:[%s251 + $0x18] sm:$0xff]
      %v282 = vld [vmem:[%s251 + $0x20] sm:$0xff]
      %v283 = vld [vmem:[%s251 + $0x28] sm:$0xff]
      %v284 = vld [vmem:[%s251 + $0x30] sm:$0xff]
      %v285 = vld [vmem:[%s251 + $0x38] sm:$0xff]
      %v286 = vld [vmem:[%s251 + $0x40] sm:$0xff]
      %v287 = vld [vmem:[%s251 + $0x48] sm:$0xff]
      %v288 = vld [vmem:[%s251 + $0x50] sm:$0xff]
      %v289 = vld [vmem:[%s251 + $0x58] sm:$0xff]
      %v290 = vld [vmem:[%s251 + $0x60] sm:$0xff]
      %v291 = vld [vmem:[%s251 + $0x68] sm:$0xff]
      %v292 = vld [vmem:[%s251 + $0x70] sm:$0xff]
      %v293 = vld [vmem:[%s251 + $0x78] sm:$0xff]
      %v294 = vpack.c.bf16 %v282, %v278
      %v295 = vpack.c.bf16 %v283, %v279
      %v296 = vpack.c.bf16 %v284, %v280
      %v297 = vpack.c.bf16 %v285, %v281
      %v298 = vpack.c.bf16 %v290, %v286
      %v299 = vpack.c.bf16 %v291, %v287
      %v300 = vpack.c.bf16 %v292, %v288
      %v301 = vpack.c.bf16 %v293, %v289
      %v302 = vld [vmem:[%s2] sm:$0xff]
      %v303 = vld [vmem:[%s2 + $0x8] sm:$0xff]
      %v304 = vld [vmem:[%s2 + $0x10] sm:$0xff]
      %v305 = vld [vmem:[%s2 + $0x18] sm:$0xff]
      %307 = vset.pattern.permute.xlu0 0
      %308 = vperm.xlu0 %307, %v302
      %v309 = vpop.permute.xlu0 %308
      %312 = vset.pattern.permute.xlu0 0
      %313 = vperm.xlu0 %312, %v303
      %v314 = vpop.permute.xlu0 %313
      %317 = vset.pattern.permute.xlu0 0
      %318 = vperm.xlu0 %317, %v304
      %v319 = vpop.permute.xlu0 %318
      %322 = vset.pattern.permute.xlu0 0
      %323 = vperm.xlu0 %322, %v305
      %v324 = vpop.permute.xlu0 %323
      %v330 = vunpack.c.l.b16 %v274
      %v331 = vunpack.c.l.b16 %v275
      %v332 = vunpack.c.l.b16 %v276
      %v333 = vunpack.c.l.b16 %v277
      %v334 = vpack.c.b16 %v331, %v330
      %v335 = vpack.c.b16 %v333, %v332
      %vm336 = vcmask 261120
      %v338 = vsel %vm336, %v334, 0
      %v341 = vsel %vm336, %v335, 0
      %343 = vmatprep.subr.bf16.mxu0 0
      %344 = vmatpush1.bf16.msra.mxu0 0
      %345 = vmatprep.subr.bf16.mxu0 0
      %346 = vmatpush1.bf16.msra.mxu0 0
      %347 = vmatprep.subr.bf16.mxu0 0
      %348 = vmatpush1.bf16.msra.mxu0 0
      %349 = vmatprep.subr.bf16.mxu0 0
      %350 = vmatpush1.bf16.msra.mxu0 0
      %351 = vmatprep.subr.bf16.mxu0 0
      %352 = vmatpush1.bf16.msra.mxu0 0
      %353 = vmatprep.subr.bf16.mxu0 0
      %354 = vmatpush1.bf16.msra.mxu0 0
      %355 = vmatprep.subr.bf16.mxu0 %v299
      %356 = vmatpush1.bf16.msra.mxu0 %v298
      %357 = vmatprep.subr.bf16.mxu0 %v295
      %358 = vmatpush1.bf16.msra.mxu0 %v294
      %359 = vmatprep.subr.bf16.mxu0 0
      %360 = vmatpush2.bf16.msra.mxu0 0
      %361 = vmatprep.subr.bf16.mxu0 0
      %362 = vmatpush2.bf16.msra.mxu0 0
      %363 = vmatprep.subr.bf16.mxu0 0
      %364 = vmatpush2.bf16.msra.mxu0 0
      %365 = vmatprep.subr.bf16.mxu0 0
      %366 = vmatpush2.bf16.msra.mxu0 0
      %367 = vmatprep.subr.bf16.mxu0 0
      %368 = vmatpush2.bf16.msra.mxu0 0
      %369 = vmatprep.subr.bf16.mxu0 0
      %370 = vmatpush2.bf16.msra.mxu0 0
      %371 = vmatprep.subr.bf16.mxu0 0
      %372 = vmatpush2.bf16.msra.mxu0 0
      %373 = vmatprep.subr.bf16.mxu0 0
      %374 = vmatpush2.bf16.msra.mxu0 0
      %375 = vmatprep.mubr.bf16.mxu0 0
      %376 = vmatmul.mubr.bf16.gmra.mxu0 %v338
      %v377 = vpop.f32.mrf.mxu0
      %v378 = vadd.f32 %v309, %v377
      %v379 = vpop.f32.mrf.mxu0
      %v380 = vadd.f32 %v309, %v379
      %v381 = vpop.f32.mrf.mxu0
      %v382 = vadd.f32 %v314, %v381
      %v383 = vpop.f32.mrf.mxu0
      %v384 = vadd.f32 %v314, %v383
      %385 = vmatprep.mubr.bf16.mxu0 0
      %386 = vmatmul.mubr.bf16.gmra.mxu0 %v341
      %v387 = vpop.f32.mrf.mxu0
      %v388 = vadd.f32 %v319, %v387
      %v389 = vpop.f32.mrf.mxu0
      %v390 = vadd.f32 %v319, %v389
      %v391 = vpop.f32.mrf.mxu0
      %v392 = vadd.f32 %v324, %v391
      %v393 = vpop.f32.mrf.mxu0
      %v394 = vadd.f32 %v324, %v393
      %395 = vdwg.mxu0
      %396 = vmatprep.subr.bf16.mxu0 0
      %397 = vmatpush1.bf16.msra.mxu0 0
      %398 = vmatprep.subr.bf16.mxu0 0
      %399 = vmatpush1.bf16.msra.mxu0 0
      %400 = vmatprep.subr.bf16.mxu0 0
      %401 = vmatpush1.bf16.msra.mxu0 0
      %402 = vmatprep.subr.bf16.mxu0 0
      %403 = vmatpush1.bf16.msra.mxu0 0
      %404 = vmatprep.subr.bf16.mxu0 0
      %405 = vmatpush1.bf16.msra.mxu0 0
      %406 = vmatprep.subr.bf16.mxu0 0
      %407 = vmatpush1.bf16.msra.mxu0 0
      %408 = vmatprep.subr.bf16.mxu0 %v301
      %409 = vmatpush1.bf16.msra.mxu0 %v300
      %410 = vmatprep.subr.bf16.mxu0 %v297
      %411 = vmatpush1.bf16.msra.mxu0 %v296
      %412 = vmatprep.subr.bf16.mxu0 0
      %413 = vmatpush2.bf16.msra.mxu0 0
      %414 = vmatprep.subr.bf16.mxu0 0
      %415 = vmatpush2.bf16.msra.mxu0 0
      %416 = vmatprep.subr.bf16.mxu0 0
      %417 = vmatpush2.bf16.msra.mxu0 0
      %418 = vmatprep.subr.bf16.mxu0 0
      %419 = vmatpush2.bf16.msra.mxu0 0
      %420 = vmatprep.subr.bf16.mxu0 0
      %421 = vmatpush2.bf16.msra.mxu0 0
      %422 = vmatprep.subr.bf16.mxu0 0
      %423 = vmatpush2.bf16.msra.mxu0 0
      %424 = vmatprep.subr.bf16.mxu0 0
      %425 = vmatpush2.bf16.msra.mxu0 0
      %426 = vmatprep.subr.bf16.mxu0 0
      %427 = vmatpush2.bf16.msra.mxu0 0
      %428 = vmatprep.mubr.bf16.mxu0 0
      %429 = vmatmul.mubr.bf16.gmra.mxu0 %v338
      %v430 = vpop.f32.mrf.mxu0
      %v431 = vadd.f32 %v309, %v430
      %v432 = vpop.f32.mrf.mxu0
      %v433 = vadd.f32 %v309, %v432
      %v434 = vpop.f32.mrf.mxu0
      %v435 = vadd.f32 %v314, %v434
      %v436 = vpop.f32.mrf.mxu0
      %v437 = vadd.f32 %v314, %v436
      %438 = vmatprep.mubr.bf16.mxu0 0
      %439 = vmatmul.mubr.bf16.gmra.mxu0 %v341
      %v440 = vpop.f32.mrf.mxu0
      %v441 = vadd.f32 %v319, %v440
      %v442 = vpop.f32.mrf.mxu0
      %v443 = vadd.f32 %v319, %v442
      %v444 = vpop.f32.mrf.mxu0
      %v445 = vadd.f32 %v324, %v444
      %v446 = vpop.f32.mrf.mxu0
      %v447 = vadd.f32 %v324, %v446
      %448 = vdwg.mxu0
      %v449 = vld [vmem:[%s261] sm:$0xff]
      %v450 = vld [vmem:[%s261 + $0x8] sm:$0xff]
      %v451 = vld [vmem:[%s261 + $0x10] sm:$0xff]
      %v452 = vld [vmem:[%s261 + $0x18] sm:$0xff]
      %v453 = vld [vmem:[%s261 + $0x20] sm:$0xff]
      %v454 = vld [vmem:[%s261 + $0x28] sm:$0xff]
      %v455 = vld [vmem:[%s261 + $0x30] sm:$0xff]
      %v456 = vld [vmem:[%s261 + $0x38] sm:$0xff]
      %v457 = vld [vmem:[%s261 + $0x40] sm:$0xff]
      %v458 = vld [vmem:[%s261 + $0x48] sm:$0xff]
      %v459 = vld [vmem:[%s261 + $0x50] sm:$0xff]
      %v460 = vld [vmem:[%s261 + $0x58] sm:$0xff]
      %v461 = vld [vmem:[%s261 + $0x60] sm:$0xff]
      %v462 = vld [vmem:[%s261 + $0x68] sm:$0xff]
      %v463 = vld [vmem:[%s261 + $0x70] sm:$0xff]
      %v464 = vld [vmem:[%s261 + $0x78] sm:$0xff]
      %v465 = vadd.f32 %v378, %v449
      %v466 = vadd.f32 %v380, %v450
      %v467 = vadd.f32 %v431, %v451
      %v468 = vadd.f32 %v433, %v452
      %v469 = vadd.f32 %v382, %v453
      %v470 = vadd.f32 %v384, %v454
      %v471 = vadd.f32 %v435, %v455
      %v472 = vadd.f32 %v437, %v456
      %v473 = vadd.f32 %v388, %v457
      %v474 = vadd.f32 %v390, %v458
      %v475 = vadd.f32 %v441, %v459
      %v476 = vadd.f32 %v443, %v460
      %v477 = vadd.f32 %v392, %v461
      %v478 = vadd.f32 %v394, %v462
      %v479 = vadd.f32 %v445, %v463
      %v480 = vadd.f32 %v447, %v464
      %v481 = vxor.u32 %v465, 2147483648
      %v482 = vxor.u32 %v466, 2147483648
      %v483 = vxor.u32 %v467, 2147483648
      %v484 = vxor.u32 %v468, 2147483648
      %v485 = vxor.u32 %v469, 2147483648
      %v486 = vxor.u32 %v470, 2147483648
      %v487 = vxor.u32 %v471, 2147483648
      %v488 = vxor.u32 %v472, 2147483648
      %v489 = vxor.u32 %v473, 2147483648
      %v490 = vxor.u32 %v474, 2147483648
      %v491 = vxor.u32 %v475, 2147483648
      %v492 = vxor.u32 %v476, 2147483648
      %v493 = vxor.u32 %v477, 2147483648
      %v494 = vxor.u32 %v478, 2147483648
      %v495 = vxor.u32 %v479, 2147483648
      %v496 = vxor.u32 %v480, 2147483648
      %v497 = vmul.f32 %v481, 1.442695
      %v498 = vpow.pop %v497
      %v499 = vmul.f32 %v482, 1.442695
      %v500 = vpow.pop %v499
      %v501 = vmul.f32 %v483, 1.442695
      %v502 = vpow.pop %v501
      %v503 = vmul.f32 %v484, 1.442695
      %v504 = vpow.pop %v503
      %v505 = vmul.f32 %v485, 1.442695
      %v506 = vpow.pop %v505
      %v507 = vmul.f32 %v486, 1.442695
      %v508 = vpow.pop %v507
      %v509 = vmul.f32 %v487, 1.442695
      %v510 = vpow.pop %v509
      %v511 = vmul.f32 %v488, 1.442695
      %v512 = vpow.pop %v511
      %v513 = vmul.f32 %v489, 1.442695
      %v514 = vpow.pop %v513
      %v515 = vmul.f32 %v490, 1.442695
      %v516 = vpow.pop %v515
      %v517 = vmul.f32 %v491, 1.442695
      %v518 = vpow.pop %v517
      %v519 = vmul.f32 %v492, 1.442695
      %v520 = vpow.pop %v519
      %v521 = vmul.f32 %v493, 1.442695
      %v522 = vpow.pop %v521
      %v523 = vmul.f32 %v494, 1.442695
      %v524 = vpow.pop %v523
      %v525 = vmul.f32 %v495, 1.442695
      %v526 = vpow.pop %v525
      %v527 = vmul.f32 %v496, 1.442695
      %v528 = vpow.pop %v527
      %v529 = vadd.f32 %v498, 1.0
      %v530 = vadd.f32 %v500, 1.0
      %v531 = vadd.f32 %v502, 1.0
      %v532 = vadd.f32 %v504, 1.0
      %v533 = vadd.f32 %v506, 1.0
      %v534 = vadd.f32 %v508, 1.0
      %v535 = vadd.f32 %v510, 1.0
      %v536 = vadd.f32 %v512, 1.0
      %v537 = vadd.f32 %v514, 1.0
      %v538 = vadd.f32 %v516, 1.0
      %v539 = vadd.f32 %v518, 1.0
      %v540 = vadd.f32 %v520, 1.0
      %v541 = vadd.f32 %v522, 1.0
      %v542 = vadd.f32 %v524, 1.0
      %v543 = vadd.f32 %v526, 1.0
      %v544 = vadd.f32 %v528, 1.0
      %v545 = vrcp.pop %v529
      %v546 = vmul.f32 1.0, %v545
      %v547 = vrcp.pop %v530
      %v548 = vmul.f32 1.0, %v547
      %v549 = vrcp.pop %v531
      %v550 = vmul.f32 1.0, %v549
      %v551 = vrcp.pop %v532
      %v552 = vmul.f32 1.0, %v551
      %v553 = vrcp.pop %v533
      %v554 = vmul.f32 1.0, %v553
      %v555 = vrcp.pop %v534
      %v556 = vmul.f32 1.0, %v555
      %v557 = vrcp.pop %v535
      %v558 = vmul.f32 1.0, %v557
      %v559 = vrcp.pop %v536
      %v560 = vmul.f32 1.0, %v559
      %v561 = vrcp.pop %v537
      %v562 = vmul.f32 1.0, %v561
      %v563 = vrcp.pop %v538
      %v564 = vmul.f32 1.0, %v563
      %v565 = vrcp.pop %v539
      %v566 = vmul.f32 1.0, %v565
      %v567 = vrcp.pop %v540
      %v568 = vmul.f32 1.0, %v567
      %v569 = vrcp.pop %v541
      %v570 = vmul.f32 1.0, %v569
      %v571 = vrcp.pop %v542
      %v572 = vmul.f32 1.0, %v571
      %v573 = vrcp.pop %v543
      %v574 = vmul.f32 1.0, %v573
      %v575 = vrcp.pop %v544
      %v576 = vmul.f32 1.0, %v575
      %v577 = vmul.f32 %v465, %v546
      %v578 = vmul.f32 %v466, %v548
      %v579 = vmul.f32 %v467, %v550
      %v580 = vmul.f32 %v468, %v552
      %v581 = vmul.f32 %v469, %v554
      %v582 = vmul.f32 %v470, %v556
      %v583 = vmul.f32 %v471, %v558
      %v584 = vmul.f32 %v472, %v560
      %v585 = vmul.f32 %v473, %v562
      %v586 = vmul.f32 %v474, %v564
      %v587 = vmul.f32 %v475, %v566
      %v588 = vmul.f32 %v476, %v568
      %v589 = vmul.f32 %v477, %v570
      %v590 = vmul.f32 %v478, %v572
      %v591 = vmul.f32 %v479, %v574
      %v592 = vmul.f32 %v480, %v576
      %593 = vst [vmem:[%s271] sm:$0xff] %v577
      %594 = vst [vmem:[%s271 + $0x8] sm:$0xff] %v578
      %595 = vst [vmem:[%s271 + $0x10] sm:$0xff] %v579
      %vm596 = vcmask 130048
      %597 = vst.msk [vmem:[%s271 + $0x18] sm:$0xff] %vm596, %v580
      %598 = vst [vmem:[%s271 + $0x20] sm:$0xff] %v581
      %599 = vst [vmem:[%s271 + $0x28] sm:$0xff] %v582
      %600 = vst [vmem:[%s271 + $0x30] sm:$0xff] %v583
      %601 = vst.msk [vmem:[%s271 + $0x38] sm:$0xff] %vm596, %v584
      %602 = vst [vmem:[%s271 + $0x40] sm:$0xff] %v585
      %603 = vst [vmem:[%s271 + $0x48] sm:$0xff] %v586
      %604 = vst [vmem:[%s271 + $0x50] sm:$0xff] %v587
      %605 = vst.msk [vmem:[%s271 + $0x58] sm:$0xff] %vm596, %v588
      %606 = vst [vmem:[%s271 + $0x60] sm:$0xff] %v589
      %607 = vst [vmem:[%s271 + $0x68] sm:$0xff] %v590
      %608 = vst [vmem:[%s271 + $0x70] sm:$0xff] %v591
      %609 = vst.msk [vmem:[%s271 + $0x78] sm:$0xff] %vm596, %v592
      %s610 = smul.u32 4, %s20
      %p611 = scmp.lt.s32.totalorder %s19, 1
      %s612 = scalar_select %p611, %s19, 1
      %p613 = scmp.lt.s32.totalorder %s610, 3
      %s614 = scalar_select %p613, %s610, 3
      %s615 = smul.addr %s612, 16
      %s616 = sadd.s32 %s614, %s615
      %s617 = smul.addr %s616, 8
      %s618 = scalar_lea.vmem %s4, %s617
      // Predicated region
      $region37: #{fno_mu_std_forward.8} parent=35 // pred_check
        %p619 = pneg %p145
      $region38: #{fno_mu_std_forward.8} parent=35 // pred_check_branch
        %621 = sbr.rel (%p619) target = $region40
      $region39: #{fno_mu_std_forward.8} parent=35 // pred_region
        %s622 = smul.u32 4, %s20
      $region40: #{fno_mu_std_forward.8} parent=35 // pred_fallthru
        _
    $region36: #{fno_mu_std_forward.8} parent=5 // pred_fallthru
      _
    %p623 = scmp.le.s32.totalorder 2, %s10
    // Predicated region
    $region41: #{fno_mu_std_forward.8} parent=5 // pred_check
      %p624 = pneg %p623
    $region42: #{fno_mu_std_forward.8} parent=5 // pred_check_branch
      %626 = sbr.rel (%p624) target = $region44
    $region43: #{fno_mu_std_forward.8} parent=5 // pred_region
      %s627 = ssub.s32 %s10, 2
      // Predicated region
      $region45: #{fno_mu_std_forward.8} parent=43 // pred_check
        %p628 = pneg %p151
      $region46: #{fno_mu_std_forward.8} parent=43 // pred_check_branch
        %630 = sbr.rel (%p628) target = $region48
      $region47: #{fno_mu_std_forward.8} parent=43 // pred_region
        %s631 = smul.u32 4, %s22
        %p632 = scmp.lt.s32.totalorder %s21, 1
        %s633 = scalar_select %p632, %s21, 1
        %p634 = scmp.lt.s32.totalorder %s631, 3
        %s635 = scalar_select %p634, %s631, 3
        %s636 = smul.addr %s633, 16
        %s637 = sadd.s32 %s635, %s636
        %s638 = smul.addr %s637, 8
        %s639 = scalar_lea.vmem %s4, %s638
      $region48: #{fno_mu_std_forward.8} parent=43 // pred_fallthru
        _
    $region44: #{fno_mu_std_forward.8} parent=5 // pred_fallthru
      _
  $region6: #{fno_mu_std_forward.8} parent=0 // loop_footer
    %s14 = sadd.s32 1, %s10
  $region7: #{fno_mu_std_forward.8} parent=0 // loop_footer_branch
    %9 = sbr.rel target = $region3
  $region8: #{fno_mu_std_forward.8} parent=0 // loop_exit
    _

// kernel: fno_mu_std_forward.10
$region0: #{fno_mu_std_forward.10}
  #allocation0 [shape = 'u32[]', space=smem, size = 0x4, offset = 0x4, fixed_abs, tag = 'smem constant byte address 0x4 - core index']
  #allocation1 [shape = 'u32[144,128]{1,0:T(1,128)}', space=vmem, size = 0x12000, scoped, tag = 'internal scratch']
  %s0 = inlined_call_operand.vmem [shape: f32[2,32,400], index: 0, kind: input, shape index: {}]
  %s1 = inlined_call_operand.vmem [shape: bf16[32,32], index: 1, kind: input, shape index: {}]
  %s2 = inlined_call_operand.vmem [shape: f32[32,1], index: 2, kind: input, shape index: {}]
  %s3 = inlined_call_operand.vmem [shape: f32[2,32,400], index: 3, kind: input, shape index: {}]
  %s4 = inlined_call_operand.vmem [shape: f32[2,32,400], index: 4, kind: output, shape index: {}]
  %s5 = sld [smem:[#allocation0]]
  $region49: #{fno_mu_std_forward.10} parent=0
    _
  %s7 = ssub.s32 1, %s5
  %s8 = scalar_select 0, %s7, %s5
  loop: start=0, step=1, limit=4
  $region2: #{fno_mu_std_forward.10} parent=0 // loop_pre_header
    _
  $region3: #{fno_mu_std_forward.10} parent=0 // loop_header
    %s10 = sphi 0, %s14
    %p11 = scmp.ge.s32.totalorder %s10, 4
    %s17 = sphi 0, %s29
    %s18 = sphi 0, %s25
    %s19 = sphi 0, %s17
    %s20 = sphi 0, %s18
    %s21 = sphi 0, %s19
    %s22 = sphi 0, %s20
    %s34 = sphi 0, %s36
    %s37 = sphi 0, %s34
    %s38 = sphi 0, %s37
    %s54 = sphi 0, %s38
    %s58 = sphi 0, %s58
    %s60 = sphi 0, %s58
    %s61 = sphi 0, %s60
    %s75 = sphi 0, %s61
    %s79 = sphi 0, %s79
    %s81 = sphi 0, %s79
    %s82 = sphi 0, %s81
    %s96 = sphi 0, %s82
    %s104 = sphi 0, %s106
    %s107 = sphi 0, %s104
    %s108 = sphi 0, %s107
    %s124 = sphi 0, %s108
    %s132 = sphi 0, %s134
    %s135 = sphi 0, %s132
    %s136 = sphi 0, %s135
    %s152 = sphi 0, %s136
  $region4: #{fno_mu_std_forward.10} parent=0 // loop_header_branch
    %13 = sbr.rel (%p11) target = $region8
  $region5: #{fno_mu_std_forward.10} parent=0 // loop_body
    %s15 = ssub.s32 %s10, 1
    %s16 = ssub.s32 %s10, 2
    %s23 = sadd.s32 1, %s18
    %p24 = scmp.ge.s32.totalorder %s23, 1
    %s25 = scalar_select %p24, 0, %s23
    %s26 = sadd.s32 1, %s17
    %s27 = scalar_select %p24, %s26, %s17
    %p28 = scmp.ge.s32.totalorder %s27, 2
    %s29 = scalar_select %p28, 0, %s27
    %s30 = ssub.s32 %s17, %s29
    %s31 = ssub.s32 %s18, %s25
    %s32 = sor.u32 %s30, %s31
    %p33 = scmp.eq.s32.totalorder %s32, 0
    %s35 = sadd.s32 %s34, 1
    %s36 = scalar_select %p33, %s34, %s35
    %p39 = pneg %p33
    %p40 = scmp.eq.s32.totalorder %s10, 1
    %p41 = por %p39, %p40
    %p42 = scmp.ne.s32.totalorder %s34, %s37
    %p43 = scmp.eq.s32.totalorder %s10, 0
    %p44 = por %p42, %p43
    %p45 = scmp.ne.s32.totalorder %s34, %s37
    %p46 = scmp.eq.s32.totalorder %s15, 1
    %p47 = por %p45, %p46
    %p48 = scmp.ne.s32.totalorder %s37, %s38
    %p49 = scmp.eq.s32.totalorder %s15, 0
    %p50 = por %p48, %p49
    %p51 = scmp.ne.s32.totalorder %s37, %s38
    %p52 = scmp.eq.s32.totalorder %s16, 1
    %p53 = por %p51, %p52
    %p55 = scmp.ne.s32.totalorder %s38, %s54
    %p56 = scmp.eq.s32.totalorder %s16, 0
    %p57 = por %p55, %p56
    %s59 = sadd.s32 %s58, 1
    %p62 = scmp.eq.s32.totalorder %s10, 1
    %p63 = scmp.ne.s32.totalorder %s58, %s60
    %p64 = scmp.eq.s32.totalorder %s10, 0
    %p65 = por %p63, %p64
    %p66 = scmp.ne.s32.totalorder %s58, %s60
    %p67 = scmp.eq.s32.totalorder %s15, 1
    %p68 = por %p66, %p67
    %p69 = scmp.ne.s32.totalorder %s60, %s61
    %p70 = scmp.eq.s32.totalorder %s15, 0
    %p71 = por %p69, %p70
    %p72 = scmp.ne.s32.totalorder %s60, %s61
    %p73 = scmp.eq.s32.totalorder %s16, 1
    %p74 = por %p72, %p73
    %p76 = scmp.ne.s32.totalorder %s61, %s75
    %p77 = scmp.eq.s32.totalorder %s16, 0
    %p78 = por %p76, %p77
    %s80 = sadd.s32 %s79, 1
    %p83 = scmp.eq.s32.totalorder %s10, 1
    %p84 = scmp.ne.s32.totalorder %s79, %s81
    %p85 = scmp.eq.s32.totalorder %s10, 0
    %p86 = por %p84, %p85
    %p87 = scmp.ne.s32.totalorder %s79, %s81
    %p88 = scmp.eq.s32.totalorder %s15, 1
    %p89 = por %p87, %p88
    %p90 = scmp.ne.s32.totalorder %s81, %s82
    %p91 = scmp.eq.s32.totalorder %s15, 0
    %p92 = por %p90, %p91
    %p93 = scmp.ne.s32.totalorder %s81, %s82
    %p94 = scmp.eq.s32.totalorder %s16, 1
    %p95 = por %p93, %p94
    %p97 = scmp.ne.s32.totalorder %s82, %s96
    %p98 = scmp.eq.s32.totalorder %s16, 0
    %p99 = por %p97, %p98
    %s100 = ssub.s32 %s17, %s29
    %s101 = ssub.s32 %s18, %s25
    %s102 = sor.u32 %s100, %s101
    %p103 = scmp.eq.s32.totalorder %s102, 0
    %s105 = sadd.s32 %s104, 1
    %s106 = scalar_select %p103, %s104, %s105
    %p109 = pneg %p103
    %p110 = scmp.eq.s32.totalorder %s10, 1
    %p111 = por %p109, %p110
    %p112 = scmp.ne.s32.totalorder %s104, %s107
    %p113 = scmp.eq.s32.totalorder %s10, 0
    %p114 = por %p112, %p113
    %p115 = scmp.ne.s32.totalorder %s104, %s107
    %p116 = scmp.eq.s32.totalorder %s15, 1
    %p117 = por %p115, %p116
    %p118 = scmp.ne.s32.totalorder %s107, %s108
    %p119 = scmp.eq.s32.totalorder %s15, 0
    %p120 = por %p118, %p119
    %p121 = scmp.ne.s32.totalorder %s107, %s108
    %p122 = scmp.eq.s32.totalorder %s16, 1
    %p123 = por %p121, %p122
    %p125 = scmp.ne.s32.totalorder %s108, %s124
    %p126 = scmp.eq.s32.totalorder %s16, 0
    %p127 = por %p125, %p126
    %s128 = ssub.s32 %s17, %s29
    %s129 = ssub.s32 %s18, %s25
    %s130 = sor.u32 %s128, %s129
    %p131 = scmp.eq.s32.totalorder %s130, 0
    %s133 = sadd.s32 %s132, 1
    %s134 = scalar_select %p131, %s132, %s133
    %p137 = pneg %p131
    %p138 = scmp.eq.s32.totalorder %s10, 1
    %p139 = por %p137, %p138
    %p140 = scmp.ne.s32.totalorder %s132, %s135
    %p141 = scmp.eq.s32.totalorder %s10, 0
    %p142 = por %p140, %p141
    %p143 = scmp.ne.s32.totalorder %s132, %s135
    %p144 = scmp.eq.s32.totalorder %s15, 1
    %p145 = por %p143, %p144
    %p146 = scmp.ne.s32.totalorder %s135, %s136
    %p147 = scmp.eq.s32.totalorder %s15, 0
    %p148 = por %p146, %p147
    %p149 = scmp.ne.s32.totalorder %s135, %s136
    %p150 = scmp.eq.s32.totalorder %s16, 1
    %p151 = por %p149, %p150
    %p153 = scmp.ne.s32.totalorder %s136, %s152
    %p154 = scmp.eq.s32.totalorder %s16, 0
    %p155 = por %p153, %p154
    %p156 = scmp.le.s32.totalorder 1, %s10
    %p157 = scmp.lt.s32.totalorder %s10, 3
    %p158 = pnand %p156, %p157
    %p159 = pneg %p158
    // Predicated region
    $region9: #{fno_mu_std_forward.10} parent=5 // pred_check
      _
    $region10: #{fno_mu_std_forward.10} parent=5 // pred_check_branch
      %161 = sbr.rel (%p158) target = $region12
    $region11: #{fno_mu_std_forward.10} parent=5 // pred_region
      %s162 = ssub.s32 %s10, 1
      // Predicated region
      $region13: #{fno_mu_std_forward.10} parent=11 // pred_check
        %p163 = pneg %p71
      $region14: #{fno_mu_std_forward.10} parent=11 // pred_check_branch
        %165 = sbr.rel (%p163) target = $region16
      $region15: #{fno_mu_std_forward.10} parent=11 // pred_region
        _
      $region16: #{fno_mu_std_forward.10} parent=11 // pred_fallthru
        _
      // Predicated region
      $region17: #{fno_mu_std_forward.10} parent=11 // pred_check
        %p166 = pneg %p92
      $region18: #{fno_mu_std_forward.10} parent=11 // pred_check_branch
        %168 = sbr.rel (%p166) target = $region20
      $region19: #{fno_mu_std_forward.10} parent=11 // pred_region
        _
      $region20: #{fno_mu_std_forward.10} parent=11 // pred_fallthru
        _
    $region12: #{fno_mu_std_forward.10} parent=5 // pred_fallthru
      _
    %p169 = scmp.lt.s32.totalorder %s10, 2
    // Predicated region
    $region21: #{fno_mu_std_forward.10} parent=5 // pred_check
      %p170 = pneg %p169
    $region22: #{fno_mu_std_forward.10} parent=5 // pred_check_branch
      %172 = sbr.rel (%p170) target = $region24
    $region23: #{fno_mu_std_forward.10} parent=5 // pred_region
      // Predicated region
      $region25: #{fno_mu_std_forward.10} parent=23 // pred_check
        %p173 = pneg %p44
      $region26: #{fno_mu_std_forward.10} parent=23 // pred_check_branch
        %175 = sbr.rel (%p173) target = $region28
      $region27: #{fno_mu_std_forward.10} parent=23 // pred_region
        %s176 = smul.u32 4, %s18
        %p177 = scmp.lt.s32.totalorder %s17, 1
        %s178 = scalar_select %p177, %s17, 1
        %p179 = scmp.lt.s32.totalorder %s176, 3
        %s180 = scalar_select %p179, %s176, 3
        %s181 = smul.addr %s178, 16
        %s182 = sadd.s32 %s180, %s181
        %s183 = smul.addr %s182, 8
        %s184 = scalar_lea.vmem %s0, %s183
        %s185 = smul.u32 4, %s18
      $region28: #{fno_mu_std_forward.10} parent=23 // pred_fallthru
        _
      // Predicated region
      $region29: #{fno_mu_std_forward.10} parent=23 // pred_check
        %p186 = pneg %p114
      $region30: #{fno_mu_std_forward.10} parent=23 // pred_check_branch
        %188 = sbr.rel (%p186) target = $region32
      $region31: #{fno_mu_std_forward.10} parent=23 // pred_region
        %s189 = smul.u32 4, %s18
        %p190 = scmp.lt.s32.totalorder %s17, 1
        %s191 = scalar_select %p190, %s17, 1
        %p192 = scmp.lt.s32.totalorder %s189, 3
        %s193 = scalar_select %p192, %s189, 3
        %s194 = smul.addr %s191, 16
        %s195 = sadd.s32 %s193, %s194
        %s196 = smul.addr %s195, 8
        %s197 = scalar_lea.vmem %s3, %s196
        %s198 = smul.u32 4, %s18
      $region32: #{fno_mu_std_forward.10} parent=23 // pred_fallthru
        _
    $region24: #{fno_mu_std_forward.10} parent=5 // pred_fallthru
      _
    %p199 = scmp.le.s32.totalorder 1, %s10
    %p200 = scmp.lt.s32.totalorder %s10, 3
    %p201 = pnand %p199, %p200
    %p202 = pneg %p201
    // Predicated region
    $region33: #{fno_mu_std_forward.10} parent=5 // pred_check
      _
    $region34: #{fno_mu_std_forward.10} parent=5 // pred_check_branch
      %204 = sbr.rel (%p201) target = $region36
    $region35: #{fno_mu_std_forward.10} parent=5 // pred_region
      %s205 = ssub.s32 %s10, 1
      %s206 = smul.u32 4, %s20
      %p207 = scmp.lt.s32.totalorder %s19, 1
      %s208 = scalar_select %p207, %s19, 1
      %p209 = scmp.lt.s32.totalorder %s206, 3
      %s210 = scalar_select %p209, %s206, 3
      %s211 = smul.addr %s208, 16
      %s212 = sadd.s32 %s210, %s211
      %s213 = smul.addr %s212, 8
      %s214 = scalar_lea.vmem %s0, %s213
      %p215 = pneg %p50
      %p216 = pneg %p47
      %p217 = pneg %p71
      %p218 = pneg %p68
      %p219 = pneg %p92
      %p220 = pneg %p89
      %s221 = smul.u32 4, %s20
      %p222 = scmp.lt.s32.totalorder %s19, 1
      %s223 = scalar_select %p222, %s19, 1
      %p224 = scmp.lt.s32.totalorder %s221, 3
      %s225 = scalar_select %p224, %s221, 3
      %s226 = smul.addr %s223, 16
      %s227 = sadd.s32 %s225, %s226
      %s228 = smul.addr %s227, 8
      %s229 = scalar_lea.vmem %s3, %s228
      %p230 = pneg %p120
      %p231 = pneg %p117
      %p232 = pneg %p148
      %p233 = pneg %p145
      %s234 = smul.u32 4, %s20
      %p235 = scmp.lt.s32.totalorder %s19, 1
      %s236 = scalar_select %p235, %s19, 1
      %p237 = scmp.lt.s32.totalorder %s234, 3
      %s238 = scalar_select %p237, %s234, 3
      %s239 = smul.addr %s236, 16
      %s240 = sadd.s32 %s238, %s239
      %s241 = smul.addr %s240, 8
      %s242 = scalar_lea.vmem %s4, %s241
      %s243 = smul.u32 4, %s20
      %p244 = scmp.lt.s32.totalorder %s19, 1
      %s245 = scalar_select %p244, %s19, 1
      %p246 = scmp.lt.s32.totalorder %s243, 3
      %s247 = scalar_select %p246, %s243, 3
      %s248 = smul.addr %s245, 16
      %s249 = sadd.s32 %s247, %s248
      %s250 = smul.addr %s249, 8
      %s251 = scalar_lea.vmem %s0, %s250
      %s252 = smul.u32 4, %s20
      %s253 = smul.u32 4, %s20
      %p254 = scmp.lt.s32.totalorder %s19, 1
      %s255 = scalar_select %p254, %s19, 1
      %p256 = scmp.lt.s32.totalorder %s253, 3
      %s257 = scalar_select %p256, %s253, 3
      %s258 = smul.addr %s255, 16
      %s259 = sadd.s32 %s257, %s258
      %s260 = smul.addr %s259, 8
      %s261 = scalar_lea.vmem %s3, %s260
      %s262 = smul.u32 4, %s20
      %s263 = smul.u32 4, %s20
      %p264 = scmp.lt.s32.totalorder %s19, 1
      %s265 = scalar_select %p264, %s19, 1
      %p266 = scmp.lt.s32.totalorder %s263, 3
      %s267 = scalar_select %p266, %s263, 3
      %s268 = smul.addr %s265, 16
      %s269 = sadd.s32 %s267, %s268
      %s270 = smul.addr %s269, 8
      %s271 = scalar_lea.vmem %s4, %s270
      %s272 = smul.u32 4, %s20
      %v274 = vld [vmem:[%s1] sm:$0xf]
      %v275 = vld [vmem:[%s1 + $0x4] sm:$0xf]
      %v276 = vld [vmem:[%s1 + $0x8] sm:$0xf]
      %v277 = vld [vmem:[%s1 + $0xc] sm:$0xf]
      %v278 = vld [vmem:[%s251] sm:$0xff]
      %v279 = vld [vmem:[%s251 + $0x8] sm:$0xff]
      %v280 = vld [vmem:[%s251 + $0x10] sm:$0xff]
      %v281 = vld [vmem:[%s251 + $0x18] sm:$0xff]
      %v282 = vld [vmem:[%s251 + $0x20] sm:$0xff]
      %v283 = vld [vmem:[%s251 + $0x28] sm:$0xff]
      %v284 = vld [vmem:[%s251 + $0x30] sm:$0xff]
      %v285 = vld [vmem:[%s251 + $0x38] sm:$0xff]
      %v286 = vld [vmem:[%s251 + $0x40] sm:$0xff]
      %v287 = vld [vmem:[%s251 + $0x48] sm:$0xff]
      %v288 = vld [vmem:[%s251 + $0x50] sm:$0xff]
      %v289 = vld [vmem:[%s251 + $0x58] sm:$0xff]
      %v290 = vld [vmem:[%s251 + $0x60] sm:$0xff]
      %v291 = vld [vmem:[%s251 + $0x68] sm:$0xff]
      %v292 = vld [vmem:[%s251 + $0x70] sm:$0xff]
      %v293 = vld [vmem:[%s251 + $0x78] sm:$0xff]
      %v294 = vpack.c.bf16 %v282, %v278
      %v295 = vpack.c.bf16 %v283, %v279
      %v296 = vpack.c.bf16 %v284, %v280
      %v297 = vpack.c.bf16 %v285, %v281
      %v298 = vpack.c.bf16 %v290, %v286
      %v299 = vpack.c.bf16 %v291, %v287
      %v300 = vpack.c.bf16 %v292, %v288
      %v301 = vpack.c.bf16 %v293, %v289
      %v302 = vld [vmem:[%s2] sm:$0xff]
      %v303 = vld [vmem:[%s2 + $0x8] sm:$0xff]
      %v304 = vld [vmem:[%s2 + $0x10] sm:$0xff]
      %v305 = vld [vmem:[%s2 + $0x18] sm:$0xff]
      %307 = vset.pattern.permute.xlu0 0
      %308 = vperm.xlu0 %307, %v302
      %v309 = vpop.permute.xlu0 %308
      %312 = vset.pattern.permute.xlu0 0
      %313 = vperm.xlu0 %312, %v303
      %v314 = vpop.permute.xlu0 %313
      %317 = vset.pattern.permute.xlu0 0
      %318 = vperm.xlu0 %317, %v304
      %v319 = vpop.permute.xlu0 %318
      %322 = vset.pattern.permute.xlu0 0
      %323 = vperm.xlu0 %322, %v305
      %v324 = vpop.permute.xlu0 %323
      %v330 = vunpack.c.l.b16 %v274
      %v331 = vunpack.c.l.b16 %v275
      %v332 = vunpack.c.l.b16 %v276
      %v333 = vunpack.c.l.b16 %v277
      %v334 = vpack.c.b16 %v331, %v330
      %v335 = vpack.c.b16 %v333, %v332
      %vm336 = vcmask 261120
      %v338 = vsel %vm336, %v334, 0
      %v341 = vsel %vm336, %v335, 0
      %343 = vmatprep.subr.bf16.mxu0 0
      %344 = vmatpush1.bf16.msra.mxu0 0
      %345 = vmatprep.subr.bf16.mxu0 0
      %346 = vmatpush1.bf16.msra.mxu0 0
      %347 = vmatprep.subr.bf16.mxu0 0
      %348 = vmatpush1.bf16.msra.mxu0 0
      %349 = vmatprep.subr.bf16.mxu0 0
      %350 = vmatpush1.bf16.msra.mxu0 0
      %351 = vmatprep.subr.bf16.mxu0 0
      %352 = vmatpush1.bf16.msra.mxu0 0
      %353 = vmatprep.subr.bf16.mxu0 0
      %354 = vmatpush1.bf16.msra.mxu0 0
      %355 = vmatprep.subr.bf16.mxu0 %v299
      %356 = vmatpush1.bf16.msra.mxu0 %v298
      %357 = vmatprep.subr.bf16.mxu0 %v295
      %358 = vmatpush1.bf16.msra.mxu0 %v294
      %359 = vmatprep.subr.bf16.mxu0 0
      %360 = vmatpush2.bf16.msra.mxu0 0
      %361 = vmatprep.subr.bf16.mxu0 0
      %362 = vmatpush2.bf16.msra.mxu0 0
      %363 = vmatprep.subr.bf16.mxu0 0
      %364 = vmatpush2.bf16.msra.mxu0 0
      %365 = vmatprep.subr.bf16.mxu0 0
      %366 = vmatpush2.bf16.msra.mxu0 0
      %367 = vmatprep.subr.bf16.mxu0 0
      %368 = vmatpush2.bf16.msra.mxu0 0
      %369 = vmatprep.subr.bf16.mxu0 0
      %370 = vmatpush2.bf16.msra.mxu0 0
      %371 = vmatprep.subr.bf16.mxu0 0
      %372 = vmatpush2.bf16.msra.mxu0 0
      %373 = vmatprep.subr.bf16.mxu0 0
      %374 = vmatpush2.bf16.msra.mxu0 0
      %375 = vmatprep.mubr.bf16.mxu0 0
      %376 = vmatmul.mubr.bf16.gmra.mxu0 %v338
      %v377 = vpop.f32.mrf.mxu0
      %v378 = vadd.f32 %v309, %v377
      %v379 = vpop.f32.mrf.mxu0
      %v380 = vadd.f32 %v309, %v379
      %v381 = vpop.f32.mrf.mxu0
      %v382 = vadd.f32 %v314, %v381
      %v383 = vpop.f32.mrf.mxu0
      %v384 = vadd.f32 %v314, %v383
      %385 = vmatprep.mubr.bf16.mxu0 0
      %386 = vmatmul.mubr.bf16.gmra.mxu0 %v341
      %v387 = vpop.f32.mrf.mxu0
      %v388 = vadd.f32 %v319, %v387
      %v389 = vpop.f32.mrf.mxu0
      %v390 = vadd.f32 %v319, %v389
      %v391 = vpop.f32.mrf.mxu0
      %v392 = vadd.f32 %v324, %v391
      %v393 = vpop.f32.mrf.mxu0
      %v394 = vadd.f32 %v324, %v393
      %395 = vdwg.mxu0
      %396 = vmatprep.subr.bf16.mxu0 0
      %397 = vmatpush1.bf16.msra.mxu0 0
      %398 = vmatprep.subr.bf16.mxu0 0
      %399 = vmatpush1.bf16.msra.mxu0 0
      %400 = vmatprep.subr.bf16.mxu0 0
      %401 = vmatpush1.bf16.msra.mxu0 0
      %402 = vmatprep.subr.bf16.mxu0 0
      %403 = vmatpush1.bf16.msra.mxu0 0
      %404 = vmatprep.subr.bf16.mxu0 0
      %405 = vmatpush1.bf16.msra.mxu0 0
      %406 = vmatprep.subr.bf16.mxu0 0
      %407 = vmatpush1.bf16.msra.mxu0 0
      %408 = vmatprep.subr.bf16.mxu0 %v301
      %409 = vmatpush1.bf16.msra.mxu0 %v300
      %410 = vmatprep.subr.bf16.mxu0 %v297
      %411 = vmatpush1.bf16.msra.mxu0 %v296
      %412 = vmatprep.subr.bf16.mxu0 0
      %413 = vmatpush2.bf16.msra.mxu0 0
      %414 = vmatprep.subr.bf16.mxu0 0
      %415 = vmatpush2.bf16.msra.mxu0 0
      %416 = vmatprep.subr.bf16.mxu0 0
      %417 = vmatpush2.bf16.msra.mxu0 0
      %418 = vmatprep.subr.bf16.mxu0 0
      %419 = vmatpush2.bf16.msra.mxu0 0
      %420 = vmatprep.subr.bf16.mxu0 0
      %421 = vmatpush2.bf16.msra.mxu0 0
      %422 = vmatprep.subr.bf16.mxu0 0
      %423 = vmatpush2.bf16.msra.mxu0 0
      %424 = vmatprep.subr.bf16.mxu0 0
      %425 = vmatpush2.bf16.msra.mxu0 0
      %426 = vmatprep.subr.bf16.mxu0 0
      %427 = vmatpush2.bf16.msra.mxu0 0
      %428 = vmatprep.mubr.bf16.mxu0 0
      %429 = vmatmul.mubr.bf16.gmra.mxu0 %v338
      %v430 = vpop.f32.mrf.mxu0
      %v431 = vadd.f32 %v309, %v430
      %v432 = vpop.f32.mrf.mxu0
      %v433 = vadd.f32 %v309, %v432
      %v434 = vpop.f32.mrf.mxu0
      %v435 = vadd.f32 %v314, %v434
      %v436 = vpop.f32.mrf.mxu0
      %v437 = vadd.f32 %v314, %v436
      %438 = vmatprep.mubr.bf16.mxu0 0
      %439 = vmatmul.mubr.bf16.gmra.mxu0 %v341
      %v440 = vpop.f32.mrf.mxu0
      %v441 = vadd.f32 %v319, %v440
      %v442 = vpop.f32.mrf.mxu0
      %v443 = vadd.f32 %v319, %v442
      %v444 = vpop.f32.mrf.mxu0
      %v445 = vadd.f32 %v324, %v444
      %v446 = vpop.f32.mrf.mxu0
      %v447 = vadd.f32 %v324, %v446
      %448 = vdwg.mxu0
      %v449 = vld [vmem:[%s261] sm:$0xff]
      %v450 = vld [vmem:[%s261 + $0x8] sm:$0xff]
      %v451 = vld [vmem:[%s261 + $0x10] sm:$0xff]
      %v452 = vld [vmem:[%s261 + $0x18] sm:$0xff]
      %v453 = vld [vmem:[%s261 + $0x20] sm:$0xff]
      %v454 = vld [vmem:[%s261 + $0x28] sm:$0xff]
      %v455 = vld [vmem:[%s261 + $0x30] sm:$0xff]
      %v456 = vld [vmem:[%s261 + $0x38] sm:$0xff]
      %v457 = vld [vmem:[%s261 + $0x40] sm:$0xff]
      %v458 = vld [vmem:[%s261 + $0x48] sm:$0xff]
      %v459 = vld [vmem:[%s261 + $0x50] sm:$0xff]
      %v460 = vld [vmem:[%s261 + $0x58] sm:$0xff]
      %v461 = vld [vmem:[%s261 + $0x60] sm:$0xff]
      %v462 = vld [vmem:[%s261 + $0x68] sm:$0xff]
      %v463 = vld [vmem:[%s261 + $0x70] sm:$0xff]
      %v464 = vld [vmem:[%s261 + $0x78] sm:$0xff]
      %v465 = vadd.f32 %v378, %v449
      %v466 = vadd.f32 %v380, %v450
      %v467 = vadd.f32 %v431, %v451
      %v468 = vadd.f32 %v433, %v452
      %v469 = vadd.f32 %v382, %v453
      %v470 = vadd.f32 %v384, %v454
      %v471 = vadd.f32 %v435, %v455
      %v472 = vadd.f32 %v437, %v456
      %v473 = vadd.f32 %v388, %v457
      %v474 = vadd.f32 %v390, %v458
      %v475 = vadd.f32 %v441, %v459
      %v476 = vadd.f32 %v443, %v460
      %v477 = vadd.f32 %v392, %v461
      %v478 = vadd.f32 %v394, %v462
      %v479 = vadd.f32 %v445, %v463
      %v480 = vadd.f32 %v447, %v464
      %481 = vst [vmem:[%s271] sm:$0xff] %v465
      %482 = vst [vmem:[%s271 + $0x8] sm:$0xff] %v466
      %483 = vst [vmem:[%s271 + $0x10] sm:$0xff] %v467
      %vm484 = vcmask 130048
      %485 = vst.msk [vmem:[%s271 + $0x18] sm:$0xff] %vm484, %v468
      %486 = vst [vmem:[%s271 + $0x20] sm:$0xff] %v469
      %487 = vst [vmem:[%s271 + $0x28] sm:$0xff] %v470
      %488 = vst [vmem:[%s271 + $0x30] sm:$0xff] %v471
      %489 = vst.msk [vmem:[%s271 + $0x38] sm:$0xff] %vm484, %v472
      %490 = vst [vmem:[%s271 + $0x40] sm:$0xff] %v473
      %491 = vst [vmem:[%s271 + $0x48] sm:$0xff] %v474
      %492 = vst [vmem:[%s271 + $0x50] sm:$0xff] %v475
      %493 = vst.msk [vmem:[%s271 + $0x58] sm:$0xff] %vm484, %v476
      %494 = vst [vmem:[%s271 + $0x60] sm:$0xff] %v477
      %495 = vst [vmem:[%s271 + $0x68] sm:$0xff] %v478
      %496 = vst [vmem:[%s271 + $0x70] sm:$0xff] %v479
      %497 = vst.msk [vmem:[%s271 + $0x78] sm:$0xff] %vm484, %v480
      %s498 = smul.u32 4, %s20
      %p499 = scmp.lt.s32.totalorder %s19, 1
      %s500 = scalar_select %p499, %s19, 1
      %p501 = scmp.lt.s32.totalorder %s498, 3
      %s502 = scalar_select %p501, %s498, 3
      %s503 = smul.addr %s500, 16
      %s504 = sadd.s32 %s502, %s503
      %s505 = smul.addr %s504, 8
      %s506 = scalar_lea.vmem %s4, %s505
      // Predicated region
      $region37: #{fno_mu_std_forward.10} parent=35 // pred_check
        %p507 = pneg %p145
      $region38: #{fno_mu_std_forward.10} parent=35 // pred_check_branch
        %509 = sbr.rel (%p507) target = $region40
      $region39: #{fno_mu_std_forward.10} parent=35 // pred_region
        %s510 = smul.u32 4, %s20
      $region40: #{fno_mu_std_forward.10} parent=35 // pred_fallthru
        _
    $region36: #{fno_mu_std_forward.10} parent=5 // pred_fallthru
      _
    %p511 = scmp.le.s32.totalorder 2, %s10
    // Predicated region
    $region41: #{fno_mu_std_forward.10} parent=5 // pred_check
      %p512 = pneg %p511
    $region42: #{fno_mu_std_forward.10} parent=5 // pred_check_branch
      %514 = sbr.rel (%p512) target = $region44
    $region43: #{fno_mu_std_forward.10} parent=5 // pred_region
      %s515 = ssub.s32 %s10, 2
      // Predicated region
      $region45: #{fno_mu_std_forward.10} parent=43 // pred_check
        %p516 = pneg %p151
      $region46: #{fno_mu_std_forward.10} parent=43 // pred_check_branch
        %518 = sbr.rel (%p516) target = $region48
      $region47: #{fno_mu_std_forward.10} parent=43 // pred_region
        %s519 = smul.u32 4, %s22
        %p520 = scmp.lt.s32.totalorder %s21, 1
        %s521 = scalar_select %p520, %s21, 1
        %p522 = scmp.lt.s32.totalorder %s519, 3
        %s523 = scalar_select %p522, %s519, 3
        %s524 = smul.addr %s521, 16
        %s525 = sadd.s32 %s523, %s524
        %s526 = smul.addr %s525, 8
        %s527 = scalar_lea.vmem %s4, %s526
      $region48: #{fno_mu_std_forward.10} parent=43 // pred_fallthru
        _
    $region44: #{fno_mu_std_forward.10} parent=5 // pred_fallthru
      _
  $region6: #{fno_mu_std_forward.10} parent=0 // loop_footer
    %s14 = sadd.s32 1, %s10
  $region7: #{fno_mu_std_forward.10} parent=0 // loop_footer_branch
    %9 = sbr.rel target = $region3
  $region8: #{fno_mu_std_forward.10} parent=0 // loop_exit
    _

// kernel: fno_mu_std_forward.11
$region0: #{fno_mu_std_forward.11}
  #allocation0 [shape = 'u32[]', space=smem, size = 0x4, offset = 0x4, fixed_abs, tag = 'smem constant byte address 0x4 - core index']
  #allocation1 [shape = 'u32[144,128]{1,0:T(1,128)}', space=vmem, size = 0x12000, scoped, tag = 'internal scratch']
  %s0 = inlined_call_operand.vmem [shape: f32[2,32,256], index: 0, kind: input, shape index: {}]
  %s1 = inlined_call_operand.vmem [shape: bf16[32,32], index: 1, kind: input, shape index: {}]
  %s2 = inlined_call_operand.vmem [shape: f32[32,1], index: 2, kind: input, shape index: {}]
  %s3 = inlined_call_operand.vmem [shape: bf16[4,32], index: 3, kind: input, shape index: {}]
  %s4 = inlined_call_operand.vmem [shape: f32[4,1], index: 4, kind: input, shape index: {}]
  %s5 = inlined_call_operand.vmem [shape: f32[2,4,256], index: 5, kind: output, shape index: {}]
  %s6 = sld [smem:[#allocation0]]
  $region53: #{fno_mu_std_forward.11} parent=0
    _
  %s8 = ssub.s32 1, %s6
  %s9 = scalar_select 0, %s8, %s6
  loop: start=0, step=1, limit=4
  $region2: #{fno_mu_std_forward.11} parent=0 // loop_pre_header
    _
  $region3: #{fno_mu_std_forward.11} parent=0 // loop_header
    %s11 = sphi 0, %s15
    %p12 = scmp.ge.s32.totalorder %s11, 4
    %s18 = sphi 0, %s30
    %s19 = sphi 0, %s26
    %s20 = sphi 0, %s18
    %s21 = sphi 0, %s19
    %s22 = sphi 0, %s20
    %s23 = sphi 0, %s21
    %s35 = sphi 0, %s37
    %s38 = sphi 0, %s35
    %s39 = sphi 0, %s38
    %s55 = sphi 0, %s39
    %s59 = sphi 0, %s59
    %s61 = sphi 0, %s59
    %s62 = sphi 0, %s61
    %s76 = sphi 0, %s62
    %s80 = sphi 0, %s80
    %s82 = sphi 0, %s80
    %s83 = sphi 0, %s82
    %s97 = sphi 0, %s83
    %s101 = sphi 0, %s101
    %s103 = sphi 0, %s101
    %s104 = sphi 0, %s103
    %s118 = sphi 0, %s104
    %s122 = sphi 0, %s122
    %s124 = sphi 0, %s122
    %s125 = sphi 0, %s124
    %s139 = sphi 0, %s125
    %s147 = sphi 0, %s149
    %s150 = sphi 0, %s147
    %s151 = sphi 0, %s150
    %s167 = sphi 0, %s151
  $region4: #{fno_mu_std_forward.11} parent=0 // loop_header_branch
    %14 = sbr.rel (%p12) target = $region8
  $region5: #{fno_mu_std_forward.11} parent=0 // loop_body
    %s16 = ssub.s32 %s11, 1
    %s17 = ssub.s32 %s11, 2
    %s24 = sadd.s32 1, %s19
    %p25 = scmp.ge.s32.totalorder %s24, 1
    %s26 = scalar_select %p25, 0, %s24
    %s27 = sadd.s32 1, %s18
    %s28 = scalar_select %p25, %s27, %s18
    %p29 = scmp.ge.s32.totalorder %s28, 2
    %s30 = scalar_select %p29, 0, %s28
    %s31 = ssub.s32 %s18, %s30
    %s32 = ssub.s32 %s19, %s26
    %s33 = sor.u32 %s31, %s32
    %p34 = scmp.eq.s32.totalorder %s33, 0
    %s36 = sadd.s32 %s35, 1
    %s37 = scalar_select %p34, %s35, %s36
    %p40 = pneg %p34
    %p41 = scmp.eq.s32.totalorder %s11, 1
    %p42 = por %p40, %p41
    %p43 = scmp.ne.s32.totalorder %s35, %s38
    %p44 = scmp.eq.s32.totalorder %s11, 0
    %p45 = por %p43, %p44
    %p46 = scmp.ne.s32.totalorder %s35, %s38
    %p47 = scmp.eq.s32.totalorder %s16, 1
    %p48 = por %p46, %p47
    %p49 = scmp.ne.s32.totalorder %s38, %s39
    %p50 = scmp.eq.s32.totalorder %s16, 0
    %p51 = por %p49, %p50
    %p52 = scmp.ne.s32.totalorder %s38, %s39
    %p53 = scmp.eq.s32.totalorder %s17, 1
    %p54 = por %p52, %p53
    %p56 = scmp.ne.s32.totalorder %s39, %s55
    %p57 = scmp.eq.s32.totalorder %s17, 0
    %p58 = por %p56, %p57
    %s60 = sadd.s32 %s59, 1
    %p63 = scmp.eq.s32.totalorder %s11, 1
    %p64 = scmp.ne.s32.totalorder %s59, %s61
    %p65 = scmp.eq.s32.totalorder %s11, 0
    %p66 = por %p64, %p65
    %p67 = scmp.ne.s32.totalorder %s59, %s61
    %p68 = scmp.eq.s32.totalorder %s16, 1
    %p69 = por %p67, %p68
    %p70 = scmp.ne.s32.totalorder %s61, %s62
    %p71 = scmp.eq.s32.totalorder %s16, 0
    %p72 = por %p70, %p71
    %p73 = scmp.ne.s32.totalorder %s61, %s62
    %p74 = scmp.eq.s32.totalorder %s17, 1
    %p75 = por %p73, %p74
    %p77 = scmp.ne.s32.totalorder %s62, %s76
    %p78 = scmp.eq.s32.totalorder %s17, 0
    %p79 = por %p77, %p78
    %s81 = sadd.s32 %s80, 1
    %p84 = scmp.eq.s32.totalorder %s11, 1
    %p85 = scmp.ne.s32.totalorder %s80, %s82
    %p86 = scmp.eq.s32.totalorder %s11, 0
    %p87 = por %p85, %p86
    %p88 = scmp.ne.s32.totalorder %s80, %s82
    %p89 = scmp.eq.s32.totalorder %s16, 1
    %p90 = por %p88, %p89
    %p91 = scmp.ne.s32.totalorder %s82, %s83
    %p92 = scmp.eq.s32.totalorder %s16, 0
    %p93 = por %p91, %p92
    %p94 = scmp.ne.s32.totalorder %s82, %s83
    %p95 = scmp.eq.s32.totalorder %s17, 1
    %p96 = por %p94, %p95
    %p98 = scmp.ne.s32.totalorder %s83, %s97
    %p99 = scmp.eq.s32.totalorder %s17, 0
    %p100 = por %p98, %p99
    %s102 = sadd.s32 %s101, 1
    %p105 = scmp.eq.s32.totalorder %s11, 1
    %p106 = scmp.ne.s32.totalorder %s101, %s103
    %p107 = scmp.eq.s32.totalorder %s11, 0
    %p108 = por %p106, %p107
    %p109 = scmp.ne.s32.totalorder %s101, %s103
    %p110 = scmp.eq.s32.totalorder %s16, 1
    %p111 = por %p109, %p110
    %p112 = scmp.ne.s32.totalorder %s103, %s104
    %p113 = scmp.eq.s32.totalorder %s16, 0
    %p114 = por %p112, %p113
    %p115 = scmp.ne.s32.totalorder %s103, %s104
    %p116 = scmp.eq.s32.totalorder %s17, 1
    %p117 = por %p115, %p116
    %p119 = scmp.ne.s32.totalorder %s104, %s118
    %p120 = scmp.eq.s32.totalorder %s17, 0
    %p121 = por %p119, %p120
    %s123 = sadd.s32 %s122, 1
    %p126 = scmp.eq.s32.totalorder %s11, 1
    %p127 = scmp.ne.s32.totalorder %s122, %s124
    %p128 = scmp.eq.s32.totalorder %s11, 0
    %p129 = por %p127, %p128
    %p130 = scmp.ne.s32.totalorder %s122, %s124
    %p131 = scmp.eq.s32.totalorder %s16, 1
    %p132 = por %p130, %p131
    %p133 = scmp.ne.s32.totalorder %s124, %s125
    %p134 = scmp.eq.s32.totalorder %s16, 0
    %p135 = por %p133, %p134
    %p136 = scmp.ne.s32.totalorder %s124, %s125
    %p137 = scmp.eq.s32.totalorder %s17, 1
    %p138 = por %p136, %p137
    %p140 = scmp.ne.s32.totalorder %s125, %s139
    %p141 = scmp.eq.s32.totalorder %s17, 0
    %p142 = por %p140, %p141
    %s143 = ssub.s32 %s18, %s30
    %s144 = ssub.s32 %s19, %s26
    %s145 = sor.u32 %s143, %s144
    %p146 = scmp.eq.s32.totalorder %s145, 0
    %s148 = sadd.s32 %s147, 1
    %s149 = scalar_select %p146, %s147, %s148
    %p152 = pneg %p146
    %p153 = scmp.eq.s32.totalorder %s11, 1
    %p154 = por %p152, %p153
    %p155 = scmp.ne.s32.totalorder %s147, %s150
    %p156 = scmp.eq.s32.totalorder %s11, 0
    %p157 = por %p155, %p156
    %p158 = scmp.ne.s32.totalorder %s147, %s150
    %p159 = scmp.eq.s32.totalorder %s16, 1
    %p160 = por %p158, %p159
    %p161 = scmp.ne.s32.totalorder %s150, %s151
    %p162 = scmp.eq.s32.totalorder %s16, 0
    %p163 = por %p161, %p162
    %p164 = scmp.ne.s32.totalorder %s150, %s151
    %p165 = scmp.eq.s32.totalorder %s17, 1
    %p166 = por %p164, %p165
    %p168 = scmp.ne.s32.totalorder %s151, %s167
    %p169 = scmp.eq.s32.totalorder %s17, 0
    %p170 = por %p168, %p169
    %p171 = scmp.le.s32.totalorder 1, %s11
    %p172 = scmp.lt.s32.totalorder %s11, 3
    %p173 = pnand %p171, %p172
    %p174 = pneg %p173
    // Predicated region
    $region9: #{fno_mu_std_forward.11} parent=5 // pred_check
      _
    $region10: #{fno_mu_std_forward.11} parent=5 // pred_check_branch
      %176 = sbr.rel (%p173) target = $region12
    $region11: #{fno_mu_std_forward.11} parent=5 // pred_region
      %s177 = ssub.s32 %s11, 1
      // Predicated region
      $region13: #{fno_mu_std_forward.11} parent=11 // pred_check
        %p178 = pneg %p72
      $region14: #{fno_mu_std_forward.11} parent=11 // pred_check_branch
        %180 = sbr.rel (%p178) target = $region16
      $region15: #{fno_mu_std_forward.11} parent=11 // pred_region
        _
      $region16: #{fno_mu_std_forward.11} parent=11 // pred_fallthru
        _
      // Predicated region
      $region17: #{fno_mu_std_forward.11} parent=11 // pred_check
        %p181 = pneg %p93
      $region18: #{fno_mu_std_forward.11} parent=11 // pred_check_branch
        %183 = sbr.rel (%p181) target = $region20
      $region19: #{fno_mu_std_forward.11} parent=11 // pred_region
        _
      $region20: #{fno_mu_std_forward.11} parent=11 // pred_fallthru
        _
      // Predicated region
      $region21: #{fno_mu_std_forward.11} parent=11 // pred_check
        %p184 = pneg %p114
      $region22: #{fno_mu_std_forward.11} parent=11 // pred_check_branch
        %186 = sbr.rel (%p184) target = $region24
      $region23: #{fno_mu_std_forward.11} parent=11 // pred_region
        _
      $region24: #{fno_mu_std_forward.11} parent=11 // pred_fallthru
        _
      // Predicated region
      $region25: #{fno_mu_std_forward.11} parent=11 // pred_check
        %p187 = pneg %p135
      $region26: #{fno_mu_std_forward.11} parent=11 // pred_check_branch
        %189 = sbr.rel (%p187) target = $region28
      $region27: #{fno_mu_std_forward.11} parent=11 // pred_region
        _
      $region28: #{fno_mu_std_forward.11} parent=11 // pred_fallthru
        _
    $region12: #{fno_mu_std_forward.11} parent=5 // pred_fallthru
      _
    %p190 = scmp.lt.s32.totalorder %s11, 2
    // Predicated region
    $region29: #{fno_mu_std_forward.11} parent=5 // pred_check
      %p191 = pneg %p190
    $region30: #{fno_mu_std_forward.11} parent=5 // pred_check_branch
      %193 = sbr.rel (%p191) target = $region32
    $region31: #{fno_mu_std_forward.11} parent=5 // pred_region
      // Predicated region
      $region33: #{fno_mu_std_forward.11} parent=31 // pred_check
        %p194 = pneg %p45
      $region34: #{fno_mu_std_forward.11} parent=31 // pred_check_branch
        %196 = sbr.rel (%p194) target = $region36
      $region35: #{fno_mu_std_forward.11} parent=31 // pred_region
        %s197 = smul.u32 2, %s19
        %p198 = scmp.lt.s32.totalorder %s18, 1
        %s199 = scalar_select %p198, %s18, 1
        %p200 = scmp.lt.s32.totalorder %s197, 1
        %s201 = scalar_select %p200, %s197, 1
        %s202 = smul.addr %s199, 8
        %s203 = sadd.s32 %s201, %s202
        %s204 = smul.addr %s203, 8
        %s205 = scalar_lea.vmem %s0, %s204
        %s206 = smul.u32 2, %s19
      $region36: #{fno_mu_std_forward.11} parent=31 // pred_fallthru
        _
    $region32: #{fno_mu_std_forward.11} parent=5 // pred_fallthru
      _
    %p207 = scmp.le.s32.totalorder 1, %s11
    %p208 = scmp.lt.s32.totalorder %s11, 3
    %p209 = pnand %p207, %p208
    %p210 = pneg %p209
    // Predicated region
    $region37: #{fno_mu_std_forward.11} parent=5 // pred_check
      _
    $region38: #{fno_mu_std_forward.11} parent=5 // pred_check_branch
      %212 = sbr.rel (%p209) target = $region40
    $region39: #{fno_mu_std_forward.11} parent=5 // pred_region
      %s213 = ssub.s32 %s11, 1
      %s214 = smul.u32 2, %s21
      %p215 = scmp.lt.s32.totalorder %s20, 1
      %s216 = scalar_select %p215, %s20, 1
      %p217 = scmp.lt.s32.totalorder %s214, 1
      %s218 = scalar_select %p217, %s214, 1
      %s219 = smul.addr %s216, 8
      %s220 = sadd.s32 %s218, %s219
      %s221 = smul.addr %s220, 8
      %s222 = scalar_lea.vmem %s0, %s221
      %p223 = pneg %p51
      %p224 = pneg %p48
      %p225 = pneg %p72
      %p226 = pneg %p69
      %p227 = pneg %p93
      %p228 = pneg %p90
      %p229 = pneg %p114
      %p230 = pneg %p111
      %p231 = pneg %p135
      %p232 = pneg %p132
      %p233 = pneg %p163
      %p234 = pneg %p160
      %s235 = smul.u32 2, %s21
      %p236 = scmp.lt.s32.totalorder %s20, 1
      %s237 = scalar_select %p236, %s20, 1
      %p238 = scmp.lt.s32.totalorder %s235, 1
      %s239 = scalar_select %p238, %s235, 1
      %s240 = smul.addr %s237, 2
      %s241 = sadd.s32 %s239, %s240
      %s242 = smul.addr %s241, 4
      %s243 = scalar_lea.vmem %s5, %s242
      %s244 = smul.u32 2, %s21
      %p245 = scmp.lt.s32.totalorder %s20, 1
      %s246 = scalar_select %p245, %s20, 1
      %p247 = scmp.lt.s32.totalorder %s244, 1
      %s248 = scalar_select %p247, %s244, 1
      %s249 = smul.addr %s246, 8
      %s250 = sadd.s32 %s248, %s249
      %s251 = smul.addr %s250, 8
      %s252 = scalar_lea.vmem %s0, %s251
      %s253 = smul.u32 2, %s21
      %s254 = smul.u32 2, %s21
      %p255 = scmp.lt.s32.totalorder %s20, 1
      %s256 = scalar_select %p255, %s20, 1
      %p257 = scmp.lt.s32.totalorder %s254, 1
      %s258 = scalar_select %p257, %s254, 1
      %s259 = smul.addr %s256, 2
      %s260 = sadd.s32 %s258, %s259
      %s261 = smul.addr %s260, 4
      %s262 = scalar_lea.vmem %s5, %s261
      %s263 = smul.u32 2, %s21
      %v265 = vld [vmem:[%s252] sm:$0xff]
      %v266 = vld [vmem:[%s252 + $0x8] sm:$0xff]
      %v267 = vld [vmem:[%s252 + $0x10] sm:$0xff]
      %v268 = vld [vmem:[%s252 + $0x18] sm:$0xff]
      %v269 = vld [vmem:[%s252 + $0x20] sm:$0xff]
      %v270 = vld [vmem:[%s252 + $0x28] sm:$0xff]
      %v271 = vld [vmem:[%s252 + $0x30] sm:$0xff]
      %v272 = vld [vmem:[%s252 + $0x38] sm:$0xff]
      %v273 = vpack.c.bf16 %v267, %v265
      %v274 = vpack.c.bf16 %v268, %v266
      %v275 = vpack.c.bf16 %v271, %v269
      %v276 = vpack.c.bf16 %v272, %v270
      %v277 = vld [vmem:[%s1] sm:$0xf]
      %v278 = vld [vmem:[%s1 + $0x4] sm:$0xf]
      %v279 = vld [vmem:[%s1 + $0x8] sm:$0xf]
      %v280 = vld [vmem:[%s1 + $0xc] sm:$0xf]
      %v281 = vld [vmem:[%s2] sm:$0xff]
      %v282 = vld [vmem:[%s2 + $0x8] sm:$0xff]
      %v283 = vld [vmem:[%s2 + $0x10] sm:$0xff]
      %v284 = vld [vmem:[%s2 + $0x18] sm:$0xff]
      %286 = vset.pattern.permute.xlu0 0
      %287 = vperm.xlu0 %286, %v281
      %v288 = vpop.permute.xlu0 %287
      %291 = vset.pattern.permute.xlu0 0
      %292 = vperm.xlu0 %291, %v282
      %v293 = vpop.permute.xlu0 %292
      %296 = vset.pattern.permute.xlu0 0
      %297 = vperm.xlu0 %296, %v283
      %v298 = vpop.permute.xlu0 %297
      %301 = vset.pattern.permute.xlu0 0
      %302 = vperm.xlu0 %301, %v284
      %v303 = vpop.permute.xlu0 %302
      %v309 = vunpack.c.l.b16 %v277
      %v310 = vunpack.c.l.b16 %v278
      %v311 = vunpack.c.l.b16 %v279
      %v312 = vunpack.c.l.b16 %v280
      %v313 = vpack.c.b16 %v310, %v309
      %v314 = vpack.c.b16 %v312, %v311
      %vm315 = vcmask 261120
      %v317 = vsel %vm315, %v313, 0
      %v320 = vsel %vm315, %v314, 0
      %322 = vmatprep.subr.bf16.mxu0 0
      %323 = vmatpush1.bf16.msra.mxu0 0
      %324 = vmatprep.subr.bf16.mxu0 0
      %325 = vmatpush1.bf16.msra.mxu0 0
      %326 = vmatprep.subr.bf16.mxu0 0
      %327 = vmatpush1.bf16.msra.mxu0 0
      %328 = vmatprep.subr.bf16.mxu0 0
      %329 = vmatpush1.bf16.msra.mxu0 0
      %330 = vmatprep.subr.bf16.mxu0 0
      %331 = vmatpush1.bf16.msra.mxu0 0
      %332 = vmatprep.subr.bf16.mxu0 0
      %333 = vmatpush1.bf16.msra.mxu0 0
      %334 = vmatprep.subr.bf16.mxu0 %v276
      %335 = vmatpush1.bf16.msra.mxu0 %v275
      %336 = vmatprep.subr.bf16.mxu0 %v274
      %337 = vmatpush1.bf16.msra.mxu0 %v273
      %338 = vmatprep.subr.bf16.mxu0 0
      %339 = vmatpush2.bf16.msra.mxu0 0
      %340 = vmatprep.subr.bf16.mxu0 0
      %341 = vmatpush2.bf16.msra.mxu0 0
      %342 = vmatprep.subr.bf16.mxu0 0
      %343 = vmatpush2.bf16.msra.mxu0 0
      %344 = vmatprep.subr.bf16.mxu0 0
      %345 = vmatpush2.bf16.msra.mxu0 0
      %346 = vmatprep.subr.bf16.mxu0 0
      %347 = vmatpush2.bf16.msra.mxu0 0
      %348 = vmatprep.subr.bf16.mxu0 0
      %349 = vmatpush2.bf16.msra.mxu0 0
      %350 = vmatprep.subr.bf16.mxu0 0
      %351 = vmatpush2.bf16.msra.mxu0 0
      %352 = vmatprep.subr.bf16.mxu0 0
      %353 = vmatpush2.bf16.msra.mxu0 0
      %354 = vmatprep.mubr.bf16.mxu0 0
      %355 = vmatmul.mubr.bf16.gmra.mxu0 %v317
      %v356 = vpop.f32.mrf.mxu0
      %v357 = vadd.f32 %v288, %v356
      %v358 = vpop.f32.mrf.mxu0
      %v359 = vadd.f32 %v288, %v358
      %v360 = vpop.f32.mrf.mxu0
      %v361 = vadd.f32 %v293, %v360
      %v362 = vpop.f32.mrf.mxu0
      %v363 = vadd.f32 %v293, %v362
      %364 = vmatprep.mubr.bf16.mxu0 0
      %365 = vmatmul.mubr.bf16.gmra.mxu0 %v320
      %v366 = vpop.f32.mrf.mxu0
      %v367 = vadd.f32 %v298, %v366
      %v368 = vpop.f32.mrf.mxu0
      %v369 = vadd.f32 %v298, %v368
      %v370 = vpop.f32.mrf.mxu0
      %v371 = vadd.f32 %v303, %v370
      %v372 = vpop.f32.mrf.mxu0
      %v373 = vadd.f32 %v303, %v372
      %374 = vdwg.mxu0
      %v375 = vxor.u32 %v357, 2147483648
      %v376 = vxor.u32 %v359, 2147483648
      %v377 = vxor.u32 %v361, 2147483648
      %v378 = vxor.u32 %v363, 2147483648
      %v379 = vxor.u32 %v367, 2147483648
      %v380 = vxor.u32 %v369, 2147483648
      %v381 = vxor.u32 %v371, 2147483648
      %v382 = vxor.u32 %v373, 2147483648
      %v383 = vmul.f32 %v375, 1.442695
      %v384 = vpow.pop %v383
      %v385 = vmul.f32 %v376, 1.442695
      %v386 = vpow.pop %v385
      %v387 = vmul.f32 %v377, 1.442695
      %v388 = vpow.pop %v387
      %v389 = vmul.f32 %v378, 1.442695
      %v390 = vpow.pop %v389
      %v391 = vmul.f32 %v379, 1.442695
      %v392 = vpow.pop %v391
      %v393 = vmul.f32 %v380, 1.442695
      %v394 = vpow.pop %v393
      %v395 = vmul.f32 %v381, 1.442695
      %v396 = vpow.pop %v395
      %v397 = vmul.f32 %v382, 1.442695
      %v398 = vpow.pop %v397
      %v399 = vadd.f32 %v384, 1.0
      %v400 = vadd.f32 %v386, 1.0
      %v401 = vadd.f32 %v388, 1.0
      %v402 = vadd.f32 %v390, 1.0
      %v403 = vadd.f32 %v392, 1.0
      %v404 = vadd.f32 %v394, 1.0
      %v405 = vadd.f32 %v396, 1.0
      %v406 = vadd.f32 %v398, 1.0
      %v407 = vrcp.pop %v399
      %v408 = vmul.f32 1.0, %v407
      %v409 = vrcp.pop %v400
      %v410 = vmul.f32 1.0, %v409
      %v411 = vrcp.pop %v401
      %v412 = vmul.f32 1.0, %v411
      %v413 = vrcp.pop %v402
      %v414 = vmul.f32 1.0, %v413
      %v415 = vrcp.pop %v403
      %v416 = vmul.f32 1.0, %v415
      %v417 = vrcp.pop %v404
      %v418 = vmul.f32 1.0, %v417
      %v419 = vrcp.pop %v405
      %v420 = vmul.f32 1.0, %v419
      %v421 = vrcp.pop %v406
      %v422 = vmul.f32 1.0, %v421
      %v423 = vmul.f32 %v357, %v408
      %v424 = vmul.f32 %v359, %v410
      %v425 = vmul.f32 %v361, %v412
      %v426 = vmul.f32 %v363, %v414
      %v427 = vmul.f32 %v367, %v416
      %v428 = vmul.f32 %v369, %v418
      %v429 = vmul.f32 %v371, %v420
      %v430 = vmul.f32 %v373, %v422
      %v431 = vpack.c.bf16 %v425, %v423
      %v432 = vpack.c.bf16 %v426, %v424
      %v433 = vpack.c.bf16 %v429, %v427
      %v434 = vpack.c.bf16 %v430, %v428
      %v435 = vld [vmem:[%s3] sm:$0x3]
      %v436 = vld [vmem:[%s4] sm:$0xf]
      %438 = vset.pattern.permute.xlu0 0
      %439 = vperm.xlu0 %438, %v436
      %v440 = vpop.permute.xlu0 %439
      %v443 = vsel %vm315, %v435, 0
      %445 = vmatprep.subr.bf16.mxu0 0
      %446 = vmatpush1.bf16.msra.mxu0 0
      %447 = vmatprep.subr.bf16.mxu0 0
      %448 = vmatpush1.bf16.msra.mxu0 0
      %449 = vmatprep.subr.bf16.mxu0 0
      %450 = vmatpush1.bf16.msra.mxu0 0
      %451 = vmatprep.subr.bf16.mxu0 0
      %452 = vmatpush1.bf16.msra.mxu0 0
      %453 = vmatprep.subr.bf16.mxu0 0
      %454 = vmatpush1.bf16.msra.mxu0 0
      %455 = vmatprep.subr.bf16.mxu0 0
      %456 = vmatpush1.bf16.msra.mxu0 0
      %457 = vmatprep.subr.bf16.mxu0 %v434
      %458 = vmatpush1.bf16.msra.mxu0 %v433
      %459 = vmatprep.subr.bf16.mxu0 %v432
      %460 = vmatpush1.bf16.msra.mxu0 %v431
      %461 = vmatprep.subr.bf16.mxu0 0
      %462 = vmatpush2.bf16.msra.mxu0 0
      %463 = vmatprep.subr.bf16.mxu0 0
      %464 = vmatpush2.bf16.msra.mxu0 0
      %465 = vmatprep.subr.bf16.mxu0 0
      %466 = vmatpush2.bf16.msra.mxu0 0
      %467 = vmatprep.subr.bf16.mxu0 0
      %468 = vmatpush2.bf16.msra.mxu0 0
      %469 = vmatprep.subr.bf16.mxu0 0
      %470 = vmatpush2.bf16.msra.mxu0 0
      %471 = vmatprep.subr.bf16.mxu0 0
      %472 = vmatpush2.bf16.msra.mxu0 0
      %473 = vmatprep.subr.bf16.mxu0 0
      %474 = vmatpush2.bf16.msra.mxu0 0
      %475 = vmatprep.subr.bf16.mxu0 0
      %476 = vmatpush2.bf16.msra.mxu0 0
      %477 = vmatprep.mubr.bf16.mxu0 0
      %478 = vmatmul.mubr.bf16.gmra.mxu0 %v443
      %v479 = vpop.f32.mrf.mxu0
      %v480 = vadd.f32 %v440, %v479
      %v481 = vpop.f32.mrf.mxu0
      %v482 = vadd.f32 %v440, %v481
      %v483 = vpop.f32.mrf.mxu0
      %v484 = vpop.f32.mrf.mxu0
      %485 = vdwg.mxu0
      %v486 = vlaneseq
      %v487 = vshrl.u32 %v486, 7
      %v488 = vmul.f32 %v480, 5.0
      %v489 = vmul.f32 %v482, 5.0
      %v490 = vmin.f32 %v488, 20.0
      %v491 = vmin.f32 %v489, 20.0
      %v492 = vmul.f32 %v490, 1.442695
      %v493 = vpow.pop %v492
      %v494 = vmul.f32 %v491, 1.442695
      %v495 = vpow.pop %v494
      %v496 = vadd.f32 %v493, 1.0
      %v497 = vlog2.pop %v496
      %v498 = vmul.f32 %v497, 0.6931472
      %v499 = vmul.f32 -0.5, %v493
      %v500 = vadd.f32 %v499, 1.0
      %v501 = vmul.f32 %v500, %v493
      %v502 = vand.u32 2147483647, %v493
      %vm503 = vcmp.lt.f32.partialorder %v502, 0.0004427343
      %v504 = vsel %vm503, %v501, %v498
      %v505 = vadd.f32 %v495, 1.0
      %v506 = vlog2.pop %v505
      %v507 = vmul.f32 %v506, 0.6931472
      %v508 = vmul.f32 -0.5, %v495
      %v509 = vadd.f32 %v508, 1.0
      %v510 = vmul.f32 %v509, %v495
      %v511 = vand.u32 2147483647, %v495
      %vm512 = vcmp.lt.f32.partialorder %v511, 0.0004427343
      %v513 = vsel %vm512, %v510, %v507
      %v514 = vmul.f32 %v504, 0.2
      %v515 = vmul.f32 %v513, 0.2
      %vm516 = vcmp.gt.f32.partialorder %v488, 20.0
      %vm517 = vcmp.gt.f32.partialorder %v489, 20.0
      %v518 = vsel %vm516, %v480, %v514
      %v519 = vsel %vm517, %v482, %v515
      %vm520 = vcmp.ge.s32.totalorder %v487, 2
      %v521 = vsel %vm520, %v518, %v480
      %v522 = vsel %vm520, %v519, %v482
      %v525 = vcombine.low %v521, %v522
      %527 = vst [vmem:[%s262] sm:$0xff] %v525
      %s528 = smul.u32 2, %s21
      %p529 = scmp.lt.s32.totalorder %s20, 1
      %s530 = scalar_select %p529, %s20, 1
      %p531 = scmp.lt.s32.totalorder %s528, 1
      %s532 = scalar_select %p531, %s528, 1
      %s533 = smul.addr %s530, 2
      %s534 = sadd.s32 %s532, %s533
      %s535 = smul.addr %s534, 4
      %s536 = scalar_lea.vmem %s5, %s535
      // Predicated region
      $region41: #{fno_mu_std_forward.11} parent=39 // pred_check
        %p537 = pneg %p160
      $region42: #{fno_mu_std_forward.11} parent=39 // pred_check_branch
        %539 = sbr.rel (%p537) target = $region44
      $region43: #{fno_mu_std_forward.11} parent=39 // pred_region
        %s540 = smul.u32 2, %s21
      $region44: #{fno_mu_std_forward.11} parent=39 // pred_fallthru
        _
    $region40: #{fno_mu_std_forward.11} parent=5 // pred_fallthru
      _
    %p541 = scmp.le.s32.totalorder 2, %s11
    // Predicated region
    $region45: #{fno_mu_std_forward.11} parent=5 // pred_check
      %p542 = pneg %p541
    $region46: #{fno_mu_std_forward.11} parent=5 // pred_check_branch
      %544 = sbr.rel (%p542) target = $region48
    $region47: #{fno_mu_std_forward.11} parent=5 // pred_region
      %s545 = ssub.s32 %s11, 2
      // Predicated region
      $region49: #{fno_mu_std_forward.11} parent=47 // pred_check
        %p546 = pneg %p166
      $region50: #{fno_mu_std_forward.11} parent=47 // pred_check_branch
        %548 = sbr.rel (%p546) target = $region52
      $region51: #{fno_mu_std_forward.11} parent=47 // pred_region
        %s549 = smul.u32 2, %s23
        %p550 = scmp.lt.s32.totalorder %s22, 1
        %s551 = scalar_select %p550, %s22, 1
        %p552 = scmp.lt.s32.totalorder %s549, 1
        %s553 = scalar_select %p552, %s549, 1
        %s554 = smul.addr %s551, 2
        %s555 = sadd.s32 %s553, %s554
        %s556 = smul.addr %s555, 4
        %s557 = scalar_lea.vmem %s5, %s556
      $region52: #{fno_mu_std_forward.11} parent=47 // pred_fallthru
        _
    $region48: #{fno_mu_std_forward.11} parent=5 // pred_fallthru
      _
  $region6: #{fno_mu_std_forward.11} parent=0 // loop_footer
    %s15 = sadd.s32 1, %s11
  $region7: #{fno_mu_std_forward.11} parent=0 // loop_footer_branch
    %10 = sbr.rel target = $region3
  $region8: #{fno_mu_std_forward.11} parent=0 // loop_exit
    _

</llo_original>
